<compile_context>
chip_gen: v6e
topology: v6e:2x2x1
jax: 0.10.0
libtpu: 0.0.40
codegen_flags: <defaults>
</compile_context>

<pallas_src>
import functools
import math

import jax
import jax.numpy as jnp
from jax import lax
from jax.experimental import pallas as pl
from jax.experimental.pallas import tpu as pltpu


def _conv2d_same_kernel(x_ref, w_ref, b_ref, o_ref, xp_ref, st_ref, *,
                        block_b, h, w, kh, kw, pad_t, pad_l, wp, lout):
    """Processes `block_b` images per grid step.

    x_ref : (block_b, Cin, H, W)   f32   raw input (padding is done in VMEM)
    w_ref : (Cout, Cin*KH*KW)      bf16  per-tap weights stacked along K (tap-major)
    b_ref : (Cout, 1)              f32   conv bias
    o_ref : (block_b, Cout, H, W)  f32   output, already cropped, already NCHW
    xp_ref: (Cin, Lin)             bf16  scratch: flat padded plane (+ lane slack)
    st_ref: (Cin*KH*KW, Lout)      bf16  scratch: stacked shifted slices (fused-K operand)
    """
    cin = x_ref.shape[1]

    # Zero the padded plane.  The pad / slack lanes are never written below, so they stay
    # zero for every image this core processes.  (Unconditional, not program_id==0 gated:
    # with dimension_semantics=("parallel",) each TensorCore must init its own scratch.)
    xp_ref[...] = jnp.zeros_like(xp_ref)

    for b in range(block_b):
        # ---- in-kernel 'SAME' padding: copy the H image rows into the padded plane ----
        # (also the f32 -> bf16 operand cast, so no extra HBM cast pass is needed)
        for r in range(h):
            dst = (r + pad_t) * wp + pad_l
            xp_ref[:, dst:dst + w] = x_ref[b, :, r, :].astype(xp_ref.dtype)

        # ---- stack the KH*KW flat-shifted slices -> one (Cin*KH*KW, Lout) operand ----
        # For stride 1, tap (ih, iw) is a constant lane shift ih*Wp + iw of the flat padded
        # plane; the "wrap" columns (ow >= Wo) are garbage and are cropped at store time.
        for ih in range(kh):
            for iw in range(kw):
                t = ih * kw + iw
                s = ih * wp + iw
                st_ref[t * cin:(t + 1) * cin, :] = xp_ref[:, s:s + lout]

        # ---- single fused matmul (K = Cin*KH*KW) on the MXU, f32 accumulation + bias ----
        acc = jnp.dot(w_ref[...], st_ref[...],
                      preferred_element_type=jnp.float32) + b_ref[...]

        # ---- crop the wrap columns while storing: output leaves the kernel in NCHW ----
        for r in range(h):
            o_ref[b, :, r, :] = acc[:, r * wp:r * wp + w].astype(o_ref.dtype)


def _pick_block_b(n, per_image_bytes, budget_bytes):
    """Largest divisor of n whose double-buffered blocks fit the VMEM budget, while keeping
    the grid length >= 2 (so both v7x TensorCores get work when n >= 2)."""
    best = 1
    for bb in range(1, n + 1):
        if n % bb != 0:
            continue
        if 2 * bb * per_image_bytes > budget_bytes:   # x2: input+output double-buffering
            continue
        if n >= 2 and n // bb < 2:
            continue
        best = bb
    return best


def conv2d_same(x_nchw, weight, bias):
    """Forward of the splearn Conv2d module with default padding='SAME', stride=1,
    dilation=1, groups=1, bias=True.  x_nchw: (N, Cin, H, W); weight: (Cout, Cin, KH, KW);
    bias: (Cout,).  Returns (N, Cout, H, W) float32."""
    n, cin, h, w = x_nchw.shape
    cout, cin_w, kh, kw = weight.shape
    assert cin_w == cin, "groups != 1 not supported"

    # TF-'SAME' padding for stride=1, dilation=1: total pad = k - 1, low side gets pad // 2
    # (matches the module's get_same_padding / F.pad split).
    pad_h, pad_w = kh - 1, kw - 1
    pad_t, pad_l = pad_h // 2, pad_w // 2
    hp, wp = h + pad_h, w + pad_w
    lout = h * wp                      # flat output length per image (incl. wrap columns)
    lin = hp * wp + (kw - 1)           # flat padded plane + slack so every tap slice fits

    k_tot = cin * kh * kw
    # weight (Cout, Cin, KH, KW) -> (Cout, KH*KW*Cin): K ordered tap-major / channel-minor,
    # matching the stacked operand built in the kernel.  bf16 MXU operands, f32 accumulate.
    w2 = jnp.transpose(weight, (0, 2, 3, 1)).reshape(cout, k_tot).astype(jnp.bfloat16)
    b2 = bias.astype(jnp.float32).reshape(cout, 1)

    per_image = cin * h * w * x_nchw.dtype.itemsize + cout * h * w * 4
    block_b = _pick_block_b(n, per_image, budget_bytes=8 * 1024 * 1024)
    grid = (n // block_b,)

    kernel = functools.partial(_conv2d_same_kernel, block_b=block_b, h=h, w=w,
                               kh=kh, kw=kw, pad_t=pad_t, pad_l=pad_l, wp=wp, lout=lout)

    bytes_accessed = (x_nchw.size * x_nchw.dtype.itemsize   # raw input, read once
                      + w2.size * 2 + b2.size * 4           # weights + bias
                      + n * cout * h * w * 4)               # output, written once

    return pl.pallas_call(
        kernel,
        out_shape=jax.ShapeDtypeStruct((n, cout, h, w), jnp.float32),
        grid=grid,
        in_specs=[
            pl.BlockSpec((block_b, cin, h, w), lambda i: (i, 0, 0, 0)),   # raw images
            pl.BlockSpec((cout, k_tot), lambda i: (0, 0)),                # weights resident
            pl.BlockSpec((cout, 1), lambda i: (0, 0)),                    # bias resident
        ],
        out_specs=pl.BlockSpec((block_b, cout, h, w), lambda i: (i, 0, 0, 0)),
        scratch_shapes=[
            pltpu.VMEM((cin, lin), jnp.bfloat16),      # padded plane (flat, + slack)
            pltpu.VMEM((k_tot, lout), jnp.bfloat16),   # fused-K stacked operand
        ],
        compiler_params=pltpu.CompilerParams(
            dimension_semantics=("parallel",),         # batch blocks independent (v7x 2 TCs)
            vmem_limit_bytes=32 * 1024 * 1024,         # explicit; safe on v5e/v6e/v7x
        ),
        cost_estimate=pl.CostEstimate(
            flops=2 * n * cout * cin * kh * kw * h * w,
            bytes_accessed=bytes_accessed,
            transcendentals=0,
        ),
    )(x_nchw, w2, b2)


def _reference(x, weight, bias):
    """Pure-JAX reference matching PyTorch Conv2d with TF-'SAME' padding, stride 1."""
    kh, kw = weight.shape[2], weight.shape[3]
    pad_h, pad_w = kh - 1, kw - 1
    y = lax.conv_general_dilated(
        x.astype(jnp.float32), weight.astype(jnp.float32),
        window_strides=(1, 1),
        padding=((pad_h // 2, pad_h - pad_h // 2), (pad_w // 2, pad_w - pad_w // 2)),
        dimension_numbers=("NCHW", "OIHW", "NCHW"),
        preferred_element_type=jnp.float32)
    return y + bias.reshape(1, -1, 1, 1).astype(jnp.float32)


if __name__ == "__main__":
    # Module config (synthetic, deterministic): Conv2d(4, 8, kernel_size=3, padding='SAME')
    in_channels, out_channels, kernel_size = 4, 8, (3, 3)
    n, h, w = 2, 16, 16

    key = jax.random.PRNGKey(0)
    kx, kw_, kb = jax.random.split(key, 3)

    x = jax.random.normal(kx, (n, in_channels, h, w), dtype=jnp.float32)

    # Deterministic PyTorch-style uniform init for conv weight/bias.
    fan_in = in_channels * kernel_size[0] * kernel_size[1]
    bound = 1.0 / math.sqrt(float(fan_in))
    weight = jax.random.uniform(kw_, (out_channels, in_channels, *kernel_size),
                                dtype=jnp.float32, minval=-bound, maxval=bound)
    bias = jax.random.uniform(kb, (out_channels,), dtype=jnp.float32,
                              minval=-bound, maxval=bound)

    fwd = jax.jit(conv2d_same)
    out = jax.block_until_ready(fwd(x, weight, bias))

    # Reference with matched operand precision (bf16-rounded operands, f32 accumulation),
    # i.e. exactly the math the MXU performs; only summation order differs.
    bf16_round = lambda a: a.astype(jnp.bfloat16).astype(jnp.float32)
    ref = _reference(bf16_round(x), bf16_round(weight), bias)

    assert out.shape == (n, out_channels, h, w), out.shape
    assert jnp.allclose(out, ref, rtol=5e-3, atol=5e-3), "mismatch vs JAX reference"

    print("KERNEL_OK")
</pallas_src>

<mosaic_0001>
module attributes {stable_mosaic.version = 11 : i64} {
  func.func @_conv2d_same_kernel(%arg0: i32, %arg1: memref<1x4x16x16xf32, #tpu.memory_space<vmem>>, %arg2: memref<8x36xbf16, #tpu.memory_space<vmem>>, %arg3: memref<8x1xf32, #tpu.memory_space<vmem>>, %arg4: memref<1x8x16x16xf32, #tpu.memory_space<vmem>>, %arg5: memref<4x326xbf16, #tpu.memory_space<vmem>>, %arg6: memref<36x288xbf16, #tpu.memory_space<vmem>>) attributes {dimension_semantics = [#tpu.dimension_semantics<parallel>], iteration_bounds = array<i64: 2>, scalar_prefetch = 0 : i64, scratch_operands = 2 : i64, tpu.core_type = #tpu.core_type<tc>, window_params = [{transform_indices = @transform_0, window_bounds = array<i64: 1, 4, 16, 16>}, {pipeline_mode = #tpu.pipeline_mode<synchronous>, transform_indices = @transform_1, window_bounds = array<i64: 8, 36>}, {pipeline_mode = #tpu.pipeline_mode<synchronous>, transform_indices = @transform_2, window_bounds = array<i64: 8, 1>}, {transform_indices = @transform_3, window_bounds = array<i64: 1, 8, 16, 16>}]} {
    %cst = arith.constant 0.000000e+00 : bf16
    %0 = vector.broadcast %cst : bf16 to vector<4x326xbf16>
    %c0 = arith.constant 0 : index
    %c0_0 = arith.constant 0 : index
    %1 = vector.load %arg5[%c0, %c0_0] : memref<4x326xbf16, #tpu.memory_space<vmem>>, vector<4x326xbf16>
    tpu.vector_store %arg5[%c0, %c0_0], %0 {strides = array<i32>} : memref<4x326xbf16, #tpu.memory_space<vmem>>, vector<4x326xbf16>,
    %c0_1 = arith.constant 0 : index
    %c0_2 = arith.constant 0 : index
    %c0_3 = arith.constant 0 : index
    %c0_4 = arith.constant 0 : index
    %2 = vector.load %arg1[%c0_1, %c0_2, %c0_3, %c0_4] : memref<1x4x16x16xf32, #tpu.memory_space<vmem>>, vector<1x4x1x16xf32>
    %3 = vector.shape_cast %2 : vector<1x4x1x16xf32> to vector<4x16xf32>
    %4 = arith.truncf %3 : vector<4x16xf32> to vector<4x16xbf16>
    %c0_5 = arith.constant 0 : index
    %c19 = arith.constant 19 : index
    %5 = vector.load %arg5[%c0_5, %c19] : memref<4x326xbf16, #tpu.memory_space<vmem>>, vector<4x16xbf16>
    tpu.vector_store %arg5[%c0_5, %c19], %4 {strides = array<i32>} : memref<4x326xbf16, #tpu.memory_space<vmem>>, vector<4x16xbf16>,
    %c0_6 = arith.constant 0 : index
    %c0_7 = arith.constant 0 : index
    %c1 = arith.constant 1 : index
    %c0_8 = arith.constant 0 : index
    %6 = vector.load %arg1[%c0_6, %c0_7, %c1, %c0_8] : memref<1x4x16x16xf32, #tpu.memory_space<vmem>>, vector<1x4x1x16xf32>
    %7 = vector.shape_cast %6 : vector<1x4x1x16xf32> to vector<4x16xf32>
    %8 = arith.truncf %7 : vector<4x16xf32> to vector<4x16xbf16>
    %c0_9 = arith.constant 0 : index
    %c37 = arith.constant 37 : index
    %9 = vector.load %arg5[%c0_9, %c37] : memref<4x326xbf16, #tpu.memory_space<vmem>>, vector<4x16xbf16>
    tpu.vector_store %arg5[%c0_9, %c37], %8 {strides = array<i32>} : memref<4x326xbf16, #tpu.memory_space<vmem>>, vector<4x16xbf16>,
    %c0_10 = arith.constant 0 : index
    %c0_11 = arith.constant 0 : index
    %c2 = arith.constant 2 : index
    %c0_12 = arith.constant 0 : index
    %10 = vector.load %arg1[%c0_10, %c0_11, %c2, %c0_12] : memref<1x4x16x16xf32, #tpu.memory_space<vmem>>, vector<1x4x1x16xf32>
    %11 = vector.shape_cast %10 : vector<1x4x1x16xf32> to vector<4x16xf32>
    %12 = arith.truncf %11 : vector<4x16xf32> to vector<4x16xbf16>
    %c0_13 = arith.constant 0 : index
    %c55 = arith.constant 55 : index
    %13 = vector.load %arg5[%c0_13, %c55] : memref<4x326xbf16, #tpu.memory_space<vmem>>, vector<4x16xbf16>
    tpu.vector_store %arg5[%c0_13, %c55], %12 {strides = array<i32>} : memref<4x326xbf16, #tpu.memory_space<vmem>>, vector<4x16xbf16>,
    %c0_14 = arith.constant 0 : index
    %c0_15 = arith.constant 0 : index
    %c3 = arith.constant 3 : index
    %c0_16 = arith.constant 0 : index
    %14 = vector.load %arg1[%c0_14, %c0_15, %c3, %c0_16] : memref<1x4x16x16xf32, #tpu.memory_space<vmem>>, vector<1x4x1x16xf32>
    %15 = vector.shape_cast %14 : vector<1x4x1x16xf32> to vector<4x16xf32>
    %16 = arith.truncf %15 : vector<4x16xf32> to vector<4x16xbf16>
    %c0_17 = arith.constant 0 : index
    %c73 = arith.constant 73 : index
    %17 = vector.load %arg5[%c0_17, %c73] : memref<4x326xbf16, #tpu.memory_space<vmem>>, vector<4x16xbf16>
    tpu.vector_store %arg5[%c0_17, %c73], %16 {strides = array<i32>} : memref<4x326xbf16, #tpu.memory_space<vmem>>, vector<4x16xbf16>,
    %c0_18 = arith.constant 0 : index
    %c0_19 = arith.constant 0 : index
    %c4 = arith.constant 4 : index
    %c0_20 = arith.constant 0 : index
    %18 = vector.load %arg1[%c0_18, %c0_19, %c4, %c0_20] : memref<1x4x16x16xf32, #tpu.memory_space<vmem>>, vector<1x4x1x16xf32>
    %19 = vector.shape_cast %18 : vector<1x4x1x16xf32> to vector<4x16xf32>
    %20 = arith.truncf %19 : vector<4x16xf32> to vector<4x16xbf16>
    %c0_21 = arith.constant 0 : index
    %c91 = arith.constant 91 : index
    %21 = vector.load %arg5[%c0_21, %c91] : memref<4x326xbf16, #tpu.memory_space<vmem>>, vector<4x16xbf16>
    tpu.vector_store %arg5[%c0_21, %c91], %20 {strides = array<i32>} : memref<4x326xbf16, #tpu.memory_space<vmem>>, vector<4x16xbf16>,
    %c0_22 = arith.constant 0 : index
    %c0_23 = arith.constant 0 : index
    %c5 = arith.constant 5 : index
    %c0_24 = arith.constant 0 : index
    %22 = vector.load %arg1[%c0_22, %c0_23, %c5, %c0_24] : memref<1x4x16x16xf32, #tpu.memory_space<vmem>>, vector<1x4x1x16xf32>
    %23 = vector.shape_cast %22 : vector<1x4x1x16xf32> to vector<4x16xf32>
    %24 = arith.truncf %23 : vector<4x16xf32> to vector<4x16xbf16>
    %c0_25 = arith.constant 0 : index
    %c109 = arith.constant 109 : index
    %25 = vector.load %arg5[%c0_25, %c109] : memref<4x326xbf16, #tpu.memory_space<vmem>>, vector<4x16xbf16>
    tpu.vector_store %arg5[%c0_25, %c109], %24 {strides = array<i32>} : memref<4x326xbf16, #tpu.memory_space<vmem>>, vector<4x16xbf16>,
    %c0_26 = arith.constant 0 : index
    %c0_27 = arith.constant 0 : index
    %c6 = arith.constant 6 : index
    %c0_28 = arith.constant 0 : index
    %26 = vector.load %arg1[%c0_26, %c0_27, %c6, %c0_28] : memref<1x4x16x16xf32, #tpu.memory_space<vmem>>, vector<1x4x1x16xf32>
    %27 = vector.shape_cast %26 : vector<1x4x1x16xf32> to vector<4x16xf32>
    %28 = arith.truncf %27 : vector<4x16xf32> to vector<4x16xbf16>
    %c0_29 = arith.constant 0 : index
    %c127 = arith.constant 127 : index
    %29 = vector.load %arg5[%c0_29, %c127] : memref<4x326xbf16, #tpu.memory_space<vmem>>, vector<4x16xbf16>
    tpu.vector_store %arg5[%c0_29, %c127], %28 {strides = array<i32>} : memref<4x326xbf16, #tpu.memory_space<vmem>>, vector<4x16xbf16>,
    %c0_30 = arith.constant 0 : index
    %c0_31 = arith.constant 0 : index
    %c7 = arith.constant 7 : index
    %c0_32 = arith.constant 0 : index
    %30 = vector.load %arg1[%c0_30, %c0_31, %c7, %c0_32] : memref<1x4x16x16xf32, #tpu.memory_space<vmem>>, vector<1x4x1x16xf32>
    %31 = vector.shape_cast %30 : vector<1x4x1x16xf32> to vector<4x16xf32>
    %32 = arith.truncf %31 : vector<4x16xf32> to vector<4x16xbf16>
    %c0_33 = arith.constant 0 : index
    %c145 = arith.constant 145 : index
    %33 = vector.load %arg5[%c0_33, %c145] : memref<4x326xbf16, #tpu.memory_space<vmem>>, vector<4x16xbf16>
    tpu.vector_store %arg5[%c0_33, %c145], %32 {strides = array<i32>} : memref<4x326xbf16, #tpu.memory_space<vmem>>, vector<4x16xbf16>,
    %c0_34 = arith.constant 0 : index
    %c0_35 = arith.constant 0 : index
    %c8 = arith.constant 8 : index
    %c0_36 = arith.constant 0 : index
    %34 = vector.load %arg1[%c0_34, %c0_35, %c8, %c0_36] : memref<1x4x16x16xf32, #tpu.memory_space<vmem>>, vector<1x4x1x16xf32>
    %35 = vector.shape_cast %34 : vector<1x4x1x16xf32> to vector<4x16xf32>
    %36 = arith.truncf %35 : vector<4x16xf32> to vector<4x16xbf16>
    %c0_37 = arith.constant 0 : index
    %c163 = arith.constant 163 : index
    %37 = vector.load %arg5[%c0_37, %c163] : memref<4x326xbf16, #tpu.memory_space<vmem>>, vector<4x16xbf16>
    tpu.vector_store %arg5[%c0_37, %c163], %36 {strides = array<i32>} : memref<4x326xbf16, #tpu.memory_space<vmem>>, vector<4x16xbf16>,
    %c0_38 = arith.constant 0 : index
    %c0_39 = arith.constant 0 : index
    %c9 = arith.constant 9 : index
    %c0_40 = arith.constant 0 : index
    %38 = vector.load %arg1[%c0_38, %c0_39, %c9, %c0_40] : memref<1x4x16x16xf32, #tpu.memory_space<vmem>>, vector<1x4x1x16xf32>
    %39 = vector.shape_cast %38 : vector<1x4x1x16xf32> to vector<4x16xf32>
    %40 = arith.truncf %39 : vector<4x16xf32> to vector<4x16xbf16>
    %c0_41 = arith.constant 0 : index
    %c181 = arith.constant 181 : index
    %41 = vector.load %arg5[%c0_41, %c181] : memref<4x326xbf16, #tpu.memory_space<vmem>>, vector<4x16xbf16>
    tpu.vector_store %arg5[%c0_41, %c181], %40 {strides = array<i32>} : memref<4x326xbf16, #tpu.memory_space<vmem>>, vector<4x16xbf16>,
    %c0_42 = arith.constant 0 : index
    %c0_43 = arith.constant 0 : index
    %c10 = arith.constant 10 : index
    %c0_44 = arith.constant 0 : index
    %42 = vector.load %arg1[%c0_42, %c0_43, %c10, %c0_44] : memref<1x4x16x16xf32, #tpu.memory_space<vmem>>, vector<1x4x1x16xf32>
    %43 = vector.shape_cast %42 : vector<1x4x1x16xf32> to vector<4x16xf32>
    %44 = arith.truncf %43 : vector<4x16xf32> to vector<4x16xbf16>
    %c0_45 = arith.constant 0 : index
    %c199 = arith.constant 199 : index
    %45 = vector.load %arg5[%c0_45, %c199] : memref<4x326xbf16, #tpu.memory_space<vmem>>, vector<4x16xbf16>
    tpu.vector_store %arg5[%c0_45, %c199], %44 {strides = array<i32>} : memref<4x326xbf16, #tpu.memory_space<vmem>>, vector<4x16xbf16>,
    %c0_46 = arith.constant 0 : index
    %c0_47 = arith.constant 0 : index
    %c11 = arith.constant 11 : index
    %c0_48 = arith.constant 0 : index
    %46 = vector.load %arg1[%c0_46, %c0_47, %c11, %c0_48] : memref<1x4x16x16xf32, #tpu.memory_space<vmem>>, vector<1x4x1x16xf32>
    %47 = vector.shape_cast %46 : vector<1x4x1x16xf32> to vector<4x16xf32>
    %48 = arith.truncf %47 : vector<4x16xf32> to vector<4x16xbf16>
    %c0_49 = arith.constant 0 : index
    %c217 = arith.constant 217 : index
    %49 = vector.load %arg5[%c0_49, %c217] : memref<4x326xbf16, #tpu.memory_space<vmem>>, vector<4x16xbf16>
    tpu.vector_store %arg5[%c0_49, %c217], %48 {strides = array<i32>} : memref<4x326xbf16, #tpu.memory_space<vmem>>, vector<4x16xbf16>,
    %c0_50 = arith.constant 0 : index
    %c0_51 = arith.constant 0 : index
    %c12 = arith.constant 12 : index
    %c0_52 = arith.constant 0 : index
    %50 = vector.load %arg1[%c0_50, %c0_51, %c12, %c0_52] : memref<1x4x16x16xf32, #tpu.memory_space<vmem>>, vector<1x4x1x16xf32>
    %51 = vector.shape_cast %50 : vector<1x4x1x16xf32> to vector<4x16xf32>
    %52 = arith.truncf %51 : vector<4x16xf32> to vector<4x16xbf16>
    %c0_53 = arith.constant 0 : index
    %c235 = arith.constant 235 : index
    %53 = vector.load %arg5[%c0_53, %c235] : memref<4x326xbf16, #tpu.memory_space<vmem>>, vector<4x16xbf16>
    tpu.vector_store %arg5[%c0_53, %c235], %52 {strides = array<i32>} : memref<4x326xbf16, #tpu.memory_space<vmem>>, vector<4x16xbf16>,
    %c0_54 = arith.constant 0 : index
    %c0_55 = arith.constant 0 : index
    %c13 = arith.constant 13 : index
    %c0_56 = arith.constant 0 : index
    %54 = vector.load %arg1[%c0_54, %c0_55, %c13, %c0_56] : memref<1x4x16x16xf32, #tpu.memory_space<vmem>>, vector<1x4x1x16xf32>
    %55 = vector.shape_cast %54 : vector<1x4x1x16xf32> to vector<4x16xf32>
    %56 = arith.truncf %55 : vector<4x16xf32> to vector<4x16xbf16>
    %c0_57 = arith.constant 0 : index
    %c253 = arith.constant 253 : index
    %57 = vector.load %arg5[%c0_57, %c253] : memref<4x326xbf16, #tpu.memory_space<vmem>>, vector<4x16xbf16>
    tpu.vector_store %arg5[%c0_57, %c253], %56 {strides = array<i32>} : memref<4x326xbf16, #tpu.memory_space<vmem>>, vector<4x16xbf16>,
    %c0_58 = arith.constant 0 : index
    %c0_59 = arith.constant 0 : index
    %c14 = arith.constant 14 : index
    %c0_60 = arith.constant 0 : index
    %58 = vector.load %arg1[%c0_58, %c0_59, %c14, %c0_60] : memref<1x4x16x16xf32, #tpu.memory_space<vmem>>, vector<1x4x1x16xf32>
    %59 = vector.shape_cast %58 : vector<1x4x1x16xf32> to vector<4x16xf32>
    %60 = arith.truncf %59 : vector<4x16xf32> to vector<4x16xbf16>
    %c0_61 = arith.constant 0 : index
    %c271 = arith.constant 271 : index
    %61 = vector.load %arg5[%c0_61, %c271] : memref<4x326xbf16, #tpu.memory_space<vmem>>, vector<4x16xbf16>
    tpu.vector_store %arg5[%c0_61, %c271], %60 {strides = array<i32>} : memref<4x326xbf16, #tpu.memory_space<vmem>>, vector<4x16xbf16>,
    %c0_62 = arith.constant 0 : index
    %c0_63 = arith.constant 0 : index
    %c15 = arith.constant 15 : index
    %c0_64 = arith.constant 0 : index
    %62 = vector.load %arg1[%c0_62, %c0_63, %c15, %c0_64] : memref<1x4x16x16xf32, #tpu.memory_space<vmem>>, vector<1x4x1x16xf32>
    %63 = vector.shape_cast %62 : vector<1x4x1x16xf32> to vector<4x16xf32>
    %64 = arith.truncf %63 : vector<4x16xf32> to vector<4x16xbf16>
    %c0_65 = arith.constant 0 : index
    %c289 = arith.constant 289 : index
    %65 = vector.load %arg5[%c0_65, %c289] : memref<4x326xbf16, #tpu.memory_space<vmem>>, vector<4x16xbf16>
    tpu.vector_store %arg5[%c0_65, %c289], %64 {strides = array<i32>} : memref<4x326xbf16, #tpu.memory_space<vmem>>, vector<4x16xbf16>,
    %c0_66 = arith.constant 0 : index
    %c0_67 = arith.constant 0 : index
    %66 = vector.load %arg5[%c0_66, %c0_67] : memref<4x326xbf16, #tpu.memory_space<vmem>>, vector<4x288xbf16>
    %c0_68 = arith.constant 0 : index
    %c0_69 = arith.constant 0 : index
    %67 = vector.load %arg6[%c0_68, %c0_69] : memref<36x288xbf16, #tpu.memory_space<vmem>>, vector<4x288xbf16>
    tpu.vector_store %arg6[%c0_68, %c0_69], %66 {strides = array<i32>} : memref<36x288xbf16, #tpu.memory_space<vmem>>, vector<4x288xbf16>,
    %c0_70 = arith.constant 0 : index
    %c1_71 = arith.constant 1 : index
    %68 = vector.load %arg5[%c0_70, %c1_71] : memref<4x326xbf16, #tpu.memory_space<vmem>>, vector<4x288xbf16>
    %c4_72 = arith.constant 4 : index
    %c0_73 = arith.constant 0 : index
    %69 = vector.load %arg6[%c4_72, %c0_73] : memref<36x288xbf16, #tpu.memory_space<vmem>>, vector<4x288xbf16>
    tpu.vector_store %arg6[%c4_72, %c0_73], %68 {strides = array<i32>} : memref<36x288xbf16, #tpu.memory_space<vmem>>, vector<4x288xbf16>,
    %c0_74 = arith.constant 0 : index
    %c2_75 = arith.constant 2 : index
    %70 = vector.load %arg5[%c0_74, %c2_75] : memref<4x326xbf16, #tpu.memory_space<vmem>>, vector<4x288xbf16>
    %c8_76 = arith.constant 8 : index
    %c0_77 = arith.constant 0 : index
    %71 = vector.load %arg6[%c8_76, %c0_77] : memref<36x288xbf16, #tpu.memory_space<vmem>>, vector<4x288xbf16>
    tpu.vector_store %arg6[%c8_76, %c0_77], %70 {strides = array<i32>} : memref<36x288xbf16, #tpu.memory_space<vmem>>, vector<4x288xbf16>,
    %c0_78 = arith.constant 0 : index
    %c18 = arith.constant 18 : index
    %72 = vector.load %arg5[%c0_78, %c18] : memref<4x326xbf16, #tpu.memory_space<vmem>>, vector<4x288xbf16>
    %c12_79 = arith.constant 12 : index
    %c0_80 = arith.constant 0 : index
    %73 = vector.load %arg6[%c12_79, %c0_80] : memref<36x288xbf16, #tpu.memory_space<vmem>>, vector<4x288xbf16>
    tpu.vector_store %arg6[%c12_79, %c0_80], %72 {strides = array<i32>} : memref<36x288xbf16, #tpu.memory_space<vmem>>, vector<4x288xbf16>,
    %c0_81 = arith.constant 0 : index
    %c19_82 = arith.constant 19 : index
    %74 = vector.load %arg5[%c0_81, %c19_82] : memref<4x326xbf16, #tpu.memory_space<vmem>>, vector<4x288xbf16>
    %c16 = arith.constant 16 : index
    %c0_83 = arith.constant 0 : index
    %75 = vector.load %arg6[%c16, %c0_83] : memref<36x288xbf16, #tpu.memory_space<vmem>>, vector<4x288xbf16>
    tpu.vector_store %arg6[%c16, %c0_83], %74 {strides = array<i32>} : memref<36x288xbf16, #tpu.memory_space<vmem>>, vector<4x288xbf16>,
    %c0_84 = arith.constant 0 : index
    %c20 = arith.constant 20 : index
    %76 = vector.load %arg5[%c0_84, %c20] : memref<4x326xbf16, #tpu.memory_space<vmem>>, vector<4x288xbf16>
    %c20_85 = arith.constant 20 : index
    %c0_86 = arith.constant 0 : index
    %77 = vector.load %arg6[%c20_85, %c0_86] : memref<36x288xbf16, #tpu.memory_space<vmem>>, vector<4x288xbf16>
    tpu.vector_store %arg6[%c20_85, %c0_86], %76 {strides = array<i32>} : memref<36x288xbf16, #tpu.memory_space<vmem>>, vector<4x288xbf16>,
    %c0_87 = arith.constant 0 : index
    %c36 = arith.constant 36 : index
    %78 = vector.load %arg5[%c0_87, %c36] : memref<4x326xbf16, #tpu.memory_space<vmem>>, vector<4x288xbf16>
    %c24 = arith.constant 24 : index
    %c0_88 = arith.constant 0 : index
    %79 = vector.load %arg6[%c24, %c0_88] : memref<36x288xbf16, #tpu.memory_space<vmem>>, vector<4x288xbf16>
    tpu.vector_store %arg6[%c24, %c0_88], %78 {strides = array<i32>} : memref<36x288xbf16, #tpu.memory_space<vmem>>, vector<4x288xbf16>,
    %c0_89 = arith.constant 0 : index
    %c37_90 = arith.constant 37 : index
    %80 = vector.load %arg5[%c0_89, %c37_90] : memref<4x326xbf16, #tpu.memory_space<vmem>>, vector<4x288xbf16>
    %c28 = arith.constant 28 : index
    %c0_91 = arith.constant 0 : index
    %81 = vector.load %arg6[%c28, %c0_91] : memref<36x288xbf16, #tpu.memory_space<vmem>>, vector<4x288xbf16>
    tpu.vector_store %arg6[%c28, %c0_91], %80 {strides = array<i32>} : memref<36x288xbf16, #tpu.memory_space<vmem>>, vector<4x288xbf16>,
    %c0_92 = arith.constant 0 : index
    %c38 = arith.constant 38 : index
    %82 = vector.load %arg5[%c0_92, %c38] : memref<4x326xbf16, #tpu.memory_space<vmem>>, vector<4x288xbf16>
    %c32 = arith.constant 32 : index
    %c0_93 = arith.constant 0 : index
    %83 = vector.load %arg6[%c32, %c0_93] : memref<36x288xbf16, #tpu.memory_space<vmem>>, vector<4x288xbf16>
    tpu.vector_store %arg6[%c32, %c0_93], %82 {strides = array<i32>} : memref<36x288xbf16, #tpu.memory_space<vmem>>, vector<4x288xbf16>,
    %c0_94 = arith.constant 0 : index
    %c0_95 = arith.constant 0 : index
    %84 = vector.load %arg2[%c0_94, %c0_95] : memref<8x36xbf16, #tpu.memory_space<vmem>>, vector<8x36xbf16>
    %c0_96 = arith.constant 0 : index
    %c0_97 = arith.constant 0 : index
    %85 = vector.load %arg6[%c0_96, %c0_97] : memref<36x288xbf16, #tpu.memory_space<vmem>>, vector<36x288xbf16>
    %cst_98 = arith.constant dense<0.000000e+00> : vector<8x288xf32>
    %86 = tpu.matmul %84, %85, %cst_98 {dimension_numbers = #tpu.dot_dimension_numbers<[1], [0], [0], [1], [0, 0, 1, 1], [], []>} : vector<8x36xbf16>, vector<36x288xbf16>, vector<8x288xf32> -> vector<8x288xf32>
    %c0_99 = arith.constant 0 : index
    %c0_100 = arith.constant 0 : index
    %87 = vector.load %arg3[%c0_99, %c0_100] : memref<8x1xf32, #tpu.memory_space<vmem>>, vector<8x1xf32>
    %88 = vector.broadcast %87 : vector<8x1xf32> to vector<8x288xf32>
    %89 = arith.addf %86, %88 : vector<8x288xf32>
    %90 = vector.extract_strided_slice %89 {offsets = [0, 0], sizes = [8, 16], strides = [1, 1]} : vector<8x288xf32> to vector<8x16xf32>
    %c0_101 = arith.constant 0 : index
    %c0_102 = arith.constant 0 : index
    %c0_103 = arith.constant 0 : index
    %c0_104 = arith.constant 0 : index
    %91 = vector.load %arg4[%c0_101, %c0_102, %c0_103, %c0_104] : memref<1x8x16x16xf32, #tpu.memory_space<vmem>>, vector<1x8x1x16xf32>
    %92 = vector.shape_cast %91 : vector<1x8x1x16xf32> to vector<8x16xf32>
    %93 = vector.shape_cast %90 : vector<8x16xf32> to vector<1x8x1x16xf32>
    tpu.vector_store %arg4[%c0_101, %c0_102, %c0_103, %c0_104], %93 {strides = array<i32>} : memref<1x8x16x16xf32, #tpu.memory_space<vmem>>, vector<1x8x1x16xf32>,
    %94 = vector.extract_strided_slice %89 {offsets = [0, 18], sizes = [8, 16], strides = [1, 1]} : vector<8x288xf32> to vector<8x16xf32>
    %c0_105 = arith.constant 0 : index
    %c0_106 = arith.constant 0 : index
    %c1_107 = arith.constant 1 : index
    %c0_108 = arith.constant 0 : index
    %95 = vector.load %arg4[%c0_105, %c0_106, %c1_107, %c0_108] : memref<1x8x16x16xf32, #tpu.memory_space<vmem>>, vector<1x8x1x16xf32>
    %96 = vector.shape_cast %95 : vector<1x8x1x16xf32> to vector<8x16xf32>
    %97 = vector.shape_cast %94 : vector<8x16xf32> to vector<1x8x1x16xf32>
    tpu.vector_store %arg4[%c0_105, %c0_106, %c1_107, %c0_108], %97 {strides = array<i32>} : memref<1x8x16x16xf32, #tpu.memory_space<vmem>>, vector<1x8x1x16xf32>,
    %98 = vector.extract_strided_slice %89 {offsets = [0, 36], sizes = [8, 16], strides = [1, 1]} : vector<8x288xf32> to vector<8x16xf32>
    %c0_109 = arith.constant 0 : index
    %c0_110 = arith.constant 0 : index
    %c2_111 = arith.constant 2 : index
    %c0_112 = arith.constant 0 : index
    %99 = vector.load %arg4[%c0_109, %c0_110, %c2_111, %c0_112] : memref<1x8x16x16xf32, #tpu.memory_space<vmem>>, vector<1x8x1x16xf32>
    %100 = vector.shape_cast %99 : vector<1x8x1x16xf32> to vector<8x16xf32>
    %101 = vector.shape_cast %98 : vector<8x16xf32> to vector<1x8x1x16xf32>
    tpu.vector_store %arg4[%c0_109, %c0_110, %c2_111, %c0_112], %101 {strides = array<i32>} : memref<1x8x16x16xf32, #tpu.memory_space<vmem>>, vector<1x8x1x16xf32>,
    %102 = vector.extract_strided_slice %89 {offsets = [0, 54], sizes = [8, 16], strides = [1, 1]} : vector<8x288xf32> to vector<8x16xf32>
    %c0_113 = arith.constant 0 : index
    %c0_114 = arith.constant 0 : index
    %c3_115 = arith.constant 3 : index
    %c0_116 = arith.constant 0 : index
    %103 = vector.load %arg4[%c0_113, %c0_114, %c3_115, %c0_116] : memref<1x8x16x16xf32, #tpu.memory_space<vmem>>, vector<1x8x1x16xf32>
    %104 = vector.shape_cast %103 : vector<1x8x1x16xf32> to vector<8x16xf32>
    %105 = vector.shape_cast %102 : vector<8x16xf32> to vector<1x8x1x16xf32>
    tpu.vector_store %arg4[%c0_113, %c0_114, %c3_115, %c0_116], %105 {strides = array<i32>} : memref<1x8x16x16xf32, #tpu.memory_space<vmem>>, vector<1x8x1x16xf32>,
    %106 = vector.extract_strided_slice %89 {offsets = [0, 72], sizes = [8, 16], strides = [1, 1]} : vector<8x288xf32> to vector<8x16xf32>
    %c0_117 = arith.constant 0 : index
    %c0_118 = arith.constant 0 : index
    %c4_119 = arith.constant 4 : index
    %c0_120 = arith.constant 0 : index
    %107 = vector.load %arg4[%c0_117, %c0_118, %c4_119, %c0_120] : memref<1x8x16x16xf32, #tpu.memory_space<vmem>>, vector<1x8x1x16xf32>
    %108 = vector.shape_cast %107 : vector<1x8x1x16xf32> to vector<8x16xf32>
    %109 = vector.shape_cast %106 : vector<8x16xf32> to vector<1x8x1x16xf32>
    tpu.vector_store %arg4[%c0_117, %c0_118, %c4_119, %c0_120], %109 {strides = array<i32>} : memref<1x8x16x16xf32, #tpu.memory_space<vmem>>, vector<1x8x1x16xf32>,
    %110 = vector.extract_strided_slice %89 {offsets = [0, 90], sizes = [8, 16], strides = [1, 1]} : vector<8x288xf32> to vector<8x16xf32>
    %c0_121 = arith.constant 0 : index
    %c0_122 = arith.constant 0 : index
    %c5_123 = arith.constant 5 : index
    %c0_124 = arith.constant 0 : index
    %111 = vector.load %arg4[%c0_121, %c0_122, %c5_123, %c0_124] : memref<1x8x16x16xf32, #tpu.memory_space<vmem>>, vector<1x8x1x16xf32>
    %112 = vector.shape_cast %111 : vector<1x8x1x16xf32> to vector<8x16xf32>
    %113 = vector.shape_cast %110 : vector<8x16xf32> to vector<1x8x1x16xf32>
    tpu.vector_store %arg4[%c0_121, %c0_122, %c5_123, %c0_124], %113 {strides = array<i32>} : memref<1x8x16x16xf32, #tpu.memory_space<vmem>>, vector<1x8x1x16xf32>,
    %114 = vector.extract_strided_slice %89 {offsets = [0, 108], sizes = [8, 16], strides = [1, 1]} : vector<8x288xf32> to vector<8x16xf32>
    %c0_125 = arith.constant 0 : index
    %c0_126 = arith.constant 0 : index
    %c6_127 = arith.constant 6 : index
    %c0_128 = arith.constant 0 : index
    %115 = vector.load %arg4[%c0_125, %c0_126, %c6_127, %c0_128] : memref<1x8x16x16xf32, #tpu.memory_space<vmem>>, vector<1x8x1x16xf32>
    %116 = vector.shape_cast %115 : vector<1x8x1x16xf32> to vector<8x16xf32>
    %117 = vector.shape_cast %114 : vector<8x16xf32> to vector<1x8x1x16xf32>
    tpu.vector_store %arg4[%c0_125, %c0_126, %c6_127, %c0_128], %117 {strides = array<i32>} : memref<1x8x16x16xf32, #tpu.memory_space<vmem>>, vector<1x8x1x16xf32>,
    %118 = vector.extract_strided_slice %89 {offsets = [0, 126], sizes = [8, 16], strides = [1, 1]} : vector<8x288xf32> to vector<8x16xf32>
    %c0_129 = arith.constant 0 : index
    %c0_130 = arith.constant 0 : index
    %c7_131 = arith.constant 7 : index
    %c0_132 = arith.constant 0 : index
    %119 = vector.load %arg4[%c0_129, %c0_130, %c7_131, %c0_132] : memref<1x8x16x16xf32, #tpu.memory_space<vmem>>, vector<1x8x1x16xf32>
    %120 = vector.shape_cast %119 : vector<1x8x1x16xf32> to vector<8x16xf32>
    %121 = vector.shape_cast %118 : vector<8x16xf32> to vector<1x8x1x16xf32>
    tpu.vector_store %arg4[%c0_129, %c0_130, %c7_131, %c0_132], %121 {strides = array<i32>} : memref<1x8x16x16xf32, #tpu.memory_space<vmem>>, vector<1x8x1x16xf32>,
    %122 = vector.extract_strided_slice %89 {offsets = [0, 144], sizes = [8, 16], strides = [1, 1]} : vector<8x288xf32> to vector<8x16xf32>
    %c0_133 = arith.constant 0 : index
    %c0_134 = arith.constant 0 : index
    %c8_135 = arith.constant 8 : index
    %c0_136 = arith.constant 0 : index
    %123 = vector.load %arg4[%c0_133, %c0_134, %c8_135, %c0_136] : memref<1x8x16x16xf32, #tpu.memory_space<vmem>>, vector<1x8x1x16xf32>
    %124 = vector.shape_cast %123 : vector<1x8x1x16xf32> to vector<8x16xf32>
    %125 = vector.shape_cast %122 : vector<8x16xf32> to vector<1x8x1x16xf32>
    tpu.vector_store %arg4[%c0_133, %c0_134, %c8_135, %c0_136], %125 {strides = array<i32>} : memref<1x8x16x16xf32, #tpu.memory_space<vmem>>, vector<1x8x1x16xf32>,
    %126 = vector.extract_strided_slice %89 {offsets = [0, 162], sizes = [8, 16], strides = [1, 1]} : vector<8x288xf32> to vector<8x16xf32>
    %c0_137 = arith.constant 0 : index
    %c0_138 = arith.constant 0 : index
    %c9_139 = arith.constant 9 : index
    %c0_140 = arith.constant 0 : index
    %127 = vector.load %arg4[%c0_137, %c0_138, %c9_139, %c0_140] : memref<1x8x16x16xf32, #tpu.memory_space<vmem>>, vector<1x8x1x16xf32>
    %128 = vector.shape_cast %127 : vector<1x8x1x16xf32> to vector<8x16xf32>
    %129 = vector.shape_cast %126 : vector<8x16xf32> to vector<1x8x1x16xf32>
    tpu.vector_store %arg4[%c0_137, %c0_138, %c9_139, %c0_140], %129 {strides = array<i32>} : memref<1x8x16x16xf32, #tpu.memory_space<vmem>>, vector<1x8x1x16xf32>,
    %130 = vector.extract_strided_slice %89 {offsets = [0, 180], sizes = [8, 16], strides = [1, 1]} : vector<8x288xf32> to vector<8x16xf32>
    %c0_141 = arith.constant 0 : index
    %c0_142 = arith.constant 0 : index
    %c10_143 = arith.constant 10 : index
    %c0_144 = arith.constant 0 : index
    %131 = vector.load %arg4[%c0_141, %c0_142, %c10_143, %c0_144] : memref<1x8x16x16xf32, #tpu.memory_space<vmem>>, vector<1x8x1x16xf32>
    %132 = vector.shape_cast %131 : vector<1x8x1x16xf32> to vector<8x16xf32>
    %133 = vector.shape_cast %130 : vector<8x16xf32> to vector<1x8x1x16xf32>
    tpu.vector_store %arg4[%c0_141, %c0_142, %c10_143, %c0_144], %133 {strides = array<i32>} : memref<1x8x16x16xf32, #tpu.memory_space<vmem>>, vector<1x8x1x16xf32>,
    %134 = vector.extract_strided_slice %89 {offsets = [0, 198], sizes = [8, 16], strides = [1, 1]} : vector<8x288xf32> to vector<8x16xf32>
    %c0_145 = arith.constant 0 : index
    %c0_146 = arith.constant 0 : index
    %c11_147 = arith.constant 11 : index
    %c0_148 = arith.constant 0 : index
    %135 = vector.load %arg4[%c0_145, %c0_146, %c11_147, %c0_148] : memref<1x8x16x16xf32, #tpu.memory_space<vmem>>, vector<1x8x1x16xf32>
    %136 = vector.shape_cast %135 : vector<1x8x1x16xf32> to vector<8x16xf32>
    %137 = vector.shape_cast %134 : vector<8x16xf32> to vector<1x8x1x16xf32>
    tpu.vector_store %arg4[%c0_145, %c0_146, %c11_147, %c0_148], %137 {strides = array<i32>} : memref<1x8x16x16xf32, #tpu.memory_space<vmem>>, vector<1x8x1x16xf32>,
    %138 = vector.extract_strided_slice %89 {offsets = [0, 216], sizes = [8, 16], strides = [1, 1]} : vector<8x288xf32> to vector<8x16xf32>
    %c0_149 = arith.constant 0 : index
    %c0_150 = arith.constant 0 : index
    %c12_151 = arith.constant 12 : index
    %c0_152 = arith.constant 0 : index
    %139 = vector.load %arg4[%c0_149, %c0_150, %c12_151, %c0_152] : memref<1x8x16x16xf32, #tpu.memory_space<vmem>>, vector<1x8x1x16xf32>
    %140 = vector.shape_cast %139 : vector<1x8x1x16xf32> to vector<8x16xf32>
    %141 = vector.shape_cast %138 : vector<8x16xf32> to vector<1x8x1x16xf32>
    tpu.vector_store %arg4[%c0_149, %c0_150, %c12_151, %c0_152], %141 {strides = array<i32>} : memref<1x8x16x16xf32, #tpu.memory_space<vmem>>, vector<1x8x1x16xf32>,
    %142 = vector.extract_strided_slice %89 {offsets = [0, 234], sizes = [8, 16], strides = [1, 1]} : vector<8x288xf32> to vector<8x16xf32>
    %c0_153 = arith.constant 0 : index
    %c0_154 = arith.constant 0 : index
    %c13_155 = arith.constant 13 : index
    %c0_156 = arith.constant 0 : index
    %143 = vector.load %arg4[%c0_153, %c0_154, %c13_155, %c0_156] : memref<1x8x16x16xf32, #tpu.memory_space<vmem>>, vector<1x8x1x16xf32>
    %144 = vector.shape_cast %143 : vector<1x8x1x16xf32> to vector<8x16xf32>
    %145 = vector.shape_cast %142 : vector<8x16xf32> to vector<1x8x1x16xf32>
    tpu.vector_store %arg4[%c0_153, %c0_154, %c13_155, %c0_156], %145 {strides = array<i32>} : memref<1x8x16x16xf32, #tpu.memory_space<vmem>>, vector<1x8x1x16xf32>,
    %146 = vector.extract_strided_slice %89 {offsets = [0, 252], sizes = [8, 16], strides = [1, 1]} : vector<8x288xf32> to vector<8x16xf32>
    %c0_157 = arith.constant 0 : index
    %c0_158 = arith.constant 0 : index
    %c14_159 = arith.constant 14 : index
    %c0_160 = arith.constant 0 : index
    %147 = vector.load %arg4[%c0_157, %c0_158, %c14_159, %c0_160] : memref<1x8x16x16xf32, #tpu.memory_space<vmem>>, vector<1x8x1x16xf32>
    %148 = vector.shape_cast %147 : vector<1x8x1x16xf32> to vector<8x16xf32>
    %149 = vector.shape_cast %146 : vector<8x16xf32> to vector<1x8x1x16xf32>
    tpu.vector_store %arg4[%c0_157, %c0_158, %c14_159, %c0_160], %149 {strides = array<i32>} : memref<1x8x16x16xf32, #tpu.memory_space<vmem>>, vector<1x8x1x16xf32>,
    %150 = vector.extract_strided_slice %89 {offsets = [0, 270], sizes = [8, 16], strides = [1, 1]} : vector<8x288xf32> to vector<8x16xf32>
    %c0_161 = arith.constant 0 : index
    %c0_162 = arith.constant 0 : index
    %c15_163 = arith.constant 15 : index
    %c0_164 = arith.constant 0 : index
    %151 = vector.load %arg4[%c0_161, %c0_162, %c15_163, %c0_164] : memref<1x8x16x16xf32, #tpu.memory_space<vmem>>, vector<1x8x1x16xf32>
    %152 = vector.shape_cast %151 : vector<1x8x1x16xf32> to vector<8x16xf32>
    %153 = vector.shape_cast %150 : vector<8x16xf32> to vector<1x8x1x16xf32>
    tpu.vector_store %arg4[%c0_161, %c0_162, %c15_163, %c0_164], %153 {strides = array<i32>} : memref<1x8x16x16xf32, #tpu.memory_space<vmem>>, vector<1x8x1x16xf32>,
    return
  }
  func.func @transform_0(%arg0: i32) -> (i32, i32, i32, i32) {
    %c0_i32 = arith.constant 0 : i32
    %c0_i32_0 = arith.constant 0 : i32
    %c0_i32_1 = arith.constant 0 : i32
    %c0_i32_2 = arith.constant 0 : i32
    return %arg0, %c0_i32, %c0_i32_0, %c0_i32_1 : i32, i32, i32, i32
  }
  func.func @transform_1(%arg0: i32) -> (i32, i32) {
    %c0_i32 = arith.constant 0 : i32
    %c0_i32_0 = arith.constant 0 : i32
    %c0_i32_1 = arith.constant 0 : i32
    return %c0_i32, %c0_i32_0 : i32, i32
  }
  func.func @transform_2(%arg0: i32) -> (i32, i32) {
    %c0_i32 = arith.constant 0 : i32
    %c0_i32_0 = arith.constant 0 : i32
    %c0_i32_1 = arith.constant 0 : i32
    return %c0_i32, %c0_i32_0 : i32, i32
  }
  func.func @transform_3(%arg0: i32) -> (i32, i32, i32, i32) {
    %c0_i32 = arith.constant 0 : i32
    %c0_i32_0 = arith.constant 0 : i32
    %c0_i32_1 = arith.constant 0 : i32
    %c0_i32_2 = arith.constant 0 : i32
    return %arg0, %c0_i32, %c0_i32_0, %c0_i32_1 : i32, i32, i32, i32
  }
}

</mosaic_0001>

<llo_original>
// kernel: conv2d_same.1
$region0: #{conv2d_same.1}
  #allocation0 [shape = 'u32[]', space=smem, size = 0x4, offset = 0x4, fixed_abs, tag = 'smem constant byte address 0x4 - core index']
  #allocation1 [shape = 'u32[144,128]{1,0:T(1,128)}', space=vmem, size = 0x12000, scoped, tag = 'internal scratch']
  #allocation2 [shape = 'bf16[4,326]{1,0:T(4,128)(2,1)}', space=vmem, size = 0xc00, scoped, tag = 'scratch operand']
  #allocation3 [shape = 'bf16[36,288]{1,0:T(8,128)(2,1)}', space=vmem, size = 0x7800, scoped, tag = 'scratch operand']
  %s0 = inlined_call_operand.hbm [shape: f32[2,4,16,16], index: 0, kind: input, shape index: {}]
  %s1 = inlined_call_operand.vmem [shape: bf16[8,36], index: 1, kind: input, shape index: {}]
  %s2 = inlined_call_operand.vmem [shape: f32[8,1], index: 2, kind: input, shape index: {}]
  %s3 = inlined_call_operand.hbm [shape: f32[2,8,16,16], index: 3, kind: output, shape index: {}]
  %s4 = sld [smem:[#allocation0]]
  $region49: #{conv2d_same.1} parent=0
    _
  %s6 = ssub.s32 1, %s4
  %s7 = scalar_select 0, %s6, %s4
  $region1: #{conv2d_same.1} parent=0
    #allocation4 [shape = 'u8[65536]{0}', space=vmem, size = 0x10000, scoped, tag = 'input window, operand 0']
    #allocation5 [shape = 's32[2]{0}', space=sflag, size = 0x8, scoped, tag = 'scoped memory for conv2d_same.1']
    #allocation6 [shape = 's32[2]{0}', space=sflag, size = 0x8, scoped, tag = 'scoped memory for conv2d_same.1']
    #allocation7 [shape = 'u8[131072]{0}', space=vmem, size = 0x20000, scoped, tag = 'output window, operand 0']
    %8 = vsyncpa [#allocation5], 0
    %s9 = scalar_lea.sflag [#allocation5], 1
    %10 = vsyncpa %s9, 0
    %11 = vsyncpa [#allocation6], 0
    %s12 = scalar_lea.sflag [#allocation6], 1
    %13 = vsyncpa %s12, 0
    loop: start=0, step=1, limit=4
    $region2: #{conv2d_same.1} parent=1 // loop_pre_header
      _
    $region3: #{conv2d_same.1} parent=1 // loop_header
      %s15 = sphi 0, %s19
      %p16 = scmp.ge.s32.totalorder %s15, 4
      %s25 = sphi 0, %s27
      %s28 = sphi 0, %s25
      %s29 = sphi 0, %s28
      %s45 = sphi 0, %s29
      %s49 = sphi 0, %s49
      %s51 = sphi 0, %s49
      %s52 = sphi 0, %s51
      %s66 = sphi 0, %s52
      %s70 = sphi 0, %s70
      %s72 = sphi 0, %s70
      %s73 = sphi 0, %s72
      %s87 = sphi 0, %s73
      %s93 = sphi 0, %s95
      %s96 = sphi 0, %s93
      %s97 = sphi 0, %s96
      %s113 = sphi 0, %s97
    $region4: #{conv2d_same.1} parent=1 // loop_header_branch
      %18 = sbr.rel (%p16) target = $region8
    $region5: #{conv2d_same.1} parent=1 // loop_body
      %s20 = ssub.s32 %s15, 1
      %s21 = ssub.s32 %s15, 2
      %s22 = sadd.s32 %s15, 1
      %s23 = ssub.s32 %s15, %s22
      %p24 = scmp.eq.s32.totalorder %s23, 0
      %s26 = sadd.s32 %s25, 1
      %s27 = scalar_select %p24, %s25, %s26
      %p30 = pneg %p24
      %p31 = scmp.eq.s32.totalorder %s15, 1
      %p32 = por %p30, %p31
      %p33 = scmp.ne.s32.totalorder %s25, %s28
      %p34 = scmp.eq.s32.totalorder %s15, 0
      %p35 = por %p33, %p34
      %p36 = scmp.ne.s32.totalorder %s25, %s28
      %p37 = scmp.eq.s32.totalorder %s20, 1
      %p38 = por %p36, %p37
      %p39 = scmp.ne.s32.totalorder %s28, %s29
      %p40 = scmp.eq.s32.totalorder %s20, 0
      %p41 = por %p39, %p40
      %p42 = scmp.ne.s32.totalorder %s28, %s29
      %p43 = scmp.eq.s32.totalorder %s21, 1
      %p44 = por %p42, %p43
      %p46 = scmp.ne.s32.totalorder %s29, %s45
      %p47 = scmp.eq.s32.totalorder %s21, 0
      %p48 = por %p46, %p47
      %s50 = sadd.s32 %s49, 1
      %p53 = scmp.eq.s32.totalorder %s15, 1
      %p54 = scmp.ne.s32.totalorder %s49, %s51
      %p55 = scmp.eq.s32.totalorder %s15, 0
      %p56 = por %p54, %p55
      %p57 = scmp.ne.s32.totalorder %s49, %s51
      %p58 = scmp.eq.s32.totalorder %s20, 1
      %p59 = por %p57, %p58
      %p60 = scmp.ne.s32.totalorder %s51, %s52
      %p61 = scmp.eq.s32.totalorder %s20, 0
      %p62 = por %p60, %p61
      %p63 = scmp.ne.s32.totalorder %s51, %s52
      %p64 = scmp.eq.s32.totalorder %s21, 1
      %p65 = por %p63, %p64
      %p67 = scmp.ne.s32.totalorder %s52, %s66
      %p68 = scmp.eq.s32.totalorder %s21, 0
      %p69 = por %p67, %p68
      %s71 = sadd.s32 %s70, 1
      %p74 = scmp.eq.s32.totalorder %s15, 1
      %p75 = scmp.ne.s32.totalorder %s70, %s72
      %p76 = scmp.eq.s32.totalorder %s15, 0
      %p77 = por %p75, %p76
      %p78 = scmp.ne.s32.totalorder %s70, %s72
      %p79 = scmp.eq.s32.totalorder %s20, 1
      %p80 = por %p78, %p79
      %p81 = scmp.ne.s32.totalorder %s72, %s73
      %p82 = scmp.eq.s32.totalorder %s20, 0
      %p83 = por %p81, %p82
      %p84 = scmp.ne.s32.totalorder %s72, %s73
      %p85 = scmp.eq.s32.totalorder %s21, 1
      %p86 = por %p84, %p85
      %p88 = scmp.ne.s32.totalorder %s73, %s87
      %p89 = scmp.eq.s32.totalorder %s21, 0
      %p90 = por %p88, %p89
      %s91 = ssub.s32 %s15, %s22
      %p92 = scmp.eq.s32.totalorder %s91, 0
      %s94 = sadd.s32 %s93, 1
      %s95 = scalar_select %p92, %s93, %s94
      %p98 = pneg %p92
      %p99 = scmp.eq.s32.totalorder %s15, 1
      %p100 = por %p98, %p99
      %p101 = scmp.ne.s32.totalorder %s93, %s96
      %p102 = scmp.eq.s32.totalorder %s15, 0
      %p103 = por %p101, %p102
      %p104 = scmp.ne.s32.totalorder %s93, %s96
      %p105 = scmp.eq.s32.totalorder %s20, 1
      %p106 = por %p104, %p105
      %p107 = scmp.ne.s32.totalorder %s96, %s97
      %p108 = scmp.eq.s32.totalorder %s20, 0
      %p109 = por %p107, %p108
      %p110 = scmp.ne.s32.totalorder %s96, %s97
      %p111 = scmp.eq.s32.totalorder %s21, 1
      %p112 = por %p110, %p111
      %p114 = scmp.ne.s32.totalorder %s97, %s113
      %p115 = scmp.eq.s32.totalorder %s21, 0
      %p116 = por %p114, %p115
      %p117 = scmp.le.s32.totalorder 1, %s15
      %p118 = scmp.lt.s32.totalorder %s15, 3
      %p119 = pnand %p117, %p118
      %p120 = pneg %p119
      // Predicated region
      $region9: #{conv2d_same.1} parent=5 // pred_check
        _
      $region10: #{conv2d_same.1} parent=5 // pred_check_branch
        %122 = sbr.rel (%p119) target = $region12
      $region11: #{conv2d_same.1} parent=5 // pred_region
        %s123 = ssub.s32 %s15, 1
        // Predicated region
        $region13: #{conv2d_same.1} parent=11 // pred_check
          %p124 = pneg %p62
        $region14: #{conv2d_same.1} parent=11 // pred_check_branch
          %126 = sbr.rel (%p124) target = $region16
        $region15: #{conv2d_same.1} parent=11 // pred_region
          _
        $region16: #{conv2d_same.1} parent=11 // pred_fallthru
          _
        // Predicated region
        $region17: #{conv2d_same.1} parent=11 // pred_check
          %p127 = pneg %p83
        $region18: #{conv2d_same.1} parent=11 // pred_check_branch
          %129 = sbr.rel (%p127) target = $region20
        $region19: #{conv2d_same.1} parent=11 // pred_region
          _
        $region20: #{conv2d_same.1} parent=11 // pred_fallthru
          _
      $region12: #{conv2d_same.1} parent=5 // pred_fallthru
        _
      %p130 = scmp.lt.s32.totalorder %s15, 2
      // Predicated region
      $region21: #{conv2d_same.1} parent=5 // pred_check
        %p131 = pneg %p130
      $region22: #{conv2d_same.1} parent=5 // pred_check_branch
        %133 = sbr.rel (%p131) target = $region24
      $region23: #{conv2d_same.1} parent=5 // pred_region
        // Predicated region
        $region25: #{conv2d_same.1} parent=23 // pred_check
          %p134 = pneg %p35
        $region26: #{conv2d_same.1} parent=23 // pred_check_branch
          %136 = sbr.rel (%p134) target = $region28
        $region27: #{conv2d_same.1} parent=23 // pred_region
          %s137 = sand.u32 %s25, 1
          %s138 = scalar_lea.sflag [#allocation5], %s137
          %s139 = sand.u32 %s25, 1
          %s140 = smul.addr %s139, 64
          %s141 = scalar_lea.vmem [#allocation4], %s140
          %s143 = ssub.s32 1024, 1024
          %144 = vsyncadd %s138, %s143
          %s145 = smul.addr %s15, 8
          %s146 = smul.addr %s145, 128
          %s147 = scalar_lea.hbm %s0, %s146
          %s148 = sshll.u32 %s141, 4
          %s149 = int_to_ptr.vmem [resolvable:$true] %s148
          %154 = dma.hbm_to_vmem [thread:$0]  %s147, 1024, %s149, %s138, 128, 128, 8
        $region28: #{conv2d_same.1} parent=23 // pred_fallthru
          _
      $region24: #{conv2d_same.1} parent=5 // pred_fallthru
        _
      %p155 = scmp.le.s32.totalorder 1, %s15
      %p156 = scmp.lt.s32.totalorder %s15, 3
      %p157 = pnand %p155, %p156
      %p158 = pneg %p157
      // Predicated region
      $region29: #{conv2d_same.1} parent=5 // pred_check
        _
      $region30: #{conv2d_same.1} parent=5 // pred_check_branch
        %160 = sbr.rel (%p157) target = $region32
      $region31: #{conv2d_same.1} parent=5 // pred_region
        %s161 = ssub.s32 %s15, 1
        %s162 = sand.u32 %s28, 1
        %s163 = scalar_lea.sflag [#allocation5], %s162
        %s164 = sand.u32 %s28, 1
        %s165 = smul.addr %s164, 64
        %s166 = scalar_lea.vmem [#allocation4], %s165
        // Predicated region
        $region33: #{conv2d_same.1} parent=31 // pred_check
          %p167 = pneg %p41
        $region34: #{conv2d_same.1} parent=31 // pred_check_branch
          %169 = sbr.rel (%p167) target = $region36
        $region35: #{conv2d_same.1} parent=31 // pred_region
          %170 = dma.done %s163, 1024
        $region36: #{conv2d_same.1} parent=31 // pred_fallthru
          _
        %s171 = sand.u32 %s28, 1
        %s172 = scalar_lea.sflag [#allocation5], %s171
        %s173 = sand.u32 %s28, 1
        %s174 = smul.addr %s173, 64
        %s175 = scalar_lea.vmem [#allocation4], %s174
        %p176 = pneg %p41
        %p177 = pneg %p38
        %p178 = pneg %p62
        %p179 = pneg %p59
        %p180 = pneg %p83
        %p181 = pneg %p80
        %p182 = pneg %p109
        %p183 = pneg %p106
        %s184 = sand.u32 %s96, 1
        %s185 = scalar_lea.sflag [#allocation6], %s184
        %s186 = sand.u32 %s96, 1
        %s187 = smul.addr %s186, 128
        %s188 = scalar_lea.vmem [#allocation7], %s187
        %vm190 = vcmask 1041408
        %vm191 = vcmask 1043458
        %vm192 = vmor %vm191, %vm190
        %vm193 = vcmask 570372
        %vm194 = vmor %vm193, %vm192
        %195 = vst.msk [vmem:[#allocation2] sm:$0x3f] %vm194, 0
        %v196 = vld [vmem:[%s166] sm:$0x1]
        %v197 = vld [vmem:[%s166 + $0x10] sm:$0x1]
        %v198 = vld [vmem:[%s166 + $0x20] sm:$0x1]
        %v199 = vld [vmem:[%s166 + $0x30] sm:$0x1]
        %v200 = vpack.c.bf16 %v196, %v196
        %v201 = vpack.c.bf16 %v197, %v197
        %v202 = vpack.c.bf16 %v198, %v198
        %v203 = vpack.c.bf16 %v199, %v199
        %v209 = vunpack.c.l.s4 1983009808
        %v210 = vunpack.c.0.s8 %v209
        %v211 = vlaneseq
        %v212 = vshrl.u32 %v211, 7
        %v213 = vsub.s32 %v210, %v212
        %v214 = vrot.slane %v200, %v213
        %v216 = vunpack.c.l.s4 1983009808
        %v217 = vunpack.c.0.s8 %v216
        %v218 = vlaneseq
        %v219 = vshrl.u32 %v218, 7
        %v220 = vsub.s32 %v217, %v219
        %v221 = vrot.slane %v201, %v220
        %v223 = vunpack.c.l.s4 1983009808
        %v224 = vunpack.c.0.s8 %v223
        %v225 = vlaneseq
        %v226 = vshrl.u32 %v225, 7
        %v227 = vsub.s32 %v224, %v226
        %v228 = vrot.slane %v202, %v227
        %v230 = vunpack.c.l.s4 1983009808
        %v231 = vunpack.c.0.s8 %v230
        %v232 = vlaneseq
        %v233 = vshrl.u32 %v232, 7
        %v234 = vsub.s32 %v231, %v233
        %v235 = vrot.slane %v203, %v234
        %v237 = vunpack.c.l.s4 1983009808
        %v238 = vunpack.c.0.s8 %v237
        %v239 = vlaneseq
        %v240 = vshrl.u32 %v239, 7
        %v241 = vsub.s32 %v238, %v240
        %v242 = vrot.slane %v214, %v241
        %v244 = vunpack.c.l.s4 1983009808
        %v245 = vunpack.c.0.s8 %v244
        %v246 = vlaneseq
        %v247 = vshrl.u32 %v246, 7
        %v248 = vsub.s32 %v245, %v247
        %v249 = vrot.slane %v221, %v248
        %v251 = vunpack.c.l.s4 1983009808
        %v252 = vunpack.c.0.s8 %v251
        %v253 = vlaneseq
        %v254 = vshrl.u32 %v253, 7
        %v255 = vsub.s32 %v252, %v254
        %v256 = vrot.slane %v228, %v255
        %v258 = vunpack.c.l.s4 1983009808
        %v259 = vunpack.c.0.s8 %v258
        %v260 = vlaneseq
        %v261 = vshrl.u32 %v260, 7
        %v262 = vsub.s32 %v259, %v261
        %v263 = vrot.slane %v235, %v262
        %v264 = vunpack.c.l.b16 %v242
        %v265 = vunpack.c.l.b16 %v249
        %v266 = vunpack.c.l.b16 %v256
        %v267 = vunpack.c.l.b16 %v263
        %v268 = vrot.slane %v265, 7
        %vm269 = vcmask 1041409
        %v270 = vsel %vm269, %v268, %v264
        %v271 = vrot.slane %v266, 6
        %vm272 = vcmask 1042434
        %v273 = vsel %vm272, %v271, %v270
        %v274 = vrot.slane %v267, 5
        %vm275 = vcmask 1043459
        %v276 = vsel %vm275, %v274, %v273
        %v277 = vpack.c.b16 %v276, %v276
        %v279 = vunpack.c.l.s4 1983009808
        %v280 = vunpack.c.0.s8 %v279
        %v281 = vlaneseq
        %v282 = vshrl.u32 %v281, 7
        %v283 = vsub.s32 %v280, %v282
        %v284 = vrot.slane %v277, %v283
        %285 = vrot.lane.b32.xlu0 %v284, 19
        %v286 = vpop.permute.xlu0 %285
        %vm288 = vcmask 279704
        %289 = vst.msk [vmem:[#allocation2] sm:$0x3] %vm288, %v286
        %v290 = vld [vmem:[%s166 + $0x1] sm:$0x1]
        %v291 = vld [vmem:[%s166 + $0x11] sm:$0x1]
        %v292 = vld [vmem:[%s166 + $0x21] sm:$0x1]
        %v293 = vld [vmem:[%s166 + $0x31] sm:$0x1]
        %v294 = vpack.c.bf16 %v290, %v290
        %v295 = vpack.c.bf16 %v291, %v291
        %v296 = vpack.c.bf16 %v292, %v292
        %v297 = vpack.c.bf16 %v293, %v293
        %v303 = vunpack.c.l.s4 1983009808
        %v304 = vunpack.c.0.s8 %v303
        %v305 = vlaneseq
        %v306 = vshrl.u32 %v305, 7
        %v307 = vsub.s32 %v304, %v306
        %v308 = vrot.slane %v294, %v307
        %v310 = vunpack.c.l.s4 1983009808
        %v311 = vunpack.c.0.s8 %v310
        %v312 = vlaneseq
        %v313 = vshrl.u32 %v312, 7
        %v314 = vsub.s32 %v311, %v313
        %v315 = vrot.slane %v295, %v314
        %v317 = vunpack.c.l.s4 1983009808
        %v318 = vunpack.c.0.s8 %v317
        %v319 = vlaneseq
        %v320 = vshrl.u32 %v319, 7
        %v321 = vsub.s32 %v318, %v320
        %v322 = vrot.slane %v296, %v321
        %v324 = vunpack.c.l.s4 1983009808
        %v325 = vunpack.c.0.s8 %v324
        %v326 = vlaneseq
        %v327 = vshrl.u32 %v326, 7
        %v328 = vsub.s32 %v325, %v327
        %v329 = vrot.slane %v297, %v328
        %v331 = vunpack.c.l.s4 1983009808
        %v332 = vunpack.c.0.s8 %v331
        %v333 = vlaneseq
        %v334 = vshrl.u32 %v333, 7
        %v335 = vsub.s32 %v332, %v334
        %v336 = vrot.slane %v308, %v335
        %v338 = vunpack.c.l.s4 1983009808
        %v339 = vunpack.c.0.s8 %v338
        %v340 = vlaneseq
        %v341 = vshrl.u32 %v340, 7
        %v342 = vsub.s32 %v339, %v341
        %v343 = vrot.slane %v315, %v342
        %v345 = vunpack.c.l.s4 1983009808
        %v346 = vunpack.c.0.s8 %v345
        %v347 = vlaneseq
        %v348 = vshrl.u32 %v347, 7
        %v349 = vsub.s32 %v346, %v348
        %v350 = vrot.slane %v322, %v349
        %v352 = vunpack.c.l.s4 1983009808
        %v353 = vunpack.c.0.s8 %v352
        %v354 = vlaneseq
        %v355 = vshrl.u32 %v354, 7
        %v356 = vsub.s32 %v353, %v355
        %v357 = vrot.slane %v329, %v356
        %v358 = vunpack.c.l.b16 %v336
        %v359 = vunpack.c.l.b16 %v343
        %v360 = vunpack.c.l.b16 %v350
        %v361 = vunpack.c.l.b16 %v357
        %v362 = vrot.slane %v359, 7
        %v363 = vsel %vm269, %v362, %v358
        %v364 = vrot.slane %v360, 6
        %v365 = vsel %vm272, %v364, %v363
        %v366 = vrot.slane %v361, 5
        %v367 = vsel %vm275, %v366, %v365
        %v368 = vpack.c.b16 %v367, %v367
        %v370 = vunpack.c.l.s4 1983009808
        %v371 = vunpack.c.0.s8 %v370
        %v372 = vlaneseq
        %v373 = vshrl.u32 %v372, 7
        %v374 = vsub.s32 %v371, %v373
        %v375 = vrot.slane %v368, %v374
        %376 = vrot.lane.b32.xlu0 %v375, 37
        %v377 = vpop.permute.xlu0 %376
        %vm379 = vcmask 427304
        %380 = vst.msk [vmem:[#allocation2] sm:$0x3] %vm379, %v377
        %v381 = vld [vmem:[%s166 + $0x2] sm:$0x1]
        %v382 = vld [vmem:[%s166 + $0x12] sm:$0x1]
        %v383 = vld [vmem:[%s166 + $0x22] sm:$0x1]
        %v384 = vld [vmem:[%s166 + $0x32] sm:$0x1]
        %v385 = vpack.c.bf16 %v381, %v381
        %v386 = vpack.c.bf16 %v382, %v382
        %v387 = vpack.c.bf16 %v383, %v383
        %v388 = vpack.c.bf16 %v384, %v384
        %v394 = vunpack.c.l.s4 1983009808
        %v395 = vunpack.c.0.s8 %v394
        %v396 = vlaneseq
        %v397 = vshrl.u32 %v396, 7
        %v398 = vsub.s32 %v395, %v397
        %v399 = vrot.slane %v385, %v398
        %v401 = vunpack.c.l.s4 1983009808
        %v402 = vunpack.c.0.s8 %v401
        %v403 = vlaneseq
        %v404 = vshrl.u32 %v403, 7
        %v405 = vsub.s32 %v402, %v404
        %v406 = vrot.slane %v386, %v405
        %v408 = vunpack.c.l.s4 1983009808
        %v409 = vunpack.c.0.s8 %v408
        %v410 = vlaneseq
        %v411 = vshrl.u32 %v410, 7
        %v412 = vsub.s32 %v409, %v411
        %v413 = vrot.slane %v387, %v412
        %v415 = vunpack.c.l.s4 1983009808
        %v416 = vunpack.c.0.s8 %v415
        %v417 = vlaneseq
        %v418 = vshrl.u32 %v417, 7
        %v419 = vsub.s32 %v416, %v418
        %v420 = vrot.slane %v388, %v419
        %v422 = vunpack.c.l.s4 1983009808
        %v423 = vunpack.c.0.s8 %v422
        %v424 = vlaneseq
        %v425 = vshrl.u32 %v424, 7
        %v426 = vsub.s32 %v423, %v425
        %v427 = vrot.slane %v399, %v426
        %v429 = vunpack.c.l.s4 1983009808
        %v430 = vunpack.c.0.s8 %v429
        %v431 = vlaneseq
        %v432 = vshrl.u32 %v431, 7
        %v433 = vsub.s32 %v430, %v432
        %v434 = vrot.slane %v406, %v433
        %v436 = vunpack.c.l.s4 1983009808
        %v437 = vunpack.c.0.s8 %v436
        %v438 = vlaneseq
        %v439 = vshrl.u32 %v438, 7
        %v440 = vsub.s32 %v437, %v439
        %v441 = vrot.slane %v413, %v440
        %v443 = vunpack.c.l.s4 1983009808
        %v444 = vunpack.c.0.s8 %v443
        %v445 = vlaneseq
        %v446 = vshrl.u32 %v445, 7
        %v447 = vsub.s32 %v444, %v446
        %v448 = vrot.slane %v420, %v447
        %v449 = vunpack.c.l.b16 %v427
        %v450 = vunpack.c.l.b16 %v434
        %v451 = vunpack.c.l.b16 %v441
        %v452 = vunpack.c.l.b16 %v448
        %v453 = vrot.slane %v450, 7
        %v454 = vsel %vm269, %v453, %v449
        %v455 = vrot.slane %v451, 6
        %v456 = vsel %vm272, %v455, %v454
        %v457 = vrot.slane %v452, 5
        %v458 = vsel %vm275, %v457, %v456
        %v459 = vpack.c.b16 %v458, %v458
        %v461 = vunpack.c.l.s4 1983009808
        %v462 = vunpack.c.0.s8 %v461
        %v463 = vlaneseq
        %v464 = vshrl.u32 %v463, 7
        %v465 = vsub.s32 %v462, %v464
        %v466 = vrot.slane %v459, %v465
        %467 = vrot.lane.b32.xlu0 %v466, 55
        %v468 = vpop.permute.xlu0 %467
        %vm470 = vcmask 574904
        %471 = vst.msk [vmem:[#allocation2] sm:$0x3] %vm470, %v468
        %v472 = vld [vmem:[%s166 + $0x3] sm:$0x1]
        %v473 = vld [vmem:[%s166 + $0x13] sm:$0x1]
        %v474 = vld [vmem:[%s166 + $0x23] sm:$0x1]
        %v475 = vld [vmem:[%s166 + $0x33] sm:$0x1]
        %v476 = vpack.c.bf16 %v472, %v472
        %v477 = vpack.c.bf16 %v473, %v473
        %v478 = vpack.c.bf16 %v474, %v474
        %v479 = vpack.c.bf16 %v475, %v475
        %v485 = vunpack.c.l.s4 1983009808
        %v486 = vunpack.c.0.s8 %v485
        %v487 = vlaneseq
        %v488 = vshrl.u32 %v487, 7
        %v489 = vsub.s32 %v486, %v488
        %v490 = vrot.slane %v476, %v489
        %v492 = vunpack.c.l.s4 1983009808
        %v493 = vunpack.c.0.s8 %v492
        %v494 = vlaneseq
        %v495 = vshrl.u32 %v494, 7
        %v496 = vsub.s32 %v493, %v495
        %v497 = vrot.slane %v477, %v496
        %v499 = vunpack.c.l.s4 1983009808
        %v500 = vunpack.c.0.s8 %v499
        %v501 = vlaneseq
        %v502 = vshrl.u32 %v501, 7
        %v503 = vsub.s32 %v500, %v502
        %v504 = vrot.slane %v478, %v503
        %v506 = vunpack.c.l.s4 1983009808
        %v507 = vunpack.c.0.s8 %v506
        %v508 = vlaneseq
        %v509 = vshrl.u32 %v508, 7
        %v510 = vsub.s32 %v507, %v509
        %v511 = vrot.slane %v479, %v510
        %v513 = vunpack.c.l.s4 1983009808
        %v514 = vunpack.c.0.s8 %v513
        %v515 = vlaneseq
        %v516 = vshrl.u32 %v515, 7
        %v517 = vsub.s32 %v514, %v516
        %v518 = vrot.slane %v490, %v517
        %v520 = vunpack.c.l.s4 1983009808
        %v521 = vunpack.c.0.s8 %v520
        %v522 = vlaneseq
        %v523 = vshrl.u32 %v522, 7
        %v524 = vsub.s32 %v521, %v523
        %v525 = vrot.slane %v497, %v524
        %v527 = vunpack.c.l.s4 1983009808
        %v528 = vunpack.c.0.s8 %v527
        %v529 = vlaneseq
        %v530 = vshrl.u32 %v529, 7
        %v531 = vsub.s32 %v528, %v530
        %v532 = vrot.slane %v504, %v531
        %v534 = vunpack.c.l.s4 1983009808
        %v535 = vunpack.c.0.s8 %v534
        %v536 = vlaneseq
        %v537 = vshrl.u32 %v536, 7
        %v538 = vsub.s32 %v535, %v537
        %v539 = vrot.slane %v511, %v538
        %v540 = vunpack.c.l.b16 %v518
        %v541 = vunpack.c.l.b16 %v525
        %v542 = vunpack.c.l.b16 %v532
        %v543 = vunpack.c.l.b16 %v539
        %v544 = vrot.slane %v541, 7
        %v545 = vsel %vm269, %v544, %v540
        %v546 = vrot.slane %v542, 6
        %v547 = vsel %vm272, %v546, %v545
        %v548 = vrot.slane %v543, 5
        %v549 = vsel %vm275, %v548, %v547
        %v550 = vpack.c.b16 %v549, %v549
        %v552 = vunpack.c.l.s4 1983009808
        %v553 = vunpack.c.0.s8 %v552
        %v554 = vlaneseq
        %v555 = vshrl.u32 %v554, 7
        %v556 = vsub.s32 %v553, %v555
        %v557 = vrot.slane %v550, %v556
        %558 = vrot.lane.b32.xlu0 %v557, 73
        %v559 = vpop.permute.xlu0 %558
        %vm561 = vcmask 722504
        %562 = vst.msk [vmem:[#allocation2] sm:$0x3] %vm561, %v559
        %v563 = vld [vmem:[%s166 + $0x4] sm:$0x1]
        %v564 = vld [vmem:[%s166 + $0x14] sm:$0x1]
        %v565 = vld [vmem:[%s166 + $0x24] sm:$0x1]
        %v566 = vld [vmem:[%s166 + $0x34] sm:$0x1]
        %v567 = vpack.c.bf16 %v563, %v563
        %v568 = vpack.c.bf16 %v564, %v564
        %v569 = vpack.c.bf16 %v565, %v565
        %v570 = vpack.c.bf16 %v566, %v566
        %v576 = vunpack.c.l.s4 1983009808
        %v577 = vunpack.c.0.s8 %v576
        %v578 = vlaneseq
        %v579 = vshrl.u32 %v578, 7
        %v580 = vsub.s32 %v577, %v579
        %v581 = vrot.slane %v567, %v580
        %v583 = vunpack.c.l.s4 1983009808
        %v584 = vunpack.c.0.s8 %v583
        %v585 = vlaneseq
        %v586 = vshrl.u32 %v585, 7
        %v587 = vsub.s32 %v584, %v586
        %v588 = vrot.slane %v568, %v587
        %v590 = vunpack.c.l.s4 1983009808
        %v591 = vunpack.c.0.s8 %v590
        %v592 = vlaneseq
        %v593 = vshrl.u32 %v592, 7
        %v594 = vsub.s32 %v591, %v593
        %v595 = vrot.slane %v569, %v594
        %v597 = vunpack.c.l.s4 1983009808
        %v598 = vunpack.c.0.s8 %v597
        %v599 = vlaneseq
        %v600 = vshrl.u32 %v599, 7
        %v601 = vsub.s32 %v598, %v600
        %v602 = vrot.slane %v570, %v601
        %v604 = vunpack.c.l.s4 1983009808
        %v605 = vunpack.c.0.s8 %v604
        %v606 = vlaneseq
        %v607 = vshrl.u32 %v606, 7
        %v608 = vsub.s32 %v605, %v607
        %v609 = vrot.slane %v581, %v608
        %v611 = vunpack.c.l.s4 1983009808
        %v612 = vunpack.c.0.s8 %v611
        %v613 = vlaneseq
        %v614 = vshrl.u32 %v613, 7
        %v615 = vsub.s32 %v612, %v614
        %v616 = vrot.slane %v588, %v615
        %v618 = vunpack.c.l.s4 1983009808
        %v619 = vunpack.c.0.s8 %v618
        %v620 = vlaneseq
        %v621 = vshrl.u32 %v620, 7
        %v622 = vsub.s32 %v619, %v621
        %v623 = vrot.slane %v595, %v622
        %v625 = vunpack.c.l.s4 1983009808
        %v626 = vunpack.c.0.s8 %v625
        %v627 = vlaneseq
        %v628 = vshrl.u32 %v627, 7
        %v629 = vsub.s32 %v626, %v628
        %v630 = vrot.slane %v602, %v629
        %v631 = vunpack.c.l.b16 %v609
        %v632 = vunpack.c.l.b16 %v616
        %v633 = vunpack.c.l.b16 %v623
        %v634 = vunpack.c.l.b16 %v630
        %v635 = vrot.slane %v632, 7
        %v636 = vsel %vm269, %v635, %v631
        %v637 = vrot.slane %v633, 6
        %v638 = vsel %vm272, %v637, %v636
        %v639 = vrot.slane %v634, 5
        %v640 = vsel %vm275, %v639, %v638
        %v641 = vpack.c.b16 %v640, %v640
        %v643 = vunpack.c.l.s4 1983009808
        %v644 = vunpack.c.0.s8 %v643
        %v645 = vlaneseq
        %v646 = vshrl.u32 %v645, 7
        %v647 = vsub.s32 %v644, %v646
        %v648 = vrot.slane %v641, %v647
        %649 = vrot.lane.b32.xlu0 %v648, 91
        %v650 = vpop.permute.xlu0 %649
        %vm652 = vcmask 870104
        %653 = vst.msk [vmem:[#allocation2] sm:$0x3] %vm652, %v650
        %v654 = vld [vmem:[%s166 + $0x5] sm:$0x1]
        %v655 = vld [vmem:[%s166 + $0x15] sm:$0x1]
        %v656 = vld [vmem:[%s166 + $0x25] sm:$0x1]
        %v657 = vld [vmem:[%s166 + $0x35] sm:$0x1]
        %v658 = vpack.c.bf16 %v654, %v654
        %v659 = vpack.c.bf16 %v655, %v655
        %v660 = vpack.c.bf16 %v656, %v656
        %v661 = vpack.c.bf16 %v657, %v657
        %v667 = vunpack.c.l.s4 1983009808
        %v668 = vunpack.c.0.s8 %v667
        %v669 = vlaneseq
        %v670 = vshrl.u32 %v669, 7
        %v671 = vsub.s32 %v668, %v670
        %v672 = vrot.slane %v658, %v671
        %v674 = vunpack.c.l.s4 1983009808
        %v675 = vunpack.c.0.s8 %v674
        %v676 = vlaneseq
        %v677 = vshrl.u32 %v676, 7
        %v678 = vsub.s32 %v675, %v677
        %v679 = vrot.slane %v659, %v678
        %v681 = vunpack.c.l.s4 1983009808
        %v682 = vunpack.c.0.s8 %v681
        %v683 = vlaneseq
        %v684 = vshrl.u32 %v683, 7
        %v685 = vsub.s32 %v682, %v684
        %v686 = vrot.slane %v660, %v685
        %v688 = vunpack.c.l.s4 1983009808
        %v689 = vunpack.c.0.s8 %v688
        %v690 = vlaneseq
        %v691 = vshrl.u32 %v690, 7
        %v692 = vsub.s32 %v689, %v691
        %v693 = vrot.slane %v661, %v692
        %v695 = vunpack.c.l.s4 1983009808
        %v696 = vunpack.c.0.s8 %v695
        %v697 = vlaneseq
        %v698 = vshrl.u32 %v697, 7
        %v699 = vsub.s32 %v696, %v698
        %v700 = vrot.slane %v672, %v699
        %v702 = vunpack.c.l.s4 1983009808
        %v703 = vunpack.c.0.s8 %v702
        %v704 = vlaneseq
        %v705 = vshrl.u32 %v704, 7
        %v706 = vsub.s32 %v703, %v705
        %v707 = vrot.slane %v679, %v706
        %v709 = vunpack.c.l.s4 1983009808
        %v710 = vunpack.c.0.s8 %v709
        %v711 = vlaneseq
        %v712 = vshrl.u32 %v711, 7
        %v713 = vsub.s32 %v710, %v712
        %v714 = vrot.slane %v686, %v713
        %v716 = vunpack.c.l.s4 1983009808
        %v717 = vunpack.c.0.s8 %v716
        %v718 = vlaneseq
        %v719 = vshrl.u32 %v718, 7
        %v720 = vsub.s32 %v717, %v719
        %v721 = vrot.slane %v693, %v720
        %v722 = vunpack.c.l.b16 %v700
        %v723 = vunpack.c.l.b16 %v707
        %v724 = vunpack.c.l.b16 %v714
        %v725 = vunpack.c.l.b16 %v721
        %v726 = vrot.slane %v723, 7
        %v727 = vsel %vm269, %v726, %v722
        %v728 = vrot.slane %v724, 6
        %v729 = vsel %vm272, %v728, %v727
        %v730 = vrot.slane %v725, 5
        %v731 = vsel %vm275, %v730, %v729
        %v732 = vpack.c.b16 %v731, %v731
        %v734 = vunpack.c.l.s4 1983009808
        %v735 = vunpack.c.0.s8 %v734
        %v736 = vlaneseq
        %v737 = vshrl.u32 %v736, 7
        %v738 = vsub.s32 %v735, %v737
        %v739 = vrot.slane %v732, %v738
        %740 = vrot.lane.b32.xlu0 %v739, 109
        %v741 = vpop.permute.xlu0 %740
        %vm743 = vcmask 1017704
        %744 = vst.msk [vmem:[#allocation2] sm:$0x3] %vm743, %v741
        %v745 = vld [vmem:[%s166 + $0x6] sm:$0x1]
        %v746 = vld [vmem:[%s166 + $0x16] sm:$0x1]
        %v747 = vld [vmem:[%s166 + $0x26] sm:$0x1]
        %v748 = vld [vmem:[%s166 + $0x36] sm:$0x1]
        %v749 = vpack.c.bf16 %v745, %v745
        %v750 = vpack.c.bf16 %v746, %v746
        %v751 = vpack.c.bf16 %v747, %v747
        %v752 = vpack.c.bf16 %v748, %v748
        %v758 = vunpack.c.l.s4 1983009808
        %v759 = vunpack.c.0.s8 %v758
        %v760 = vlaneseq
        %v761 = vshrl.u32 %v760, 7
        %v762 = vsub.s32 %v759, %v761
        %v763 = vrot.slane %v749, %v762
        %v765 = vunpack.c.l.s4 1983009808
        %v766 = vunpack.c.0.s8 %v765
        %v767 = vlaneseq
        %v768 = vshrl.u32 %v767, 7
        %v769 = vsub.s32 %v766, %v768
        %v770 = vrot.slane %v750, %v769
        %v772 = vunpack.c.l.s4 1983009808
        %v773 = vunpack.c.0.s8 %v772
        %v774 = vlaneseq
        %v775 = vshrl.u32 %v774, 7
        %v776 = vsub.s32 %v773, %v775
        %v777 = vrot.slane %v751, %v776
        %v779 = vunpack.c.l.s4 1983009808
        %v780 = vunpack.c.0.s8 %v779
        %v781 = vlaneseq
        %v782 = vshrl.u32 %v781, 7
        %v783 = vsub.s32 %v780, %v782
        %v784 = vrot.slane %v752, %v783
        %v786 = vunpack.c.l.s4 1983009808
        %v787 = vunpack.c.0.s8 %v786
        %v788 = vlaneseq
        %v789 = vshrl.u32 %v788, 7
        %v790 = vsub.s32 %v787, %v789
        %v791 = vrot.slane %v763, %v790
        %v793 = vunpack.c.l.s4 1983009808
        %v794 = vunpack.c.0.s8 %v793
        %v795 = vlaneseq
        %v796 = vshrl.u32 %v795, 7
        %v797 = vsub.s32 %v794, %v796
        %v798 = vrot.slane %v770, %v797
        %v800 = vunpack.c.l.s4 1983009808
        %v801 = vunpack.c.0.s8 %v800
        %v802 = vlaneseq
        %v803 = vshrl.u32 %v802, 7
        %v804 = vsub.s32 %v801, %v803
        %v805 = vrot.slane %v777, %v804
        %v807 = vunpack.c.l.s4 1983009808
        %v808 = vunpack.c.0.s8 %v807
        %v809 = vlaneseq
        %v810 = vshrl.u32 %v809, 7
        %v811 = vsub.s32 %v808, %v810
        %v812 = vrot.slane %v784, %v811
        %v813 = vunpack.c.l.b16 %v791
        %v814 = vunpack.c.l.b16 %v798
        %v815 = vunpack.c.l.b16 %v805
        %v816 = vunpack.c.l.b16 %v812
        %v817 = vrot.slane %v814, 7
        %v818 = vsel %vm269, %v817, %v813
        %v819 = vrot.slane %v815, 6
        %v820 = vsel %vm272, %v819, %v818
        %v821 = vrot.slane %v816, 5
        %v822 = vsel %vm275, %v821, %v820
        %v823 = vpack.c.b16 %v822, %v822
        %v825 = vunpack.c.l.s4 1983009808
        %v826 = vunpack.c.0.s8 %v825
        %v827 = vlaneseq
        %v828 = vshrl.u32 %v827, 7
        %v829 = vsub.s32 %v826, %v828
        %v830 = vrot.slane %v823, %v829
        %831 = vrot.lane.b32.xlu0 %v830, 127
        %v832 = vpop.permute.xlu0 %831
        %v833 = vrot.slane %v832, 6
        %vm834 = vcmask 1039360
        %v835 = vsel %vm834, %v833, %v832
        %vm837 = vcmask 1042424
        %vm838 = vcmask 117762
        %vm839 = vmor %vm838, %vm837
        %840 = vst.msk [vmem:[#allocation2] sm:$0xf] %vm839, %v835
        %v841 = vld [vmem:[%s166 + $0x7] sm:$0x1]
        %v842 = vld [vmem:[%s166 + $0x17] sm:$0x1]
        %v843 = vld [vmem:[%s166 + $0x27] sm:$0x1]
        %v844 = vld [vmem:[%s166 + $0x37] sm:$0x1]
        %v845 = vpack.c.bf16 %v841, %v841
        %v846 = vpack.c.bf16 %v842, %v842
        %v847 = vpack.c.bf16 %v843, %v843
        %v848 = vpack.c.bf16 %v844, %v844
        %v854 = vunpack.c.l.s4 1983009808
        %v855 = vunpack.c.0.s8 %v854
        %v856 = vlaneseq
        %v857 = vshrl.u32 %v856, 7
        %v858 = vsub.s32 %v855, %v857
        %v859 = vrot.slane %v845, %v858
        %v861 = vunpack.c.l.s4 1983009808
        %v862 = vunpack.c.0.s8 %v861
        %v863 = vlaneseq
        %v864 = vshrl.u32 %v863, 7
        %v865 = vsub.s32 %v862, %v864
        %v866 = vrot.slane %v846, %v865
        %v868 = vunpack.c.l.s4 1983009808
        %v869 = vunpack.c.0.s8 %v868
        %v870 = vlaneseq
        %v871 = vshrl.u32 %v870, 7
        %v872 = vsub.s32 %v869, %v871
        %v873 = vrot.slane %v847, %v872
        %v875 = vunpack.c.l.s4 1983009808
        %v876 = vunpack.c.0.s8 %v875
        %v877 = vlaneseq
        %v878 = vshrl.u32 %v877, 7
        %v879 = vsub.s32 %v876, %v878
        %v880 = vrot.slane %v848, %v879
        %v882 = vunpack.c.l.s4 1983009808
        %v883 = vunpack.c.0.s8 %v882
        %v884 = vlaneseq
        %v885 = vshrl.u32 %v884, 7
        %v886 = vsub.s32 %v883, %v885
        %v887 = vrot.slane %v859, %v886
        %v889 = vunpack.c.l.s4 1983009808
        %v890 = vunpack.c.0.s8 %v889
        %v891 = vlaneseq
        %v892 = vshrl.u32 %v891, 7
        %v893 = vsub.s32 %v890, %v892
        %v894 = vrot.slane %v866, %v893
        %v896 = vunpack.c.l.s4 1983009808
        %v897 = vunpack.c.0.s8 %v896
        %v898 = vlaneseq
        %v899 = vshrl.u32 %v898, 7
        %v900 = vsub.s32 %v897, %v899
        %v901 = vrot.slane %v873, %v900
        %v903 = vunpack.c.l.s4 1983009808
        %v904 = vunpack.c.0.s8 %v903
        %v905 = vlaneseq
        %v906 = vshrl.u32 %v905, 7
        %v907 = vsub.s32 %v904, %v906
        %v908 = vrot.slane %v880, %v907
        %v909 = vunpack.c.l.b16 %v887
        %v910 = vunpack.c.l.b16 %v894
        %v911 = vunpack.c.l.b16 %v901
        %v912 = vunpack.c.l.b16 %v908
        %v913 = vrot.slane %v910, 7
        %v914 = vsel %vm269, %v913, %v909
        %v915 = vrot.slane %v911, 6
        %v916 = vsel %vm272, %v915, %v914
        %v917 = vrot.slane %v912, 5
        %v918 = vsel %vm275, %v917, %v916
        %v919 = vpack.c.b16 %v918, %v918
        %v921 = vunpack.c.l.s4 1983009808
        %v922 = vunpack.c.0.s8 %v921
        %v923 = vlaneseq
        %v924 = vshrl.u32 %v923, 7
        %v925 = vsub.s32 %v922, %v924
        %v926 = vrot.slane %v919, %v925
        %927 = vrot.lane.b32.xlu0 %v926, 17
        %v928 = vpop.permute.xlu0 %927
        %vm930 = vcmask 263304
        %931 = vst.msk [vmem:[#allocation2 + $0x2] sm:$0x3] %vm930, %v928
        %v932 = vld [vmem:[%s166 + $0x8] sm:$0x1]
        %v933 = vld [vmem:[%s166 + $0x18] sm:$0x1]
        %v934 = vld [vmem:[%s166 + $0x28] sm:$0x1]
        %v935 = vld [vmem:[%s166 + $0x38] sm:$0x1]
        %v936 = vpack.c.bf16 %v932, %v932
        %v937 = vpack.c.bf16 %v933, %v933
        %v938 = vpack.c.bf16 %v934, %v934
        %v939 = vpack.c.bf16 %v935, %v935
        %v945 = vunpack.c.l.s4 1983009808
        %v946 = vunpack.c.0.s8 %v945
        %v947 = vlaneseq
        %v948 = vshrl.u32 %v947, 7
        %v949 = vsub.s32 %v946, %v948
        %v950 = vrot.slane %v936, %v949
        %v952 = vunpack.c.l.s4 1983009808
        %v953 = vunpack.c.0.s8 %v952
        %v954 = vlaneseq
        %v955 = vshrl.u32 %v954, 7
        %v956 = vsub.s32 %v953, %v955
        %v957 = vrot.slane %v937, %v956
        %v959 = vunpack.c.l.s4 1983009808
        %v960 = vunpack.c.0.s8 %v959
        %v961 = vlaneseq
        %v962 = vshrl.u32 %v961, 7
        %v963 = vsub.s32 %v960, %v962
        %v964 = vrot.slane %v938, %v963
        %v966 = vunpack.c.l.s4 1983009808
        %v967 = vunpack.c.0.s8 %v966
        %v968 = vlaneseq
        %v969 = vshrl.u32 %v968, 7
        %v970 = vsub.s32 %v967, %v969
        %v971 = vrot.slane %v939, %v970
        %v973 = vunpack.c.l.s4 1983009808
        %v974 = vunpack.c.0.s8 %v973
        %v975 = vlaneseq
        %v976 = vshrl.u32 %v975, 7
        %v977 = vsub.s32 %v974, %v976
        %v978 = vrot.slane %v950, %v977
        %v980 = vunpack.c.l.s4 1983009808
        %v981 = vunpack.c.0.s8 %v980
        %v982 = vlaneseq
        %v983 = vshrl.u32 %v982, 7
        %v984 = vsub.s32 %v981, %v983
        %v985 = vrot.slane %v957, %v984
        %v987 = vunpack.c.l.s4 1983009808
        %v988 = vunpack.c.0.s8 %v987
        %v989 = vlaneseq
        %v990 = vshrl.u32 %v989, 7
        %v991 = vsub.s32 %v988, %v990
        %v992 = vrot.slane %v964, %v991
        %v994 = vunpack.c.l.s4 1983009808
        %v995 = vunpack.c.0.s8 %v994
        %v996 = vlaneseq
        %v997 = vshrl.u32 %v996, 7
        %v998 = vsub.s32 %v995, %v997
        %v999 = vrot.slane %v971, %v998
        %v1000 = vunpack.c.l.b16 %v978
        %v1001 = vunpack.c.l.b16 %v985
        %v1002 = vunpack.c.l.b16 %v992
        %v1003 = vunpack.c.l.b16 %v999
        %v1004 = vrot.slane %v1001, 7
        %v1005 = vsel %vm269, %v1004, %v1000
        %v1006 = vrot.slane %v1002, 6
        %v1007 = vsel %vm272, %v1006, %v1005
        %v1008 = vrot.slane %v1003, 5
        %v1009 = vsel %vm275, %v1008, %v1007
        %v1010 = vpack.c.b16 %v1009, %v1009
        %v1012 = vunpack.c.l.s4 1983009808
        %v1013 = vunpack.c.0.s8 %v1012
        %v1014 = vlaneseq
        %v1015 = vshrl.u32 %v1014, 7
        %v1016 = vsub.s32 %v1013, %v1015
        %v1017 = vrot.slane %v1010, %v1016
        %1018 = vrot.lane.b32.xlu0 %v1017, 35
        %v1019 = vpop.permute.xlu0 %1018
        %vm1021 = vcmask 410904
        %1022 = vst.msk [vmem:[#allocation2 + $0x2] sm:$0x3] %vm1021, %v1019
        %v1023 = vld [vmem:[%s166 + $0x9] sm:$0x1]
        %v1024 = vld [vmem:[%s166 + $0x19] sm:$0x1]
        %v1025 = vld [vmem:[%s166 + $0x29] sm:$0x1]
        %v1026 = vld [vmem:[%s166 + $0x39] sm:$0x1]
        %v1027 = vpack.c.bf16 %v1023, %v1023
        %v1028 = vpack.c.bf16 %v1024, %v1024
        %v1029 = vpack.c.bf16 %v1025, %v1025
        %v1030 = vpack.c.bf16 %v1026, %v1026
        %v1036 = vunpack.c.l.s4 1983009808
        %v1037 = vunpack.c.0.s8 %v1036
        %v1038 = vlaneseq
        %v1039 = vshrl.u32 %v1038, 7
        %v1040 = vsub.s32 %v1037, %v1039
        %v1041 = vrot.slane %v1027, %v1040
        %v1043 = vunpack.c.l.s4 1983009808
        %v1044 = vunpack.c.0.s8 %v1043
        %v1045 = vlaneseq
        %v1046 = vshrl.u32 %v1045, 7
        %v1047 = vsub.s32 %v1044, %v1046
        %v1048 = vrot.slane %v1028, %v1047
        %v1050 = vunpack.c.l.s4 1983009808
        %v1051 = vunpack.c.0.s8 %v1050
        %v1052 = vlaneseq
        %v1053 = vshrl.u32 %v1052, 7
        %v1054 = vsub.s32 %v1051, %v1053
        %v1055 = vrot.slane %v1029, %v1054
        %v1057 = vunpack.c.l.s4 1983009808
        %v1058 = vunpack.c.0.s8 %v1057
        %v1059 = vlaneseq
        %v1060 = vshrl.u32 %v1059, 7
        %v1061 = vsub.s32 %v1058, %v1060
        %v1062 = vrot.slane %v1030, %v1061
        %v1064 = vunpack.c.l.s4 1983009808
        %v1065 = vunpack.c.0.s8 %v1064
        %v1066 = vlaneseq
        %v1067 = vshrl.u32 %v1066, 7
        %v1068 = vsub.s32 %v1065, %v1067
        %v1069 = vrot.slane %v1041, %v1068
        %v1071 = vunpack.c.l.s4 1983009808
        %v1072 = vunpack.c.0.s8 %v1071
        %v1073 = vlaneseq
        %v1074 = vshrl.u32 %v1073, 7
        %v1075 = vsub.s32 %v1072, %v1074
        %v1076 = vrot.slane %v1048, %v1075
        %v1078 = vunpack.c.l.s4 1983009808
        %v1079 = vunpack.c.0.s8 %v1078
        %v1080 = vlaneseq
        %v1081 = vshrl.u32 %v1080, 7
        %v1082 = vsub.s32 %v1079, %v1081
        %v1083 = vrot.slane %v1055, %v1082
        %v1085 = vunpack.c.l.s4 1983009808
        %v1086 = vunpack.c.0.s8 %v1085
        %v1087 = vlaneseq
        %v1088 = vshrl.u32 %v1087, 7
        %v1089 = vsub.s32 %v1086, %v1088
        %v1090 = vrot.slane %v1062, %v1089
        %v1091 = vunpack.c.l.b16 %v1069
        %v1092 = vunpack.c.l.b16 %v1076
        %v1093 = vunpack.c.l.b16 %v1083
        %v1094 = vunpack.c.l.b16 %v1090
        %v1095 = vrot.slane %v1092, 7
        %v1096 = vsel %vm269, %v1095, %v1091
        %v1097 = vrot.slane %v1093, 6
        %v1098 = vsel %vm272, %v1097, %v1096
        %v1099 = vrot.slane %v1094, 5
        %v1100 = vsel %vm275, %v1099, %v1098
        %v1101 = vpack.c.b16 %v1100, %v1100
        %v1103 = vunpack.c.l.s4 1983009808
        %v1104 = vunpack.c.0.s8 %v1103
        %v1105 = vlaneseq
        %v1106 = vshrl.u32 %v1105, 7
        %v1107 = vsub.s32 %v1104, %v1106
        %v1108 = vrot.slane %v1101, %v1107
        %1109 = vrot.lane.b32.xlu0 %v1108, 53
        %v1110 = vpop.permute.xlu0 %1109
        %vm1112 = vcmask 558504
        %1113 = vst.msk [vmem:[#allocation2 + $0x2] sm:$0x3] %vm1112, %v1110
        %v1114 = vld [vmem:[%s166 + $0xa] sm:$0x1]
        %v1115 = vld [vmem:[%s166 + $0x1a] sm:$0x1]
        %v1116 = vld [vmem:[%s166 + $0x2a] sm:$0x1]
        %v1117 = vld [vmem:[%s166 + $0x3a] sm:$0x1]
        %v1118 = vpack.c.bf16 %v1114, %v1114
        %v1119 = vpack.c.bf16 %v1115, %v1115
        %v1120 = vpack.c.bf16 %v1116, %v1116
        %v1121 = vpack.c.bf16 %v1117, %v1117
        %v1127 = vunpack.c.l.s4 1983009808
        %v1128 = vunpack.c.0.s8 %v1127
        %v1129 = vlaneseq
        %v1130 = vshrl.u32 %v1129, 7
        %v1131 = vsub.s32 %v1128, %v1130
        %v1132 = vrot.slane %v1118, %v1131
        %v1134 = vunpack.c.l.s4 1983009808
        %v1135 = vunpack.c.0.s8 %v1134
        %v1136 = vlaneseq
        %v1137 = vshrl.u32 %v1136, 7
        %v1138 = vsub.s32 %v1135, %v1137
        %v1139 = vrot.slane %v1119, %v1138
        %v1141 = vunpack.c.l.s4 1983009808
        %v1142 = vunpack.c.0.s8 %v1141
        %v1143 = vlaneseq
        %v1144 = vshrl.u32 %v1143, 7
        %v1145 = vsub.s32 %v1142, %v1144
        %v1146 = vrot.slane %v1120, %v1145
        %v1148 = vunpack.c.l.s4 1983009808
        %v1149 = vunpack.c.0.s8 %v1148
        %v1150 = vlaneseq
        %v1151 = vshrl.u32 %v1150, 7
        %v1152 = vsub.s32 %v1149, %v1151
        %v1153 = vrot.slane %v1121, %v1152
        %v1155 = vunpack.c.l.s4 1983009808
        %v1156 = vunpack.c.0.s8 %v1155
        %v1157 = vlaneseq
        %v1158 = vshrl.u32 %v1157, 7
        %v1159 = vsub.s32 %v1156, %v1158
        %v1160 = vrot.slane %v1132, %v1159
        %v1162 = vunpack.c.l.s4 1983009808
        %v1163 = vunpack.c.0.s8 %v1162
        %v1164 = vlaneseq
        %v1165 = vshrl.u32 %v1164, 7
        %v1166 = vsub.s32 %v1163, %v1165
        %v1167 = vrot.slane %v1139, %v1166
        %v1169 = vunpack.c.l.s4 1983009808
        %v1170 = vunpack.c.0.s8 %v1169
        %v1171 = vlaneseq
        %v1172 = vshrl.u32 %v1171, 7
        %v1173 = vsub.s32 %v1170, %v1172
        %v1174 = vrot.slane %v1146, %v1173
        %v1176 = vunpack.c.l.s4 1983009808
        %v1177 = vunpack.c.0.s8 %v1176
        %v1178 = vlaneseq
        %v1179 = vshrl.u32 %v1178, 7
        %v1180 = vsub.s32 %v1177, %v1179
        %v1181 = vrot.slane %v1153, %v1180
        %v1182 = vunpack.c.l.b16 %v1160
        %v1183 = vunpack.c.l.b16 %v1167
        %v1184 = vunpack.c.l.b16 %v1174
        %v1185 = vunpack.c.l.b16 %v1181
        %v1186 = vrot.slane %v1183, 7
        %v1187 = vsel %vm269, %v1186, %v1182
        %v1188 = vrot.slane %v1184, 6
        %v1189 = vsel %vm272, %v1188, %v1187
        %v1190 = vrot.slane %v1185, 5
        %v1191 = vsel %vm275, %v1190, %v1189
        %v1192 = vpack.c.b16 %v1191, %v1191
        %v1194 = vunpack.c.l.s4 1983009808
        %v1195 = vunpack.c.0.s8 %v1194
        %v1196 = vlaneseq
        %v1197 = vshrl.u32 %v1196, 7
        %v1198 = vsub.s32 %v1195, %v1197
        %v1199 = vrot.slane %v1192, %v1198
        %1200 = vrot.lane.b32.xlu0 %v1199, 71
        %v1201 = vpop.permute.xlu0 %1200
        %vm1203 = vcmask 706104
        %1204 = vst.msk [vmem:[#allocation2 + $0x2] sm:$0x3] %vm1203, %v1201
        %v1205 = vld [vmem:[%s166 + $0xb] sm:$0x1]
        %v1206 = vld [vmem:[%s166 + $0x1b] sm:$0x1]
        %v1207 = vld [vmem:[%s166 + $0x2b] sm:$0x1]
        %v1208 = vld [vmem:[%s166 + $0x3b] sm:$0x1]
        %v1209 = vpack.c.bf16 %v1205, %v1205
        %v1210 = vpack.c.bf16 %v1206, %v1206
        %v1211 = vpack.c.bf16 %v1207, %v1207
        %v1212 = vpack.c.bf16 %v1208, %v1208
        %v1218 = vunpack.c.l.s4 1983009808
        %v1219 = vunpack.c.0.s8 %v1218
        %v1220 = vlaneseq
        %v1221 = vshrl.u32 %v1220, 7
        %v1222 = vsub.s32 %v1219, %v1221
        %v1223 = vrot.slane %v1209, %v1222
        %v1225 = vunpack.c.l.s4 1983009808
        %v1226 = vunpack.c.0.s8 %v1225
        %v1227 = vlaneseq
        %v1228 = vshrl.u32 %v1227, 7
        %v1229 = vsub.s32 %v1226, %v1228
        %v1230 = vrot.slane %v1210, %v1229
        %v1232 = vunpack.c.l.s4 1983009808
        %v1233 = vunpack.c.0.s8 %v1232
        %v1234 = vlaneseq
        %v1235 = vshrl.u32 %v1234, 7
        %v1236 = vsub.s32 %v1233, %v1235
        %v1237 = vrot.slane %v1211, %v1236
        %v1239 = vunpack.c.l.s4 1983009808
        %v1240 = vunpack.c.0.s8 %v1239
        %v1241 = vlaneseq
        %v1242 = vshrl.u32 %v1241, 7
        %v1243 = vsub.s32 %v1240, %v1242
        %v1244 = vrot.slane %v1212, %v1243
        %v1246 = vunpack.c.l.s4 1983009808
        %v1247 = vunpack.c.0.s8 %v1246
        %v1248 = vlaneseq
        %v1249 = vshrl.u32 %v1248, 7
        %v1250 = vsub.s32 %v1247, %v1249
        %v1251 = vrot.slane %v1223, %v1250
        %v1253 = vunpack.c.l.s4 1983009808
        %v1254 = vunpack.c.0.s8 %v1253
        %v1255 = vlaneseq
        %v1256 = vshrl.u32 %v1255, 7
        %v1257 = vsub.s32 %v1254, %v1256
        %v1258 = vrot.slane %v1230, %v1257
        %v1260 = vunpack.c.l.s4 1983009808
        %v1261 = vunpack.c.0.s8 %v1260
        %v1262 = vlaneseq
        %v1263 = vshrl.u32 %v1262, 7
        %v1264 = vsub.s32 %v1261, %v1263
        %v1265 = vrot.slane %v1237, %v1264
        %v1267 = vunpack.c.l.s4 1983009808
        %v1268 = vunpack.c.0.s8 %v1267
        %v1269 = vlaneseq
        %v1270 = vshrl.u32 %v1269, 7
        %v1271 = vsub.s32 %v1268, %v1270
        %v1272 = vrot.slane %v1244, %v1271
        %v1273 = vunpack.c.l.b16 %v1251
        %v1274 = vunpack.c.l.b16 %v1258
        %v1275 = vunpack.c.l.b16 %v1265
        %v1276 = vunpack.c.l.b16 %v1272
        %v1277 = vrot.slane %v1274, 7
        %v1278 = vsel %vm269, %v1277, %v1273
        %v1279 = vrot.slane %v1275, 6
        %v1280 = vsel %vm272, %v1279, %v1278
        %v1281 = vrot.slane %v1276, 5
        %v1282 = vsel %vm275, %v1281, %v1280
        %v1283 = vpack.c.b16 %v1282, %v1282
        %v1285 = vunpack.c.l.s4 1983009808
        %v1286 = vunpack.c.0.s8 %v1285
        %v1287 = vlaneseq
        %v1288 = vshrl.u32 %v1287, 7
        %v1289 = vsub.s32 %v1286, %v1288
        %v1290 = vrot.slane %v1283, %v1289
        %1291 = vrot.lane.b32.xlu0 %v1290, 89
        %v1292 = vpop.permute.xlu0 %1291
        %vm1294 = vcmask 853704
        %1295 = vst.msk [vmem:[#allocation2 + $0x2] sm:$0x3] %vm1294, %v1292
        %v1296 = vld [vmem:[%s166 + $0xc] sm:$0x1]
        %v1297 = vld [vmem:[%s166 + $0x1c] sm:$0x1]
        %v1298 = vld [vmem:[%s166 + $0x2c] sm:$0x1]
        %v1299 = vld [vmem:[%s166 + $0x3c] sm:$0x1]
        %v1300 = vpack.c.bf16 %v1296, %v1296
        %v1301 = vpack.c.bf16 %v1297, %v1297
        %v1302 = vpack.c.bf16 %v1298, %v1298
        %v1303 = vpack.c.bf16 %v1299, %v1299
        %v1309 = vunpack.c.l.s4 1983009808
        %v1310 = vunpack.c.0.s8 %v1309
        %v1311 = vlaneseq
        %v1312 = vshrl.u32 %v1311, 7
        %v1313 = vsub.s32 %v1310, %v1312
        %v1314 = vrot.slane %v1300, %v1313
        %v1316 = vunpack.c.l.s4 1983009808
        %v1317 = vunpack.c.0.s8 %v1316
        %v1318 = vlaneseq
        %v1319 = vshrl.u32 %v1318, 7
        %v1320 = vsub.s32 %v1317, %v1319
        %v1321 = vrot.slane %v1301, %v1320
        %v1323 = vunpack.c.l.s4 1983009808
        %v1324 = vunpack.c.0.s8 %v1323
        %v1325 = vlaneseq
        %v1326 = vshrl.u32 %v1325, 7
        %v1327 = vsub.s32 %v1324, %v1326
        %v1328 = vrot.slane %v1302, %v1327
        %v1330 = vunpack.c.l.s4 1983009808
        %v1331 = vunpack.c.0.s8 %v1330
        %v1332 = vlaneseq
        %v1333 = vshrl.u32 %v1332, 7
        %v1334 = vsub.s32 %v1331, %v1333
        %v1335 = vrot.slane %v1303, %v1334
        %v1337 = vunpack.c.l.s4 1983009808
        %v1338 = vunpack.c.0.s8 %v1337
        %v1339 = vlaneseq
        %v1340 = vshrl.u32 %v1339, 7
        %v1341 = vsub.s32 %v1338, %v1340
        %v1342 = vrot.slane %v1314, %v1341
        %v1344 = vunpack.c.l.s4 1983009808
        %v1345 = vunpack.c.0.s8 %v1344
        %v1346 = vlaneseq
        %v1347 = vshrl.u32 %v1346, 7
        %v1348 = vsub.s32 %v1345, %v1347
        %v1349 = vrot.slane %v1321, %v1348
        %v1351 = vunpack.c.l.s4 1983009808
        %v1352 = vunpack.c.0.s8 %v1351
        %v1353 = vlaneseq
        %v1354 = vshrl.u32 %v1353, 7
        %v1355 = vsub.s32 %v1352, %v1354
        %v1356 = vrot.slane %v1328, %v1355
        %v1358 = vunpack.c.l.s4 1983009808
        %v1359 = vunpack.c.0.s8 %v1358
        %v1360 = vlaneseq
        %v1361 = vshrl.u32 %v1360, 7
        %v1362 = vsub.s32 %v1359, %v1361
        %v1363 = vrot.slane %v1335, %v1362
        %v1364 = vunpack.c.l.b16 %v1342
        %v1365 = vunpack.c.l.b16 %v1349
        %v1366 = vunpack.c.l.b16 %v1356
        %v1367 = vunpack.c.l.b16 %v1363
        %v1368 = vrot.slane %v1365, 7
        %v1369 = vsel %vm269, %v1368, %v1364
        %v1370 = vrot.slane %v1366, 6
        %v1371 = vsel %vm272, %v1370, %v1369
        %v1372 = vrot.slane %v1367, 5
        %v1373 = vsel %vm275, %v1372, %v1371
        %v1374 = vpack.c.b16 %v1373, %v1373
        %v1376 = vunpack.c.l.s4 1983009808
        %v1377 = vunpack.c.0.s8 %v1376
        %v1378 = vlaneseq
        %v1379 = vshrl.u32 %v1378, 7
        %v1380 = vsub.s32 %v1377, %v1379
        %v1381 = vrot.slane %v1374, %v1380
        %1382 = vrot.lane.b32.xlu0 %v1381, 107
        %v1383 = vpop.permute.xlu0 %1382
        %vm1385 = vcmask 1001304
        %1386 = vst.msk [vmem:[#allocation2 + $0x2] sm:$0x3] %vm1385, %v1383
        %v1387 = vld [vmem:[%s166 + $0xd] sm:$0x1]
        %v1388 = vld [vmem:[%s166 + $0x1d] sm:$0x1]
        %v1389 = vld [vmem:[%s166 + $0x2d] sm:$0x1]
        %v1390 = vld [vmem:[%s166 + $0x3d] sm:$0x1]
        %v1391 = vpack.c.bf16 %v1387, %v1387
        %v1392 = vpack.c.bf16 %v1388, %v1388
        %v1393 = vpack.c.bf16 %v1389, %v1389
        %v1394 = vpack.c.bf16 %v1390, %v1390
        %v1400 = vunpack.c.l.s4 1983009808
        %v1401 = vunpack.c.0.s8 %v1400
        %v1402 = vlaneseq
        %v1403 = vshrl.u32 %v1402, 7
        %v1404 = vsub.s32 %v1401, %v1403
        %v1405 = vrot.slane %v1391, %v1404
        %v1407 = vunpack.c.l.s4 1983009808
        %v1408 = vunpack.c.0.s8 %v1407
        %v1409 = vlaneseq
        %v1410 = vshrl.u32 %v1409, 7
        %v1411 = vsub.s32 %v1408, %v1410
        %v1412 = vrot.slane %v1392, %v1411
        %v1414 = vunpack.c.l.s4 1983009808
        %v1415 = vunpack.c.0.s8 %v1414
        %v1416 = vlaneseq
        %v1417 = vshrl.u32 %v1416, 7
        %v1418 = vsub.s32 %v1415, %v1417
        %v1419 = vrot.slane %v1393, %v1418
        %v1421 = vunpack.c.l.s4 1983009808
        %v1422 = vunpack.c.0.s8 %v1421
        %v1423 = vlaneseq
        %v1424 = vshrl.u32 %v1423, 7
        %v1425 = vsub.s32 %v1422, %v1424
        %v1426 = vrot.slane %v1394, %v1425
        %v1428 = vunpack.c.l.s4 1983009808
        %v1429 = vunpack.c.0.s8 %v1428
        %v1430 = vlaneseq
        %v1431 = vshrl.u32 %v1430, 7
        %v1432 = vsub.s32 %v1429, %v1431
        %v1433 = vrot.slane %v1405, %v1432
        %v1435 = vunpack.c.l.s4 1983009808
        %v1436 = vunpack.c.0.s8 %v1435
        %v1437 = vlaneseq
        %v1438 = vshrl.u32 %v1437, 7
        %v1439 = vsub.s32 %v1436, %v1438
        %v1440 = vrot.slane %v1412, %v1439
        %v1442 = vunpack.c.l.s4 1983009808
        %v1443 = vunpack.c.0.s8 %v1442
        %v1444 = vlaneseq
        %v1445 = vshrl.u32 %v1444, 7
        %v1446 = vsub.s32 %v1443, %v1445
        %v1447 = vrot.slane %v1419, %v1446
        %v1449 = vunpack.c.l.s4 1983009808
        %v1450 = vunpack.c.0.s8 %v1449
        %v1451 = vlaneseq
        %v1452 = vshrl.u32 %v1451, 7
        %v1453 = vsub.s32 %v1450, %v1452
        %v1454 = vrot.slane %v1426, %v1453
        %v1455 = vunpack.c.l.b16 %v1433
        %v1456 = vunpack.c.l.b16 %v1440
        %v1457 = vunpack.c.l.b16 %v1447
        %v1458 = vunpack.c.l.b16 %v1454
        %v1459 = vrot.slane %v1456, 7
        %v1460 = vsel %vm269, %v1459, %v1455
        %v1461 = vrot.slane %v1457, 6
        %v1462 = vsel %vm272, %v1461, %v1460
        %v1463 = vrot.slane %v1458, 5
        %v1464 = vsel %vm275, %v1463, %v1462
        %v1465 = vpack.c.b16 %v1464, %v1464
        %v1467 = vunpack.c.l.s4 1983009808
        %v1468 = vunpack.c.0.s8 %v1467
        %v1469 = vlaneseq
        %v1470 = vshrl.u32 %v1469, 7
        %v1471 = vsub.s32 %v1468, %v1470
        %v1472 = vrot.slane %v1465, %v1471
        %1473 = vrot.lane.b32.xlu0 %v1472, 125
        %v1474 = vpop.permute.xlu0 %1473
        %v1475 = vrot.slane %v1474, 6
        %vm1476 = vcmask 1022976
        %v1477 = vsel %vm1476, %v1475, %v1474
        %vm1479 = vcmask 1042408
        %vm1480 = vcmask 101378
        %vm1481 = vmor %vm1480, %vm1479
        %1482 = vst.msk [vmem:[#allocation2 + $0x2] sm:$0xf] %vm1481, %v1477
        %v1483 = vld [vmem:[%s166 + $0xe] sm:$0x1]
        %v1484 = vld [vmem:[%s166 + $0x1e] sm:$0x1]
        %v1485 = vld [vmem:[%s166 + $0x2e] sm:$0x1]
        %v1486 = vld [vmem:[%s166 + $0x3e] sm:$0x1]
        %v1487 = vpack.c.bf16 %v1483, %v1483
        %v1488 = vpack.c.bf16 %v1484, %v1484
        %v1489 = vpack.c.bf16 %v1485, %v1485
        %v1490 = vpack.c.bf16 %v1486, %v1486
        %v1496 = vunpack.c.l.s4 1983009808
        %v1497 = vunpack.c.0.s8 %v1496
        %v1498 = vlaneseq
        %v1499 = vshrl.u32 %v1498, 7
        %v1500 = vsub.s32 %v1497, %v1499
        %v1501 = vrot.slane %v1487, %v1500
        %v1503 = vunpack.c.l.s4 1983009808
        %v1504 = vunpack.c.0.s8 %v1503
        %v1505 = vlaneseq
        %v1506 = vshrl.u32 %v1505, 7
        %v1507 = vsub.s32 %v1504, %v1506
        %v1508 = vrot.slane %v1488, %v1507
        %v1510 = vunpack.c.l.s4 1983009808
        %v1511 = vunpack.c.0.s8 %v1510
        %v1512 = vlaneseq
        %v1513 = vshrl.u32 %v1512, 7
        %v1514 = vsub.s32 %v1511, %v1513
        %v1515 = vrot.slane %v1489, %v1514
        %v1517 = vunpack.c.l.s4 1983009808
        %v1518 = vunpack.c.0.s8 %v1517
        %v1519 = vlaneseq
        %v1520 = vshrl.u32 %v1519, 7
        %v1521 = vsub.s32 %v1518, %v1520
        %v1522 = vrot.slane %v1490, %v1521
        %v1524 = vunpack.c.l.s4 1983009808
        %v1525 = vunpack.c.0.s8 %v1524
        %v1526 = vlaneseq
        %v1527 = vshrl.u32 %v1526, 7
        %v1528 = vsub.s32 %v1525, %v1527
        %v1529 = vrot.slane %v1501, %v1528
        %v1531 = vunpack.c.l.s4 1983009808
        %v1532 = vunpack.c.0.s8 %v1531
        %v1533 = vlaneseq
        %v1534 = vshrl.u32 %v1533, 7
        %v1535 = vsub.s32 %v1532, %v1534
        %v1536 = vrot.slane %v1508, %v1535
        %v1538 = vunpack.c.l.s4 1983009808
        %v1539 = vunpack.c.0.s8 %v1538
        %v1540 = vlaneseq
        %v1541 = vshrl.u32 %v1540, 7
        %v1542 = vsub.s32 %v1539, %v1541
        %v1543 = vrot.slane %v1515, %v1542
        %v1545 = vunpack.c.l.s4 1983009808
        %v1546 = vunpack.c.0.s8 %v1545
        %v1547 = vlaneseq
        %v1548 = vshrl.u32 %v1547, 7
        %v1549 = vsub.s32 %v1546, %v1548
        %v1550 = vrot.slane %v1522, %v1549
        %v1551 = vunpack.c.l.b16 %v1529
        %v1552 = vunpack.c.l.b16 %v1536
        %v1553 = vunpack.c.l.b16 %v1543
        %v1554 = vunpack.c.l.b16 %v1550
        %v1555 = vrot.slane %v1552, 7
        %v1556 = vsel %vm269, %v1555, %v1551
        %v1557 = vrot.slane %v1553, 6
        %v1558 = vsel %vm272, %v1557, %v1556
        %v1559 = vrot.slane %v1554, 5
        %v1560 = vsel %vm275, %v1559, %v1558
        %v1561 = vpack.c.b16 %v1560, %v1560
        %v1563 = vunpack.c.l.s4 1983009808
        %v1564 = vunpack.c.0.s8 %v1563
        %v1565 = vlaneseq
        %v1566 = vshrl.u32 %v1565, 7
        %v1567 = vsub.s32 %v1564, %v1566
        %v1568 = vrot.slane %v1561, %v1567
        %1569 = vrot.lane.b32.xlu0 %v1568, 15
        %v1570 = vpop.permute.xlu0 %1569
        %vm1572 = vcmask 246904
        %1573 = vst.msk [vmem:[#allocation2 + $0x4] sm:$0x3] %vm1572, %v1570
        %v1574 = vld [vmem:[%s166 + $0xf] sm:$0x1]
        %v1575 = vld [vmem:[%s166 + $0x1f] sm:$0x1]
        %v1576 = vld [vmem:[%s166 + $0x2f] sm:$0x1]
        %v1577 = vld [vmem:[%s166 + $0x3f] sm:$0x1]
        %v1578 = vpack.c.bf16 %v1574, %v1574
        %v1579 = vpack.c.bf16 %v1575, %v1575
        %v1580 = vpack.c.bf16 %v1576, %v1576
        %v1581 = vpack.c.bf16 %v1577, %v1577
        %v1587 = vunpack.c.l.s4 1983009808
        %v1588 = vunpack.c.0.s8 %v1587
        %v1589 = vlaneseq
        %v1590 = vshrl.u32 %v1589, 7
        %v1591 = vsub.s32 %v1588, %v1590
        %v1592 = vrot.slane %v1578, %v1591
        %v1594 = vunpack.c.l.s4 1983009808
        %v1595 = vunpack.c.0.s8 %v1594
        %v1596 = vlaneseq
        %v1597 = vshrl.u32 %v1596, 7
        %v1598 = vsub.s32 %v1595, %v1597
        %v1599 = vrot.slane %v1579, %v1598
        %v1601 = vunpack.c.l.s4 1983009808
        %v1602 = vunpack.c.0.s8 %v1601
        %v1603 = vlaneseq
        %v1604 = vshrl.u32 %v1603, 7
        %v1605 = vsub.s32 %v1602, %v1604
        %v1606 = vrot.slane %v1580, %v1605
        %v1608 = vunpack.c.l.s4 1983009808
        %v1609 = vunpack.c.0.s8 %v1608
        %v1610 = vlaneseq
        %v1611 = vshrl.u32 %v1610, 7
        %v1612 = vsub.s32 %v1609, %v1611
        %v1613 = vrot.slane %v1581, %v1612
        %v1615 = vunpack.c.l.s4 1983009808
        %v1616 = vunpack.c.0.s8 %v1615
        %v1617 = vlaneseq
        %v1618 = vshrl.u32 %v1617, 7
        %v1619 = vsub.s32 %v1616, %v1618
        %v1620 = vrot.slane %v1592, %v1619
        %v1622 = vunpack.c.l.s4 1983009808
        %v1623 = vunpack.c.0.s8 %v1622
        %v1624 = vlaneseq
        %v1625 = vshrl.u32 %v1624, 7
        %v1626 = vsub.s32 %v1623, %v1625
        %v1627 = vrot.slane %v1599, %v1626
        %v1629 = vunpack.c.l.s4 1983009808
        %v1630 = vunpack.c.0.s8 %v1629
        %v1631 = vlaneseq
        %v1632 = vshrl.u32 %v1631, 7
        %v1633 = vsub.s32 %v1630, %v1632
        %v1634 = vrot.slane %v1606, %v1633
        %v1636 = vunpack.c.l.s4 1983009808
        %v1637 = vunpack.c.0.s8 %v1636
        %v1638 = vlaneseq
        %v1639 = vshrl.u32 %v1638, 7
        %v1640 = vsub.s32 %v1637, %v1639
        %v1641 = vrot.slane %v1613, %v1640
        %v1642 = vunpack.c.l.b16 %v1620
        %v1643 = vunpack.c.l.b16 %v1627
        %v1644 = vunpack.c.l.b16 %v1634
        %v1645 = vunpack.c.l.b16 %v1641
        %v1646 = vrot.slane %v1643, 7
        %v1647 = vsel %vm269, %v1646, %v1642
        %v1648 = vrot.slane %v1644, 6
        %v1649 = vsel %vm272, %v1648, %v1647
        %v1650 = vrot.slane %v1645, 5
        %v1651 = vsel %vm275, %v1650, %v1649
        %v1652 = vpack.c.b16 %v1651, %v1651
        %v1654 = vunpack.c.l.s4 1983009808
        %v1655 = vunpack.c.0.s8 %v1654
        %v1656 = vlaneseq
        %v1657 = vshrl.u32 %v1656, 7
        %v1658 = vsub.s32 %v1655, %v1657
        %v1659 = vrot.slane %v1652, %v1658
        %1660 = vrot.lane.b32.xlu0 %v1659, 33
        %v1661 = vpop.permute.xlu0 %1660
        %vm1663 = vcmask 394504
        %1664 = vst.msk [vmem:[#allocation2 + $0x4] sm:$0x3] %vm1663, %v1661
        %v1665 = vld [vmem:[#allocation2] sm:$0x3f]
        %v1667 = vcombine.high %v1665, %v1665
        %v1669 = vunpack.c.l.s4 1983009808
        %v1670 = vunpack.c.0.s8 %v1669
        %v1671 = vlaneseq
        %v1672 = vshrl.u32 %v1671, 7
        %v1673 = vsub.s32 %v1670, %v1672
        %v1674 = vrot.slane %v1665, %v1673
        %v1676 = vunpack.c.l.s4 1983009808
        %v1677 = vunpack.c.0.s8 %v1676
        %v1678 = vlaneseq
        %v1679 = vshrl.u32 %v1678, 7
        %v1680 = vsub.s32 %v1677, %v1679
        %v1681 = vrot.slane %v1667, %v1680
        %1684 = vst [vmem:[#allocation3] sm:$0x33] %v1674
        %vm1685 = vcmask 254976
        %1686 = vst.msk [vmem:[#allocation3 + $0x8] sm:$0x3] %vm1685, %v1681
        %v1687 = vld [vmem:[#allocation2] sm:$0x3f]
        %v1689 = vcombine.low %v1687, %v1687
        %v1691 = vunpack.c.l.s4 1983009808
        %v1692 = vunpack.c.0.s8 %v1691
        %v1693 = vlaneseq
        %v1694 = vshrl.u32 %v1693, 7
        %v1695 = vsub.s32 %v1692, %v1694
        %v1696 = vrot.slane %v1689, %v1695
        %v1698 = vunpack.c.l.s4 1983009808
        %v1699 = vunpack.c.0.s8 %v1698
        %v1700 = vlaneseq
        %v1701 = vshrl.u32 %v1700, 7
        %v1702 = vsub.s32 %v1699, %v1701
        %v1703 = vrot.slane %v1687, %v1702
        %1704 = vrot.lane.b32.xlu0 %v1696, 127
        %v1705 = vpop.permute.xlu0 %1704
        %1706 = vrot.lane.b32.xlu0 %v1703, 127
        %v1707 = vpop.permute.xlu0 %1706
        %v1708 = vrot.slane %v1705, 4
        %v1709 = vrot.slane %v1707, 4
        %vm1710 = vcmask 1043456
        %v1711 = vsel %vm1710, %v1708, %v1709
        %v1712 = vsel %vm834, %v1705, %v1711
        %1715 = vst [vmem:[#allocation3] sm:$0xcc] %v1712
        %vm1716 = vcmask 257026
        %1717 = vst.msk [vmem:[#allocation3 + $0x8] sm:$0xc] %vm1716, %v1707
        %v1718 = vld [vmem:[#allocation2] sm:$0x3f]
        %v1720 = vcombine.high %v1718, %v1718
        %v1722 = vunpack.c.l.s4 1983009808
        %v1723 = vunpack.c.0.s8 %v1722
        %v1724 = vlaneseq
        %v1725 = vshrl.u32 %v1724, 7
        %v1726 = vsub.s32 %v1723, %v1725
        %v1727 = vrot.slane %v1718, %v1726
        %v1729 = vunpack.c.l.s4 1983009808
        %v1730 = vunpack.c.0.s8 %v1729
        %v1731 = vlaneseq
        %v1732 = vshrl.u32 %v1731, 7
        %v1733 = vsub.s32 %v1730, %v1732
        %v1734 = vrot.slane %v1720, %v1733
        %1735 = vrot.lane.b32.xlu0 %v1727, 126
        %v1736 = vpop.permute.xlu0 %1735
        %1737 = vrot.lane.b32.xlu0 %v1734, 126
        %v1738 = vpop.permute.xlu0 %1737
        %v1739 = vrot.slane %v1736, 4
        %v1740 = vrot.slane %v1738, 4
        %v1741 = vsel %vm1710, %v1739, %v1740
        %vm1742 = vcmask 1031168
        %v1743 = vsel %vm1742, %v1736, %v1741
        %1746 = vst [vmem:[#allocation3 + $0xc] sm:$0x33] %v1743
        %1747 = vst.msk [vmem:[#allocation3 + $0x14] sm:$0x3] %vm1685, %v1738
        %v1748 = vld [vmem:[#allocation2] sm:$0x3f]
        %v1750 = vcombine.low %v1748, %v1748
        %v1752 = vunpack.c.l.s4 1983009808
        %v1753 = vunpack.c.0.s8 %v1752
        %v1754 = vlaneseq
        %v1755 = vshrl.u32 %v1754, 7
        %v1756 = vsub.s32 %v1753, %v1755
        %v1757 = vrot.slane %v1750, %v1756
        %v1759 = vunpack.c.l.s4 1983009808
        %v1760 = vunpack.c.0.s8 %v1759
        %v1761 = vlaneseq
        %v1762 = vshrl.u32 %v1761, 7
        %v1763 = vsub.s32 %v1760, %v1762
        %v1764 = vrot.slane %v1748, %v1763
        %1765 = vrot.lane.b32.xlu0 %v1757, 110
        %v1766 = vpop.permute.xlu0 %1765
        %1767 = vrot.lane.b32.xlu0 %v1764, 110
        %v1768 = vpop.permute.xlu0 %1767
        %v1769 = vrot.slane %v1766, 4
        %v1770 = vrot.slane %v1768, 4
        %v1771 = vsel %vm1710, %v1769, %v1770
        %vm1772 = vcmask 900096
        %v1773 = vsel %vm1772, %v1766, %v1771
        %1776 = vst [vmem:[#allocation3 + $0xc] sm:$0xcc] %v1773
        %1777 = vst.msk [vmem:[#allocation3 + $0x14] sm:$0xc] %vm1716, %v1768
        %v1778 = vld [vmem:[#allocation2] sm:$0x3f]
        %v1780 = vcombine.high %v1778, %v1778
        %v1782 = vunpack.c.l.s4 1983009808
        %v1783 = vunpack.c.0.s8 %v1782
        %v1784 = vlaneseq
        %v1785 = vshrl.u32 %v1784, 7
        %v1786 = vsub.s32 %v1783, %v1785
        %v1787 = vrot.slane %v1778, %v1786
        %v1789 = vunpack.c.l.s4 1983009808
        %v1790 = vunpack.c.0.s8 %v1789
        %v1791 = vlaneseq
        %v1792 = vshrl.u32 %v1791, 7
        %v1793 = vsub.s32 %v1790, %v1792
        %v1794 = vrot.slane %v1780, %v1793
        %1795 = vrot.lane.b32.xlu0 %v1787, 109
        %v1796 = vpop.permute.xlu0 %1795
        %1797 = vrot.lane.b32.xlu0 %v1794, 109
        %v1798 = vpop.permute.xlu0 %1797
        %v1799 = vrot.slane %v1796, 4
        %v1800 = vrot.slane %v1798, 4
        %v1801 = vsel %vm1710, %v1799, %v1800
        %vm1802 = vcmask 891904
        %v1803 = vsel %vm1802, %v1796, %v1801
        %1806 = vst [vmem:[#allocation3 + $0x18] sm:$0x33] %v1803
        %1807 = vst.msk [vmem:[#allocation3 + $0x20] sm:$0x3] %vm1685, %v1798
        %v1808 = vld [vmem:[#allocation2] sm:$0x3f]
        %v1810 = vcombine.low %v1808, %v1808
        %v1812 = vunpack.c.l.s4 1983009808
        %v1813 = vunpack.c.0.s8 %v1812
        %v1814 = vlaneseq
        %v1815 = vshrl.u32 %v1814, 7
        %v1816 = vsub.s32 %v1813, %v1815
        %v1817 = vrot.slane %v1810, %v1816
        %v1819 = vunpack.c.l.s4 1983009808
        %v1820 = vunpack.c.0.s8 %v1819
        %v1821 = vlaneseq
        %v1822 = vshrl.u32 %v1821, 7
        %v1823 = vsub.s32 %v1820, %v1822
        %v1824 = vrot.slane %v1808, %v1823
        %1825 = vrot.lane.b32.xlu0 %v1817, 108
        %v1826 = vpop.permute.xlu0 %1825
        %1827 = vrot.lane.b32.xlu0 %v1824, 108
        %v1828 = vpop.permute.xlu0 %1827
        %v1829 = vrot.slane %v1826, 4
        %v1830 = vrot.slane %v1828, 4
        %v1831 = vsel %vm1710, %v1829, %v1830
        %vm1832 = vcmask 883712
        %v1833 = vsel %vm1832, %v1826, %v1831
        %1836 = vst [vmem:[#allocation3 + $0x18] sm:$0xcc] %v1833
        %1837 = vst.msk [vmem:[#allocation3 + $0x20] sm:$0xc] %vm1716, %v1828
        %v1838 = vld [vmem:[#allocation2] sm:$0x3f]
        %v1840 = vcombine.high %v1838, %v1838
        %v1842 = vunpack.c.l.s4 1983009808
        %v1843 = vunpack.c.0.s8 %v1842
        %v1844 = vlaneseq
        %v1845 = vshrl.u32 %v1844, 7
        %v1846 = vsub.s32 %v1843, %v1845
        %v1847 = vrot.slane %v1838, %v1846
        %v1849 = vunpack.c.l.s4 1983009808
        %v1850 = vunpack.c.0.s8 %v1849
        %v1851 = vlaneseq
        %v1852 = vshrl.u32 %v1851, 7
        %v1853 = vsub.s32 %v1850, %v1852
        %v1854 = vrot.slane %v1840, %v1853
        %1855 = vrot.lane.b32.xlu0 %v1847, 92
        %v1856 = vpop.permute.xlu0 %1855
        %1857 = vrot.lane.b32.xlu0 %v1854, 92
        %v1858 = vpop.permute.xlu0 %1857
        %v1859 = vrot.slane %v1856, 4
        %v1860 = vrot.slane %v1858, 4
        %v1861 = vsel %vm1710, %v1859, %v1860
        %vm1862 = vcmask 752640
        %v1863 = vsel %vm1862, %v1856, %v1861
        %1866 = vst [vmem:[#allocation3 + $0x24] sm:$0x33] %v1863
        %1867 = vst.msk [vmem:[#allocation3 + $0x2c] sm:$0x3] %vm1685, %v1858
        %v1868 = vld [vmem:[#allocation2] sm:$0x3f]
        %v1870 = vcombine.low %v1868, %v1868
        %v1872 = vunpack.c.l.s4 1983009808
        %v1873 = vunpack.c.0.s8 %v1872
        %v1874 = vlaneseq
        %v1875 = vshrl.u32 %v1874, 7
        %v1876 = vsub.s32 %v1873, %v1875
        %v1877 = vrot.slane %v1870, %v1876
        %v1879 = vunpack.c.l.s4 1983009808
        %v1880 = vunpack.c.0.s8 %v1879
        %v1881 = vlaneseq
        %v1882 = vshrl.u32 %v1881, 7
        %v1883 = vsub.s32 %v1880, %v1882
        %v1884 = vrot.slane %v1868, %v1883
        %1885 = vrot.lane.b32.xlu0 %v1877, 91
        %v1886 = vpop.permute.xlu0 %1885
        %1887 = vrot.lane.b32.xlu0 %v1884, 91
        %v1888 = vpop.permute.xlu0 %1887
        %v1889 = vrot.slane %v1886, 4
        %v1890 = vrot.slane %v1888, 4
        %v1891 = vsel %vm1710, %v1889, %v1890
        %vm1892 = vcmask 744448
        %v1893 = vsel %vm1892, %v1886, %v1891
        %1896 = vst [vmem:[#allocation3 + $0x24] sm:$0xcc] %v1893
        %1897 = vst.msk [vmem:[#allocation3 + $0x2c] sm:$0xc] %vm1716, %v1888
        %v1898 = vld [vmem:[#allocation2] sm:$0x3f]
        %v1900 = vcombine.high %v1898, %v1898
        %v1902 = vunpack.c.l.s4 1983009808
        %v1903 = vunpack.c.0.s8 %v1902
        %v1904 = vlaneseq
        %v1905 = vshrl.u32 %v1904, 7
        %v1906 = vsub.s32 %v1903, %v1905
        %v1907 = vrot.slane %v1898, %v1906
        %v1909 = vunpack.c.l.s4 1983009808
        %v1910 = vunpack.c.0.s8 %v1909
        %v1911 = vlaneseq
        %v1912 = vshrl.u32 %v1911, 7
        %v1913 = vsub.s32 %v1910, %v1912
        %v1914 = vrot.slane %v1900, %v1913
        %1915 = vrot.lane.b32.xlu0 %v1907, 90
        %v1916 = vpop.permute.xlu0 %1915
        %1917 = vrot.lane.b32.xlu0 %v1914, 90
        %v1918 = vpop.permute.xlu0 %1917
        %v1919 = vrot.slane %v1916, 4
        %v1920 = vrot.slane %v1918, 4
        %v1921 = vsel %vm1710, %v1919, %v1920
        %vm1922 = vcmask 736256
        %v1923 = vsel %vm1922, %v1916, %v1921
        %1926 = vst [vmem:[#allocation3 + $0x30] sm:$0x33] %v1923
        %1927 = vst.msk [vmem:[#allocation3 + $0x38] sm:$0x3] %vm1685, %v1918
        %v1928 = vld [vmem:[%s1] sm:$0xf]
        %v1929 = vld [vmem:[#allocation3] sm:$0xff]
        %v1930 = vld [vmem:[#allocation3 + $0x8] sm:$0xf]
        %v1931 = vld [vmem:[#allocation3 + $0xc] sm:$0xff]
        %v1932 = vld [vmem:[#allocation3 + $0x14] sm:$0xf]
        %v1933 = vld [vmem:[#allocation3 + $0x18] sm:$0xff]
        %v1934 = vld [vmem:[#allocation3 + $0x20] sm:$0xf]
        %v1935 = vld [vmem:[#allocation3 + $0x24] sm:$0xff]
        %v1936 = vld [vmem:[#allocation3 + $0x2c] sm:$0xf]
        %v1937 = vld [vmem:[#allocation3 + $0x30] sm:$0x33]
        %v1938 = vld [vmem:[#allocation3 + $0x38] sm:$0x3]
        %v1939 = vld [vmem:[%s2] sm:$0xff]
        %1941 = vset.pattern.permute.xlu0 0
        %1942 = vperm.xlu0 %1941, %v1939
        %v1943 = vpop.permute.xlu0 %1942
        %v1955 = vunpack.c.l.b16 %v1929
        %v1956 = vunpack.c.h.b16 %v1929
        %v1957 = vunpack.c.l.b16 %v1930
        %v1958 = vunpack.c.l.b16 %v1931
        %v1959 = vunpack.c.h.b16 %v1931
        %v1960 = vunpack.c.l.b16 %v1932
        %v1961 = vunpack.c.l.b16 %v1933
        %v1962 = vunpack.c.h.b16 %v1933
        %v1963 = vunpack.c.l.b16 %v1934
        %v1964 = vunpack.c.l.b16 %v1935
        %v1965 = vunpack.c.h.b16 %v1935
        %v1966 = vunpack.c.l.b16 %v1936
        %v1967 = vunpack.c.l.b16 %v1937
        %v1968 = vunpack.c.h.b16 %v1937
        %v1969 = vunpack.c.l.b16 %v1938
        %v1970 = vpack.c.b16 %v1958, %v1955
        %v1971 = vpack.c.b16 %v1959, %v1956
        %v1972 = vpack.c.b16 %v1960, %v1957
        %v1973 = vpack.c.b16 %v1964, %v1961
        %v1974 = vpack.c.b16 %v1965, %v1962
        %v1975 = vpack.c.b16 %v1966, %v1963
        %v1976 = vpack.c.b16 %v1967, %v1967
        %v1977 = vpack.c.b16 %v1968, %v1968
        %v1978 = vpack.c.b16 %v1969, %v1969
        %vm1985 = vcmask 293888
        %v1987 = vsel %vm1985, %v1928, 0
        %v1990 = vsel %vm190, %v1976, 0
        %v1993 = vsel %vm190, %v1977, 0
        %v1996 = vsel %vm190, %v1978, 0
        %1998 = vmatprep.subr.bf16.mxu0 0
        %1999 = vmatpush1.bf16.msra.mxu0 0
        %2000 = vmatprep.subr.bf16.mxu0 0
        %2001 = vmatpush1.bf16.msra.mxu0 0
        %2002 = vmatprep.subr.bf16.mxu0 0
        %2003 = vmatpush1.bf16.msra.mxu0 0
        %2004 = vmatprep.subr.bf16.mxu0 0
        %2005 = vmatpush1.bf16.msra.mxu0 0
        %2006 = vmatprep.subr.bf16.mxu0 0
        %2007 = vmatpush1.bf16.msra.mxu0 0
        %2008 = vmatprep.subr.bf16.mxu0 %v1993
        %2009 = vmatpush1.bf16.msra.mxu0 %v1990
        %2010 = vmatprep.subr.bf16.mxu0 %v1974
        %2011 = vmatpush1.bf16.msra.mxu0 %v1973
        %2012 = vmatprep.subr.bf16.mxu0 %v1971
        %2013 = vmatpush1.bf16.msra.mxu0 %v1970
        %2014 = vmatprep.subr.bf16.mxu0 0
        %2015 = vmatpush2.bf16.msra.mxu0 0
        %2016 = vmatprep.subr.bf16.mxu0 0
        %2017 = vmatpush2.bf16.msra.mxu0 0
        %2018 = vmatprep.subr.bf16.mxu0 0
        %2019 = vmatpush2.bf16.msra.mxu0 0
        %2020 = vmatprep.subr.bf16.mxu0 0
        %2021 = vmatpush2.bf16.msra.mxu0 0
        %2022 = vmatprep.subr.bf16.mxu0 0
        %2023 = vmatpush2.bf16.msra.mxu0 0
        %2024 = vmatprep.subr.bf16.mxu0 0
        %2025 = vmatpush2.bf16.msra.mxu0 0
        %2026 = vmatprep.subr.bf16.mxu0 0
        %2027 = vmatpush2.bf16.msra.mxu0 0
        %2028 = vmatprep.subr.bf16.mxu0 0
        %2029 = vmatpush2.bf16.msra.mxu0 0
        %2030 = vmatprep.mubr.bf16.mxu0 0
        %2031 = vmatmul.mubr.bf16.gmra.mxu0 %v1987
        %v2032 = vpop.f32.mrf.mxu0
        %v2033 = vadd.f32 %v1943, %v2032
        %v2034 = vpop.f32.mrf.mxu0
        %v2035 = vadd.f32 %v1943, %v2034
        %v2036 = vpop.f32.mrf.mxu0
        %v2037 = vpop.f32.mrf.mxu0
        %2038 = vdwg.mxu0
        %2039 = vmatprep.subr.bf16.mxu0 0
        %2040 = vmatpush1.bf16.msra.mxu0 0
        %2041 = vmatprep.subr.bf16.mxu0 0
        %2042 = vmatpush1.bf16.msra.mxu0 0
        %2043 = vmatprep.subr.bf16.mxu0 0
        %2044 = vmatpush1.bf16.msra.mxu0 0
        %2045 = vmatprep.subr.bf16.mxu0 0
        %2046 = vmatpush1.bf16.msra.mxu0 0
        %2047 = vmatprep.subr.bf16.mxu0 0
        %2048 = vmatpush1.bf16.msra.mxu0 0
        %2049 = vmatprep.subr.bf16.mxu0 0
        %2050 = vmatpush1.bf16.msra.mxu0 %v1996
        %2051 = vmatprep.subr.bf16.mxu0 0
        %2052 = vmatpush1.bf16.msra.mxu0 %v1975
        %2053 = vmatprep.subr.bf16.mxu0 0
        %2054 = vmatpush1.bf16.msra.mxu0 %v1972
        %2055 = vmatprep.subr.bf16.mxu0 0
        %2056 = vmatpush2.bf16.msra.mxu0 0
        %2057 = vmatprep.subr.bf16.mxu0 0
        %2058 = vmatpush2.bf16.msra.mxu0 0
        %2059 = vmatprep.subr.bf16.mxu0 0
        %2060 = vmatpush2.bf16.msra.mxu0 0
        %2061 = vmatprep.subr.bf16.mxu0 0
        %2062 = vmatpush2.bf16.msra.mxu0 0
        %2063 = vmatprep.subr.bf16.mxu0 0
        %2064 = vmatpush2.bf16.msra.mxu0 0
        %2065 = vmatprep.subr.bf16.mxu0 0
        %2066 = vmatpush2.bf16.msra.mxu0 0
        %2067 = vmatprep.subr.bf16.mxu0 0
        %2068 = vmatpush2.bf16.msra.mxu0 0
        %2069 = vmatprep.subr.bf16.mxu0 0
        %2070 = vmatpush2.bf16.msra.mxu0 0
        %2071 = vmatprep.mubr.bf16.mxu0 0
        %2072 = vmatmul.mubr.bf16.gmra.mxu0 %v1987
        %v2073 = vpop.f32.mrf.mxu0
        %v2074 = vadd.f32 %v1943, %v2073
        %v2075 = vpop.f32.mrf.mxu0
        %v2076 = vpop.f32.mrf.mxu0
        %v2077 = vpop.f32.mrf.mxu0
        %2078 = vdwg.mxu0
        %v2080 = vcombine.high %v2033, %v2033
        %v2082 = vunpack.c.l.s4 1966171168
        %v2083 = vunpack.c.0.s8 %v2082
        %v2084 = vlaneseq
        %v2085 = vshrl.u32 %v2084, 7
        %v2086 = vsub.s32 %v2083, %v2085
        %v2087 = vrot.slane %v2033, %v2086
        %v2089 = vunpack.c.l.s4 1966171168
        %v2090 = vunpack.c.0.s8 %v2089
        %v2091 = vlaneseq
        %v2092 = vshrl.u32 %v2091, 7
        %v2093 = vsub.s32 %v2090, %v2092
        %v2094 = vrot.slane %v2080, %v2093
        %v2095 = vcombine.high %v2087, %v2087
        %v2096 = vcombine.high %v2094, %v2094
        %v2098 = vunpack.c.l.s4 1966171168
        %v2099 = vunpack.c.0.s8 %v2098
        %v2100 = vlaneseq
        %v2101 = vshrl.u32 %v2100, 7
        %v2102 = vsub.s32 %v2099, %v2101
        %v2103 = vrot.slane %v2087, %v2102
        %v2105 = vunpack.c.l.s4 1966171168
        %v2106 = vunpack.c.0.s8 %v2105
        %v2107 = vlaneseq
        %v2108 = vshrl.u32 %v2107, 7
        %v2109 = vsub.s32 %v2106, %v2108
        %v2110 = vrot.slane %v2094, %v2109
        %v2112 = vunpack.c.l.s4 1966171168
        %v2113 = vunpack.c.0.s8 %v2112
        %v2114 = vlaneseq
        %v2115 = vshrl.u32 %v2114, 7
        %v2116 = vsub.s32 %v2113, %v2115
        %v2117 = vrot.slane %v2095, %v2116
        %v2119 = vunpack.c.l.s4 1966171168
        %v2120 = vunpack.c.0.s8 %v2119
        %v2121 = vlaneseq
        %v2122 = vshrl.u32 %v2121, 7
        %v2123 = vsub.s32 %v2120, %v2122
        %v2124 = vrot.slane %v2096, %v2123
        %v2125 = vcombine.high %v2103, %v2103
        %v2126 = vcombine.high %v2110, %v2110
        %v2127 = vcombine.high %v2117, %v2117
        %v2128 = vcombine.high %v2124, %v2124
        %vm2137 = vcmask 122880
        %2138 = vst.msk [vmem:[%s188] sm:$0x1] %vm2137, %v2103
        %2139 = vst.msk [vmem:[%s188 + $0x10] sm:$0x1] %vm2137, %v2117
        %2140 = vst.msk [vmem:[%s188 + $0x20] sm:$0x1] %vm2137, %v2125
        %2141 = vst.msk [vmem:[%s188 + $0x30] sm:$0x1] %vm2137, %v2127
        %2142 = vst.msk [vmem:[%s188 + $0x40] sm:$0x1] %vm2137, %v2110
        %2143 = vst.msk [vmem:[%s188 + $0x50] sm:$0x1] %vm2137, %v2124
        %2144 = vst.msk [vmem:[%s188 + $0x60] sm:$0x1] %vm2137, %v2126
        %2145 = vst.msk [vmem:[%s188 + $0x70] sm:$0x1] %vm2137, %v2128
        %v2146 = vlaneseq
        %v2147 = vshrl.u32 %v2146, 7
        %v2148 = vsub.s32 0, %v2147
        %v2149 = vrot.slane %v2103, %v2148
        %v2150 = vlaneseq
        %v2151 = vshrl.u32 %v2150, 7
        %v2152 = vsub.s32 0, %v2151
        %v2153 = vrot.slane %v2117, %v2152
        %v2154 = vlaneseq
        %v2155 = vshrl.u32 %v2154, 7
        %v2156 = vsub.s32 0, %v2155
        %v2157 = vrot.slane %v2125, %v2156
        %v2158 = vlaneseq
        %v2159 = vshrl.u32 %v2158, 7
        %v2160 = vsub.s32 0, %v2159
        %v2161 = vrot.slane %v2127, %v2160
        %v2162 = vlaneseq
        %v2163 = vshrl.u32 %v2162, 7
        %v2164 = vsub.s32 0, %v2163
        %v2165 = vrot.slane %v2110, %v2164
        %v2166 = vlaneseq
        %v2167 = vshrl.u32 %v2166, 7
        %v2168 = vsub.s32 0, %v2167
        %v2169 = vrot.slane %v2124, %v2168
        %v2170 = vlaneseq
        %v2171 = vshrl.u32 %v2170, 7
        %v2172 = vsub.s32 0, %v2171
        %v2173 = vrot.slane %v2126, %v2172
        %v2174 = vlaneseq
        %v2175 = vshrl.u32 %v2174, 7
        %v2176 = vsub.s32 0, %v2175
        %v2177 = vrot.slane %v2128, %v2176
        %2178 = vrot.lane.b32.xlu0 %v2149, 110
        %v2179 = vpop.permute.xlu0 %2178
        %2180 = vrot.lane.b32.xlu0 %v2153, 110
        %v2181 = vpop.permute.xlu0 %2180
        %2182 = vrot.lane.b32.xlu0 %v2157, 110
        %v2183 = vpop.permute.xlu0 %2182
        %2184 = vrot.lane.b32.xlu0 %v2161, 110
        %v2185 = vpop.permute.xlu0 %2184
        %2186 = vrot.lane.b32.xlu0 %v2165, 110
        %v2187 = vpop.permute.xlu0 %2186
        %2188 = vrot.lane.b32.xlu0 %v2169, 110
        %v2189 = vpop.permute.xlu0 %2188
        %2190 = vrot.lane.b32.xlu0 %v2173, 110
        %v2191 = vpop.permute.xlu0 %2190
        %2192 = vrot.lane.b32.xlu0 %v2177, 110
        %v2193 = vpop.permute.xlu0 %2192
        %2202 = vst.msk [vmem:[%s188 + $0x1] sm:$0x1] %vm2137, %v2179
        %2203 = vst.msk [vmem:[%s188 + $0x11] sm:$0x1] %vm2137, %v2181
        %2204 = vst.msk [vmem:[%s188 + $0x21] sm:$0x1] %vm2137, %v2183
        %2205 = vst.msk [vmem:[%s188 + $0x31] sm:$0x1] %vm2137, %v2185
        %2206 = vst.msk [vmem:[%s188 + $0x41] sm:$0x1] %vm2137, %v2187
        %2207 = vst.msk [vmem:[%s188 + $0x51] sm:$0x1] %vm2137, %v2189
        %2208 = vst.msk [vmem:[%s188 + $0x61] sm:$0x1] %vm2137, %v2191
        %2209 = vst.msk [vmem:[%s188 + $0x71] sm:$0x1] %vm2137, %v2193
        %2210 = vrot.lane.b32.xlu0 %v2149, 92
        %v2211 = vpop.permute.xlu0 %2210
        %2212 = vrot.lane.b32.xlu0 %v2153, 92
        %v2213 = vpop.permute.xlu0 %2212
        %2214 = vrot.lane.b32.xlu0 %v2157, 92
        %v2215 = vpop.permute.xlu0 %2214
        %2216 = vrot.lane.b32.xlu0 %v2161, 92
        %v2217 = vpop.permute.xlu0 %2216
        %2218 = vrot.lane.b32.xlu0 %v2165, 92
        %v2219 = vpop.permute.xlu0 %2218
        %2220 = vrot.lane.b32.xlu0 %v2169, 92
        %v2221 = vpop.permute.xlu0 %2220
        %2222 = vrot.lane.b32.xlu0 %v2173, 92
        %v2223 = vpop.permute.xlu0 %2222
        %2224 = vrot.lane.b32.xlu0 %v2177, 92
        %v2225 = vpop.permute.xlu0 %2224
        %2234 = vst.msk [vmem:[%s188 + $0x2] sm:$0x1] %vm2137, %v2211
        %2235 = vst.msk [vmem:[%s188 + $0x12] sm:$0x1] %vm2137, %v2213
        %2236 = vst.msk [vmem:[%s188 + $0x22] sm:$0x1] %vm2137, %v2215
        %2237 = vst.msk [vmem:[%s188 + $0x32] sm:$0x1] %vm2137, %v2217
        %2238 = vst.msk [vmem:[%s188 + $0x42] sm:$0x1] %vm2137, %v2219
        %2239 = vst.msk [vmem:[%s188 + $0x52] sm:$0x1] %vm2137, %v2221
        %2240 = vst.msk [vmem:[%s188 + $0x62] sm:$0x1] %vm2137, %v2223
        %2241 = vst.msk [vmem:[%s188 + $0x72] sm:$0x1] %vm2137, %v2225
        %2242 = vrot.lane.b32.xlu0 %v2149, 74
        %v2243 = vpop.permute.xlu0 %2242
        %2244 = vrot.lane.b32.xlu0 %v2153, 74
        %v2245 = vpop.permute.xlu0 %2244
        %2246 = vrot.lane.b32.xlu0 %v2157, 74
        %v2247 = vpop.permute.xlu0 %2246
        %2248 = vrot.lane.b32.xlu0 %v2161, 74
        %v2249 = vpop.permute.xlu0 %2248
        %2250 = vrot.lane.b32.xlu0 %v2165, 74
        %v2251 = vpop.permute.xlu0 %2250
        %2252 = vrot.lane.b32.xlu0 %v2169, 74
        %v2253 = vpop.permute.xlu0 %2252
        %2254 = vrot.lane.b32.xlu0 %v2173, 74
        %v2255 = vpop.permute.xlu0 %2254
        %2256 = vrot.lane.b32.xlu0 %v2177, 74
        %v2257 = vpop.permute.xlu0 %2256
        %2266 = vst.msk [vmem:[%s188 + $0x3] sm:$0x1] %vm2137, %v2243
        %2267 = vst.msk [vmem:[%s188 + $0x13] sm:$0x1] %vm2137, %v2245
        %2268 = vst.msk [vmem:[%s188 + $0x23] sm:$0x1] %vm2137, %v2247
        %2269 = vst.msk [vmem:[%s188 + $0x33] sm:$0x1] %vm2137, %v2249
        %2270 = vst.msk [vmem:[%s188 + $0x43] sm:$0x1] %vm2137, %v2251
        %2271 = vst.msk [vmem:[%s188 + $0x53] sm:$0x1] %vm2137, %v2253
        %2272 = vst.msk [vmem:[%s188 + $0x63] sm:$0x1] %vm2137, %v2255
        %2273 = vst.msk [vmem:[%s188 + $0x73] sm:$0x1] %vm2137, %v2257
        %2274 = vrot.lane.b32.xlu0 %v2149, 56
        %v2275 = vpop.permute.xlu0 %2274
        %2276 = vrot.lane.b32.xlu0 %v2153, 56
        %v2277 = vpop.permute.xlu0 %2276
        %2278 = vrot.lane.b32.xlu0 %v2157, 56
        %v2279 = vpop.permute.xlu0 %2278
        %2280 = vrot.lane.b32.xlu0 %v2161, 56
        %v2281 = vpop.permute.xlu0 %2280
        %2282 = vrot.lane.b32.xlu0 %v2165, 56
        %v2283 = vpop.permute.xlu0 %2282
        %2284 = vrot.lane.b32.xlu0 %v2169, 56
        %v2285 = vpop.permute.xlu0 %2284
        %2286 = vrot.lane.b32.xlu0 %v2173, 56
        %v2287 = vpop.permute.xlu0 %2286
        %2288 = vrot.lane.b32.xlu0 %v2177, 56
        %v2289 = vpop.permute.xlu0 %2288
        %2298 = vst.msk [vmem:[%s188 + $0x4] sm:$0x1] %vm2137, %v2275
        %2299 = vst.msk [vmem:[%s188 + $0x14] sm:$0x1] %vm2137, %v2277
        %2300 = vst.msk [vmem:[%s188 + $0x24] sm:$0x1] %vm2137, %v2279
        %2301 = vst.msk [vmem:[%s188 + $0x34] sm:$0x1] %vm2137, %v2281
        %2302 = vst.msk [vmem:[%s188 + $0x44] sm:$0x1] %vm2137, %v2283
        %2303 = vst.msk [vmem:[%s188 + $0x54] sm:$0x1] %vm2137, %v2285
        %2304 = vst.msk [vmem:[%s188 + $0x64] sm:$0x1] %vm2137, %v2287
        %2305 = vst.msk [vmem:[%s188 + $0x74] sm:$0x1] %vm2137, %v2289
        %2306 = vrot.lane.b32.xlu0 %v2149, 38
        %v2307 = vpop.permute.xlu0 %2306
        %2308 = vrot.lane.b32.xlu0 %v2153, 38
        %v2309 = vpop.permute.xlu0 %2308
        %2310 = vrot.lane.b32.xlu0 %v2157, 38
        %v2311 = vpop.permute.xlu0 %2310
        %2312 = vrot.lane.b32.xlu0 %v2161, 38
        %v2313 = vpop.permute.xlu0 %2312
        %2314 = vrot.lane.b32.xlu0 %v2165, 38
        %v2315 = vpop.permute.xlu0 %2314
        %2316 = vrot.lane.b32.xlu0 %v2169, 38
        %v2317 = vpop.permute.xlu0 %2316
        %2318 = vrot.lane.b32.xlu0 %v2173, 38
        %v2319 = vpop.permute.xlu0 %2318
        %2320 = vrot.lane.b32.xlu0 %v2177, 38
        %v2321 = vpop.permute.xlu0 %2320
        %2330 = vst.msk [vmem:[%s188 + $0x5] sm:$0x1] %vm2137, %v2307
        %2331 = vst.msk [vmem:[%s188 + $0x15] sm:$0x1] %vm2137, %v2309
        %2332 = vst.msk [vmem:[%s188 + $0x25] sm:$0x1] %vm2137, %v2311
        %2333 = vst.msk [vmem:[%s188 + $0x35] sm:$0x1] %vm2137, %v2313
        %2334 = vst.msk [vmem:[%s188 + $0x45] sm:$0x1] %vm2137, %v2315
        %2335 = vst.msk [vmem:[%s188 + $0x55] sm:$0x1] %vm2137, %v2317
        %2336 = vst.msk [vmem:[%s188 + $0x65] sm:$0x1] %vm2137, %v2319
        %2337 = vst.msk [vmem:[%s188 + $0x75] sm:$0x1] %vm2137, %v2321
        %2338 = vrot.lane.b32.xlu0 %v2149, 20
        %v2339 = vpop.permute.xlu0 %2338
        %2340 = vrot.lane.b32.xlu0 %v2153, 20
        %v2341 = vpop.permute.xlu0 %2340
        %2342 = vrot.lane.b32.xlu0 %v2157, 20
        %v2343 = vpop.permute.xlu0 %2342
        %2344 = vrot.lane.b32.xlu0 %v2161, 20
        %v2345 = vpop.permute.xlu0 %2344
        %2346 = vrot.lane.b32.xlu0 %v2165, 20
        %v2347 = vpop.permute.xlu0 %2346
        %2348 = vrot.lane.b32.xlu0 %v2169, 20
        %v2349 = vpop.permute.xlu0 %2348
        %2350 = vrot.lane.b32.xlu0 %v2173, 20
        %v2351 = vpop.permute.xlu0 %2350
        %2352 = vrot.lane.b32.xlu0 %v2177, 20
        %v2353 = vpop.permute.xlu0 %2352
        %2362 = vst.msk [vmem:[%s188 + $0x6] sm:$0x1] %vm2137, %v2339
        %2363 = vst.msk [vmem:[%s188 + $0x16] sm:$0x1] %vm2137, %v2341
        %2364 = vst.msk [vmem:[%s188 + $0x26] sm:$0x1] %vm2137, %v2343
        %2365 = vst.msk [vmem:[%s188 + $0x36] sm:$0x1] %vm2137, %v2345
        %2366 = vst.msk [vmem:[%s188 + $0x46] sm:$0x1] %vm2137, %v2347
        %2367 = vst.msk [vmem:[%s188 + $0x56] sm:$0x1] %vm2137, %v2349
        %2368 = vst.msk [vmem:[%s188 + $0x66] sm:$0x1] %vm2137, %v2351
        %2369 = vst.msk [vmem:[%s188 + $0x76] sm:$0x1] %vm2137, %v2353
        %v2371 = vcombine.low %v2033, %v2035
        %v2372 = vcombine.high %v2033, %v2035
        %v2374 = vunpack.c.l.s4 1966171168
        %v2375 = vunpack.c.0.s8 %v2374
        %v2376 = vlaneseq
        %v2377 = vshrl.u32 %v2376, 7
        %v2378 = vsub.s32 %v2375, %v2377
        %v2379 = vrot.slane %v2371, %v2378
        %v2381 = vunpack.c.l.s4 1966171168
        %v2382 = vunpack.c.0.s8 %v2381
        %v2383 = vlaneseq
        %v2384 = vshrl.u32 %v2383, 7
        %v2385 = vsub.s32 %v2382, %v2384
        %v2386 = vrot.slane %v2372, %v2385
        %v2387 = vcombine.high %v2379, %v2379
        %v2388 = vcombine.high %v2386, %v2386
        %v2390 = vunpack.c.l.s4 1966171168
        %v2391 = vunpack.c.0.s8 %v2390
        %v2392 = vlaneseq
        %v2393 = vshrl.u32 %v2392, 7
        %v2394 = vsub.s32 %v2391, %v2393
        %v2395 = vrot.slane %v2379, %v2394
        %v2397 = vunpack.c.l.s4 1966171168
        %v2398 = vunpack.c.0.s8 %v2397
        %v2399 = vlaneseq
        %v2400 = vshrl.u32 %v2399, 7
        %v2401 = vsub.s32 %v2398, %v2400
        %v2402 = vrot.slane %v2386, %v2401
        %v2404 = vunpack.c.l.s4 1966171168
        %v2405 = vunpack.c.0.s8 %v2404
        %v2406 = vlaneseq
        %v2407 = vshrl.u32 %v2406, 7
        %v2408 = vsub.s32 %v2405, %v2407
        %v2409 = vrot.slane %v2387, %v2408
        %v2411 = vunpack.c.l.s4 1966171168
        %v2412 = vunpack.c.0.s8 %v2411
        %v2413 = vlaneseq
        %v2414 = vshrl.u32 %v2413, 7
        %v2415 = vsub.s32 %v2412, %v2414
        %v2416 = vrot.slane %v2388, %v2415
        %v2417 = vcombine.high %v2395, %v2395
        %v2418 = vcombine.high %v2402, %v2402
        %v2419 = vcombine.high %v2409, %v2409
        %v2420 = vcombine.high %v2416, %v2416
        %v2421 = vlaneseq
        %v2422 = vshrl.u32 %v2421, 7
        %v2423 = vsub.s32 0, %v2422
        %v2424 = vrot.slane %v2395, %v2423
        %v2425 = vlaneseq
        %v2426 = vshrl.u32 %v2425, 7
        %v2427 = vsub.s32 1, %v2426
        %v2428 = vrot.slane %v2395, %v2427
        %v2429 = vlaneseq
        %v2430 = vshrl.u32 %v2429, 7
        %v2431 = vsub.s32 0, %v2430
        %v2432 = vrot.slane %v2409, %v2431
        %v2433 = vlaneseq
        %v2434 = vshrl.u32 %v2433, 7
        %v2435 = vsub.s32 1, %v2434
        %v2436 = vrot.slane %v2409, %v2435
        %v2437 = vlaneseq
        %v2438 = vshrl.u32 %v2437, 7
        %v2439 = vsub.s32 0, %v2438
        %v2440 = vrot.slane %v2417, %v2439
        %v2441 = vlaneseq
        %v2442 = vshrl.u32 %v2441, 7
        %v2443 = vsub.s32 1, %v2442
        %v2444 = vrot.slane %v2417, %v2443
        %v2445 = vlaneseq
        %v2446 = vshrl.u32 %v2445, 7
        %v2447 = vsub.s32 0, %v2446
        %v2448 = vrot.slane %v2419, %v2447
        %v2449 = vlaneseq
        %v2450 = vshrl.u32 %v2449, 7
        %v2451 = vsub.s32 1, %v2450
        %v2452 = vrot.slane %v2419, %v2451
        %v2453 = vlaneseq
        %v2454 = vshrl.u32 %v2453, 7
        %v2455 = vsub.s32 0, %v2454
        %v2456 = vrot.slane %v2402, %v2455
        %v2457 = vlaneseq
        %v2458 = vshrl.u32 %v2457, 7
        %v2459 = vsub.s32 1, %v2458
        %v2460 = vrot.slane %v2402, %v2459
        %v2461 = vlaneseq
        %v2462 = vshrl.u32 %v2461, 7
        %v2463 = vsub.s32 0, %v2462
        %v2464 = vrot.slane %v2416, %v2463
        %v2465 = vlaneseq
        %v2466 = vshrl.u32 %v2465, 7
        %v2467 = vsub.s32 1, %v2466
        %v2468 = vrot.slane %v2416, %v2467
        %v2469 = vlaneseq
        %v2470 = vshrl.u32 %v2469, 7
        %v2471 = vsub.s32 0, %v2470
        %v2472 = vrot.slane %v2418, %v2471
        %v2473 = vlaneseq
        %v2474 = vshrl.u32 %v2473, 7
        %v2475 = vsub.s32 1, %v2474
        %v2476 = vrot.slane %v2418, %v2475
        %v2477 = vlaneseq
        %v2478 = vshrl.u32 %v2477, 7
        %v2479 = vsub.s32 0, %v2478
        %v2480 = vrot.slane %v2420, %v2479
        %v2481 = vlaneseq
        %v2482 = vshrl.u32 %v2481, 7
        %v2483 = vsub.s32 1, %v2482
        %v2484 = vrot.slane %v2420, %v2483
        %2485 = vrot.lane.b32.xlu0 %v2424, 2
        %v2486 = vpop.permute.xlu0 %2485
        %2487 = vrot.lane.b32.xlu0 %v2428, 2
        %v2488 = vpop.permute.xlu0 %2487
        %2489 = vrot.lane.b32.xlu0 %v2432, 2
        %v2490 = vpop.permute.xlu0 %2489
        %2491 = vrot.lane.b32.xlu0 %v2436, 2
        %v2492 = vpop.permute.xlu0 %2491
        %2493 = vrot.lane.b32.xlu0 %v2440, 2
        %v2494 = vpop.permute.xlu0 %2493
        %2495 = vrot.lane.b32.xlu0 %v2444, 2
        %v2496 = vpop.permute.xlu0 %2495
        %2497 = vrot.lane.b32.xlu0 %v2448, 2
        %v2498 = vpop.permute.xlu0 %2497
        %2499 = vrot.lane.b32.xlu0 %v2452, 2
        %v2500 = vpop.permute.xlu0 %2499
        %2501 = vrot.lane.b32.xlu0 %v2456, 2
        %v2502 = vpop.permute.xlu0 %2501
        %2503 = vrot.lane.b32.xlu0 %v2460, 2
        %v2504 = vpop.permute.xlu0 %2503
        %2505 = vrot.lane.b32.xlu0 %v2464, 2
        %v2506 = vpop.permute.xlu0 %2505
        %2507 = vrot.lane.b32.xlu0 %v2468, 2
        %v2508 = vpop.permute.xlu0 %2507
        %2509 = vrot.lane.b32.xlu0 %v2472, 2
        %v2510 = vpop.permute.xlu0 %2509
        %2511 = vrot.lane.b32.xlu0 %v2476, 2
        %v2512 = vpop.permute.xlu0 %2511
        %2513 = vrot.lane.b32.xlu0 %v2480, 2
        %v2514 = vpop.permute.xlu0 %2513
        %2515 = vrot.lane.b32.xlu0 %v2484, 2
        %v2516 = vpop.permute.xlu0 %2515
        %vm2517 = vcmask 15360
        %v2518 = vsel %vm2517, %v2486, %v2488
        %v2519 = vsel %vm2517, %v2490, %v2492
        %v2520 = vsel %vm2517, %v2494, %v2496
        %v2521 = vsel %vm2517, %v2498, %v2500
        %v2522 = vsel %vm2517, %v2502, %v2504
        %v2523 = vsel %vm2517, %v2506, %v2508
        %v2524 = vsel %vm2517, %v2510, %v2512
        %v2525 = vsel %vm2517, %v2514, %v2516
        %2534 = vst.msk [vmem:[%s188 + $0x7] sm:$0x1] %vm2137, %v2518
        %2535 = vst.msk [vmem:[%s188 + $0x17] sm:$0x1] %vm2137, %v2519
        %2536 = vst.msk [vmem:[%s188 + $0x27] sm:$0x1] %vm2137, %v2520
        %2537 = vst.msk [vmem:[%s188 + $0x37] sm:$0x1] %vm2137, %v2521
        %2538 = vst.msk [vmem:[%s188 + $0x47] sm:$0x1] %vm2137, %v2522
        %2539 = vst.msk [vmem:[%s188 + $0x57] sm:$0x1] %vm2137, %v2523
        %2540 = vst.msk [vmem:[%s188 + $0x67] sm:$0x1] %vm2137, %v2524
        %2541 = vst.msk [vmem:[%s188 + $0x77] sm:$0x1] %vm2137, %v2525
        %v2542 = vcombine.high %v2035, %v2035
        %v2544 = vunpack.c.l.s4 1966171168
        %v2545 = vunpack.c.0.s8 %v2544
        %v2546 = vlaneseq
        %v2547 = vshrl.u32 %v2546, 7
        %v2548 = vsub.s32 %v2545, %v2547
        %v2549 = vrot.slane %v2035, %v2548
        %v2551 = vunpack.c.l.s4 1966171168
        %v2552 = vunpack.c.0.s8 %v2551
        %v2553 = vlaneseq
        %v2554 = vshrl.u32 %v2553, 7
        %v2555 = vsub.s32 %v2552, %v2554
        %v2556 = vrot.slane %v2542, %v2555
        %v2557 = vcombine.high %v2549, %v2549
        %v2558 = vcombine.high %v2556, %v2556
        %v2560 = vunpack.c.l.s4 1966171168
        %v2561 = vunpack.c.0.s8 %v2560
        %v2562 = vlaneseq
        %v2563 = vshrl.u32 %v2562, 7
        %v2564 = vsub.s32 %v2561, %v2563
        %v2565 = vrot.slane %v2549, %v2564
        %v2567 = vunpack.c.l.s4 1966171168
        %v2568 = vunpack.c.0.s8 %v2567
        %v2569 = vlaneseq
        %v2570 = vshrl.u32 %v2569, 7
        %v2571 = vsub.s32 %v2568, %v2570
        %v2572 = vrot.slane %v2556, %v2571
        %v2574 = vunpack.c.l.s4 1966171168
        %v2575 = vunpack.c.0.s8 %v2574
        %v2576 = vlaneseq
        %v2577 = vshrl.u32 %v2576, 7
        %v2578 = vsub.s32 %v2575, %v2577
        %v2579 = vrot.slane %v2557, %v2578
        %v2581 = vunpack.c.l.s4 1966171168
        %v2582 = vunpack.c.0.s8 %v2581
        %v2583 = vlaneseq
        %v2584 = vshrl.u32 %v2583, 7
        %v2585 = vsub.s32 %v2582, %v2584
        %v2586 = vrot.slane %v2558, %v2585
        %v2587 = vcombine.high %v2565, %v2565
        %v2588 = vcombine.high %v2572, %v2572
        %v2589 = vcombine.high %v2579, %v2579
        %v2590 = vcombine.high %v2586, %v2586
        %v2591 = vlaneseq
        %v2592 = vshrl.u32 %v2591, 7
        %v2593 = vsub.s32 0, %v2592
        %v2594 = vrot.slane %v2565, %v2593
        %v2595 = vlaneseq
        %v2596 = vshrl.u32 %v2595, 7
        %v2597 = vsub.s32 0, %v2596
        %v2598 = vrot.slane %v2579, %v2597
        %v2599 = vlaneseq
        %v2600 = vshrl.u32 %v2599, 7
        %v2601 = vsub.s32 0, %v2600
        %v2602 = vrot.slane %v2587, %v2601
        %v2603 = vlaneseq
        %v2604 = vshrl.u32 %v2603, 7
        %v2605 = vsub.s32 0, %v2604
        %v2606 = vrot.slane %v2589, %v2605
        %v2607 = vlaneseq
        %v2608 = vshrl.u32 %v2607, 7
        %v2609 = vsub.s32 0, %v2608
        %v2610 = vrot.slane %v2572, %v2609
        %v2611 = vlaneseq
        %v2612 = vshrl.u32 %v2611, 7
        %v2613 = vsub.s32 0, %v2612
        %v2614 = vrot.slane %v2586, %v2613
        %v2615 = vlaneseq
        %v2616 = vshrl.u32 %v2615, 7
        %v2617 = vsub.s32 0, %v2616
        %v2618 = vrot.slane %v2588, %v2617
        %v2619 = vlaneseq
        %v2620 = vshrl.u32 %v2619, 7
        %v2621 = vsub.s32 0, %v2620
        %v2622 = vrot.slane %v2590, %v2621
        %2623 = vrot.lane.b32.xlu0 %v2594, 112
        %v2624 = vpop.permute.xlu0 %2623
        %2625 = vrot.lane.b32.xlu0 %v2598, 112
        %v2626 = vpop.permute.xlu0 %2625
        %2627 = vrot.lane.b32.xlu0 %v2602, 112
        %v2628 = vpop.permute.xlu0 %2627
        %2629 = vrot.lane.b32.xlu0 %v2606, 112
        %v2630 = vpop.permute.xlu0 %2629
        %2631 = vrot.lane.b32.xlu0 %v2610, 112
        %v2632 = vpop.permute.xlu0 %2631
        %2633 = vrot.lane.b32.xlu0 %v2614, 112
        %v2634 = vpop.permute.xlu0 %2633
        %2635 = vrot.lane.b32.xlu0 %v2618, 112
        %v2636 = vpop.permute.xlu0 %2635
        %2637 = vrot.lane.b32.xlu0 %v2622, 112
        %v2638 = vpop.permute.xlu0 %2637
        %2647 = vst.msk [vmem:[%s188 + $0x8] sm:$0x1] %vm2137, %v2624
        %2648 = vst.msk [vmem:[%s188 + $0x18] sm:$0x1] %vm2137, %v2626
        %2649 = vst.msk [vmem:[%s188 + $0x28] sm:$0x1] %vm2137, %v2628
        %2650 = vst.msk [vmem:[%s188 + $0x38] sm:$0x1] %vm2137, %v2630
        %2651 = vst.msk [vmem:[%s188 + $0x48] sm:$0x1] %vm2137, %v2632
        %2652 = vst.msk [vmem:[%s188 + $0x58] sm:$0x1] %vm2137, %v2634
        %2653 = vst.msk [vmem:[%s188 + $0x68] sm:$0x1] %vm2137, %v2636
        %2654 = vst.msk [vmem:[%s188 + $0x78] sm:$0x1] %vm2137, %v2638
        %2655 = vrot.lane.b32.xlu0 %v2594, 94
        %v2656 = vpop.permute.xlu0 %2655
        %2657 = vrot.lane.b32.xlu0 %v2598, 94
        %v2658 = vpop.permute.xlu0 %2657
        %2659 = vrot.lane.b32.xlu0 %v2602, 94
        %v2660 = vpop.permute.xlu0 %2659
        %2661 = vrot.lane.b32.xlu0 %v2606, 94
        %v2662 = vpop.permute.xlu0 %2661
        %2663 = vrot.lane.b32.xlu0 %v2610, 94
        %v2664 = vpop.permute.xlu0 %2663
        %2665 = vrot.lane.b32.xlu0 %v2614, 94
        %v2666 = vpop.permute.xlu0 %2665
        %2667 = vrot.lane.b32.xlu0 %v2618, 94
        %v2668 = vpop.permute.xlu0 %2667
        %2669 = vrot.lane.b32.xlu0 %v2622, 94
        %v2670 = vpop.permute.xlu0 %2669
        %2679 = vst.msk [vmem:[%s188 + $0x9] sm:$0x1] %vm2137, %v2656
        %2680 = vst.msk [vmem:[%s188 + $0x19] sm:$0x1] %vm2137, %v2658
        %2681 = vst.msk [vmem:[%s188 + $0x29] sm:$0x1] %vm2137, %v2660
        %2682 = vst.msk [vmem:[%s188 + $0x39] sm:$0x1] %vm2137, %v2662
        %2683 = vst.msk [vmem:[%s188 + $0x49] sm:$0x1] %vm2137, %v2664
        %2684 = vst.msk [vmem:[%s188 + $0x59] sm:$0x1] %vm2137, %v2666
        %2685 = vst.msk [vmem:[%s188 + $0x69] sm:$0x1] %vm2137, %v2668
        %2686 = vst.msk [vmem:[%s188 + $0x79] sm:$0x1] %vm2137, %v2670
        %2687 = vrot.lane.b32.xlu0 %v2594, 76
        %v2688 = vpop.permute.xlu0 %2687
        %2689 = vrot.lane.b32.xlu0 %v2598, 76
        %v2690 = vpop.permute.xlu0 %2689
        %2691 = vrot.lane.b32.xlu0 %v2602, 76
        %v2692 = vpop.permute.xlu0 %2691
        %2693 = vrot.lane.b32.xlu0 %v2606, 76
        %v2694 = vpop.permute.xlu0 %2693
        %2695 = vrot.lane.b32.xlu0 %v2610, 76
        %v2696 = vpop.permute.xlu0 %2695
        %2697 = vrot.lane.b32.xlu0 %v2614, 76
        %v2698 = vpop.permute.xlu0 %2697
        %2699 = vrot.lane.b32.xlu0 %v2618, 76
        %v2700 = vpop.permute.xlu0 %2699
        %2701 = vrot.lane.b32.xlu0 %v2622, 76
        %v2702 = vpop.permute.xlu0 %2701
        %2711 = vst.msk [vmem:[%s188 + $0xa] sm:$0x1] %vm2137, %v2688
        %2712 = vst.msk [vmem:[%s188 + $0x1a] sm:$0x1] %vm2137, %v2690
        %2713 = vst.msk [vmem:[%s188 + $0x2a] sm:$0x1] %vm2137, %v2692
        %2714 = vst.msk [vmem:[%s188 + $0x3a] sm:$0x1] %vm2137, %v2694
        %2715 = vst.msk [vmem:[%s188 + $0x4a] sm:$0x1] %vm2137, %v2696
        %2716 = vst.msk [vmem:[%s188 + $0x5a] sm:$0x1] %vm2137, %v2698
        %2717 = vst.msk [vmem:[%s188 + $0x6a] sm:$0x1] %vm2137, %v2700
        %2718 = vst.msk [vmem:[%s188 + $0x7a] sm:$0x1] %vm2137, %v2702
        %2719 = vrot.lane.b32.xlu0 %v2594, 58
        %v2720 = vpop.permute.xlu0 %2719
        %2721 = vrot.lane.b32.xlu0 %v2598, 58
        %v2722 = vpop.permute.xlu0 %2721
        %2723 = vrot.lane.b32.xlu0 %v2602, 58
        %v2724 = vpop.permute.xlu0 %2723
        %2725 = vrot.lane.b32.xlu0 %v2606, 58
        %v2726 = vpop.permute.xlu0 %2725
        %2727 = vrot.lane.b32.xlu0 %v2610, 58
        %v2728 = vpop.permute.xlu0 %2727
        %2729 = vrot.lane.b32.xlu0 %v2614, 58
        %v2730 = vpop.permute.xlu0 %2729
        %2731 = vrot.lane.b32.xlu0 %v2618, 58
        %v2732 = vpop.permute.xlu0 %2731
        %2733 = vrot.lane.b32.xlu0 %v2622, 58
        %v2734 = vpop.permute.xlu0 %2733
        %2743 = vst.msk [vmem:[%s188 + $0xb] sm:$0x1] %vm2137, %v2720
        %2744 = vst.msk [vmem:[%s188 + $0x1b] sm:$0x1] %vm2137, %v2722
        %2745 = vst.msk [vmem:[%s188 + $0x2b] sm:$0x1] %vm2137, %v2724
        %2746 = vst.msk [vmem:[%s188 + $0x3b] sm:$0x1] %vm2137, %v2726
        %2747 = vst.msk [vmem:[%s188 + $0x4b] sm:$0x1] %vm2137, %v2728
        %2748 = vst.msk [vmem:[%s188 + $0x5b] sm:$0x1] %vm2137, %v2730
        %2749 = vst.msk [vmem:[%s188 + $0x6b] sm:$0x1] %vm2137, %v2732
        %2750 = vst.msk [vmem:[%s188 + $0x7b] sm:$0x1] %vm2137, %v2734
        %2751 = vrot.lane.b32.xlu0 %v2594, 40
        %v2752 = vpop.permute.xlu0 %2751
        %2753 = vrot.lane.b32.xlu0 %v2598, 40
        %v2754 = vpop.permute.xlu0 %2753
        %2755 = vrot.lane.b32.xlu0 %v2602, 40
        %v2756 = vpop.permute.xlu0 %2755
        %2757 = vrot.lane.b32.xlu0 %v2606, 40
        %v2758 = vpop.permute.xlu0 %2757
        %2759 = vrot.lane.b32.xlu0 %v2610, 40
        %v2760 = vpop.permute.xlu0 %2759
        %2761 = vrot.lane.b32.xlu0 %v2614, 40
        %v2762 = vpop.permute.xlu0 %2761
        %2763 = vrot.lane.b32.xlu0 %v2618, 40
        %v2764 = vpop.permute.xlu0 %2763
        %2765 = vrot.lane.b32.xlu0 %v2622, 40
        %v2766 = vpop.permute.xlu0 %2765
        %2775 = vst.msk [vmem:[%s188 + $0xc] sm:$0x1] %vm2137, %v2752
        %2776 = vst.msk [vmem:[%s188 + $0x1c] sm:$0x1] %vm2137, %v2754
        %2777 = vst.msk [vmem:[%s188 + $0x2c] sm:$0x1] %vm2137, %v2756
        %2778 = vst.msk [vmem:[%s188 + $0x3c] sm:$0x1] %vm2137, %v2758
        %2779 = vst.msk [vmem:[%s188 + $0x4c] sm:$0x1] %vm2137, %v2760
        %2780 = vst.msk [vmem:[%s188 + $0x5c] sm:$0x1] %vm2137, %v2762
        %2781 = vst.msk [vmem:[%s188 + $0x6c] sm:$0x1] %vm2137, %v2764
        %2782 = vst.msk [vmem:[%s188 + $0x7c] sm:$0x1] %vm2137, %v2766
        %2783 = vrot.lane.b32.xlu0 %v2594, 22
        %v2784 = vpop.permute.xlu0 %2783
        %2785 = vrot.lane.b32.xlu0 %v2598, 22
        %v2786 = vpop.permute.xlu0 %2785
        %2787 = vrot.lane.b32.xlu0 %v2602, 22
        %v2788 = vpop.permute.xlu0 %2787
        %2789 = vrot.lane.b32.xlu0 %v2606, 22
        %v2790 = vpop.permute.xlu0 %2789
        %2791 = vrot.lane.b32.xlu0 %v2610, 22
        %v2792 = vpop.permute.xlu0 %2791
        %2793 = vrot.lane.b32.xlu0 %v2614, 22
        %v2794 = vpop.permute.xlu0 %2793
        %2795 = vrot.lane.b32.xlu0 %v2618, 22
        %v2796 = vpop.permute.xlu0 %2795
        %2797 = vrot.lane.b32.xlu0 %v2622, 22
        %v2798 = vpop.permute.xlu0 %2797
        %2807 = vst.msk [vmem:[%s188 + $0xd] sm:$0x1] %vm2137, %v2784
        %2808 = vst.msk [vmem:[%s188 + $0x1d] sm:$0x1] %vm2137, %v2786
        %2809 = vst.msk [vmem:[%s188 + $0x2d] sm:$0x1] %vm2137, %v2788
        %2810 = vst.msk [vmem:[%s188 + $0x3d] sm:$0x1] %vm2137, %v2790
        %2811 = vst.msk [vmem:[%s188 + $0x4d] sm:$0x1] %vm2137, %v2792
        %2812 = vst.msk [vmem:[%s188 + $0x5d] sm:$0x1] %vm2137, %v2794
        %2813 = vst.msk [vmem:[%s188 + $0x6d] sm:$0x1] %vm2137, %v2796
        %2814 = vst.msk [vmem:[%s188 + $0x7d] sm:$0x1] %vm2137, %v2798
        %v2816 = vcombine.low %v2035, %v2074
        %v2817 = vcombine.high %v2035, %v2074
        %v2819 = vunpack.c.l.s4 1966171168
        %v2820 = vunpack.c.0.s8 %v2819
        %v2821 = vlaneseq
        %v2822 = vshrl.u32 %v2821, 7
        %v2823 = vsub.s32 %v2820, %v2822
        %v2824 = vrot.slane %v2816, %v2823
        %v2826 = vunpack.c.l.s4 1966171168
        %v2827 = vunpack.c.0.s8 %v2826
        %v2828 = vlaneseq
        %v2829 = vshrl.u32 %v2828, 7
        %v2830 = vsub.s32 %v2827, %v2829
        %v2831 = vrot.slane %v2817, %v2830
        %v2832 = vcombine.high %v2824, %v2824
        %v2833 = vcombine.high %v2831, %v2831
        %v2835 = vunpack.c.l.s4 1966171168
        %v2836 = vunpack.c.0.s8 %v2835
        %v2837 = vlaneseq
        %v2838 = vshrl.u32 %v2837, 7
        %v2839 = vsub.s32 %v2836, %v2838
        %v2840 = vrot.slane %v2824, %v2839
        %v2842 = vunpack.c.l.s4 1966171168
        %v2843 = vunpack.c.0.s8 %v2842
        %v2844 = vlaneseq
        %v2845 = vshrl.u32 %v2844, 7
        %v2846 = vsub.s32 %v2843, %v2845
        %v2847 = vrot.slane %v2831, %v2846
        %v2849 = vunpack.c.l.s4 1966171168
        %v2850 = vunpack.c.0.s8 %v2849
        %v2851 = vlaneseq
        %v2852 = vshrl.u32 %v2851, 7
        %v2853 = vsub.s32 %v2850, %v2852
        %v2854 = vrot.slane %v2832, %v2853
        %v2856 = vunpack.c.l.s4 1966171168
        %v2857 = vunpack.c.0.s8 %v2856
        %v2858 = vlaneseq
        %v2859 = vshrl.u32 %v2858, 7
        %v2860 = vsub.s32 %v2857, %v2859
        %v2861 = vrot.slane %v2833, %v2860
        %v2862 = vcombine.high %v2840, %v2840
        %v2863 = vcombine.high %v2847, %v2847
        %v2864 = vcombine.high %v2854, %v2854
        %v2865 = vcombine.high %v2861, %v2861
        %v2866 = vlaneseq
        %v2867 = vshrl.u32 %v2866, 7
        %v2868 = vsub.s32 0, %v2867
        %v2869 = vrot.slane %v2840, %v2868
        %v2870 = vlaneseq
        %v2871 = vshrl.u32 %v2870, 7
        %v2872 = vsub.s32 1, %v2871
        %v2873 = vrot.slane %v2840, %v2872
        %v2874 = vlaneseq
        %v2875 = vshrl.u32 %v2874, 7
        %v2876 = vsub.s32 0, %v2875
        %v2877 = vrot.slane %v2854, %v2876
        %v2878 = vlaneseq
        %v2879 = vshrl.u32 %v2878, 7
        %v2880 = vsub.s32 1, %v2879
        %v2881 = vrot.slane %v2854, %v2880
        %v2882 = vlaneseq
        %v2883 = vshrl.u32 %v2882, 7
        %v2884 = vsub.s32 0, %v2883
        %v2885 = vrot.slane %v2862, %v2884
        %v2886 = vlaneseq
        %v2887 = vshrl.u32 %v2886, 7
        %v2888 = vsub.s32 1, %v2887
        %v2889 = vrot.slane %v2862, %v2888
        %v2890 = vlaneseq
        %v2891 = vshrl.u32 %v2890, 7
        %v2892 = vsub.s32 0, %v2891
        %v2893 = vrot.slane %v2864, %v2892
        %v2894 = vlaneseq
        %v2895 = vshrl.u32 %v2894, 7
        %v2896 = vsub.s32 1, %v2895
        %v2897 = vrot.slane %v2864, %v2896
        %v2898 = vlaneseq
        %v2899 = vshrl.u32 %v2898, 7
        %v2900 = vsub.s32 0, %v2899
        %v2901 = vrot.slane %v2847, %v2900
        %v2902 = vlaneseq
        %v2903 = vshrl.u32 %v2902, 7
        %v2904 = vsub.s32 1, %v2903
        %v2905 = vrot.slane %v2847, %v2904
        %v2906 = vlaneseq
        %v2907 = vshrl.u32 %v2906, 7
        %v2908 = vsub.s32 0, %v2907
        %v2909 = vrot.slane %v2861, %v2908
        %v2910 = vlaneseq
        %v2911 = vshrl.u32 %v2910, 7
        %v2912 = vsub.s32 1, %v2911
        %v2913 = vrot.slane %v2861, %v2912
        %v2914 = vlaneseq
        %v2915 = vshrl.u32 %v2914, 7
        %v2916 = vsub.s32 0, %v2915
        %v2917 = vrot.slane %v2863, %v2916
        %v2918 = vlaneseq
        %v2919 = vshrl.u32 %v2918, 7
        %v2920 = vsub.s32 1, %v2919
        %v2921 = vrot.slane %v2863, %v2920
        %v2922 = vlaneseq
        %v2923 = vshrl.u32 %v2922, 7
        %v2924 = vsub.s32 0, %v2923
        %v2925 = vrot.slane %v2865, %v2924
        %v2926 = vlaneseq
        %v2927 = vshrl.u32 %v2926, 7
        %v2928 = vsub.s32 1, %v2927
        %v2929 = vrot.slane %v2865, %v2928
        %2930 = vrot.lane.b32.xlu0 %v2869, 4
        %v2931 = vpop.permute.xlu0 %2930
        %2932 = vrot.lane.b32.xlu0 %v2873, 4
        %v2933 = vpop.permute.xlu0 %2932
        %2934 = vrot.lane.b32.xlu0 %v2877, 4
        %v2935 = vpop.permute.xlu0 %2934
        %2936 = vrot.lane.b32.xlu0 %v2881, 4
        %v2937 = vpop.permute.xlu0 %2936
        %2938 = vrot.lane.b32.xlu0 %v2885, 4
        %v2939 = vpop.permute.xlu0 %2938
        %2940 = vrot.lane.b32.xlu0 %v2889, 4
        %v2941 = vpop.permute.xlu0 %2940
        %2942 = vrot.lane.b32.xlu0 %v2893, 4
        %v2943 = vpop.permute.xlu0 %2942
        %2944 = vrot.lane.b32.xlu0 %v2897, 4
        %v2945 = vpop.permute.xlu0 %2944
        %2946 = vrot.lane.b32.xlu0 %v2901, 4
        %v2947 = vpop.permute.xlu0 %2946
        %2948 = vrot.lane.b32.xlu0 %v2905, 4
        %v2949 = vpop.permute.xlu0 %2948
        %2950 = vrot.lane.b32.xlu0 %v2909, 4
        %v2951 = vpop.permute.xlu0 %2950
        %2952 = vrot.lane.b32.xlu0 %v2913, 4
        %v2953 = vpop.permute.xlu0 %2952
        %2954 = vrot.lane.b32.xlu0 %v2917, 4
        %v2955 = vpop.permute.xlu0 %2954
        %2956 = vrot.lane.b32.xlu0 %v2921, 4
        %v2957 = vpop.permute.xlu0 %2956
        %2958 = vrot.lane.b32.xlu0 %v2925, 4
        %v2959 = vpop.permute.xlu0 %2958
        %2960 = vrot.lane.b32.xlu0 %v2929, 4
        %v2961 = vpop.permute.xlu0 %2960
        %vm2962 = vcmask 31744
        %v2963 = vsel %vm2962, %v2931, %v2933
        %v2964 = vsel %vm2962, %v2935, %v2937
        %v2965 = vsel %vm2962, %v2939, %v2941
        %v2966 = vsel %vm2962, %v2943, %v2945
        %v2967 = vsel %vm2962, %v2947, %v2949
        %v2968 = vsel %vm2962, %v2951, %v2953
        %v2969 = vsel %vm2962, %v2955, %v2957
        %v2970 = vsel %vm2962, %v2959, %v2961
        %2979 = vst.msk [vmem:[%s188 + $0xe] sm:$0x1] %vm2137, %v2963
        %2980 = vst.msk [vmem:[%s188 + $0x1e] sm:$0x1] %vm2137, %v2964
        %2981 = vst.msk [vmem:[%s188 + $0x2e] sm:$0x1] %vm2137, %v2965
        %2982 = vst.msk [vmem:[%s188 + $0x3e] sm:$0x1] %vm2137, %v2966
        %2983 = vst.msk [vmem:[%s188 + $0x4e] sm:$0x1] %vm2137, %v2967
        %2984 = vst.msk [vmem:[%s188 + $0x5e] sm:$0x1] %vm2137, %v2968
        %2985 = vst.msk [vmem:[%s188 + $0x6e] sm:$0x1] %vm2137, %v2969
        %2986 = vst.msk [vmem:[%s188 + $0x7e] sm:$0x1] %vm2137, %v2970
        %v2987 = vcombine.high %v2074, %v2074
        %v2989 = vunpack.c.l.s4 1966171168
        %v2990 = vunpack.c.0.s8 %v2989
        %v2991 = vlaneseq
        %v2992 = vshrl.u32 %v2991, 7
        %v2993 = vsub.s32 %v2990, %v2992
        %v2994 = vrot.slane %v2074, %v2993
        %v2996 = vunpack.c.l.s4 1966171168
        %v2997 = vunpack.c.0.s8 %v2996
        %v2998 = vlaneseq
        %v2999 = vshrl.u32 %v2998, 7
        %v3000 = vsub.s32 %v2997, %v2999
        %v3001 = vrot.slane %v2987, %v3000
        %v3002 = vcombine.high %v2994, %v2994
        %v3003 = vcombine.high %v3001, %v3001
        %v3005 = vunpack.c.l.s4 1966171168
        %v3006 = vunpack.c.0.s8 %v3005
        %v3007 = vlaneseq
        %v3008 = vshrl.u32 %v3007, 7
        %v3009 = vsub.s32 %v3006, %v3008
        %v3010 = vrot.slane %v2994, %v3009
        %v3012 = vunpack.c.l.s4 1966171168
        %v3013 = vunpack.c.0.s8 %v3012
        %v3014 = vlaneseq
        %v3015 = vshrl.u32 %v3014, 7
        %v3016 = vsub.s32 %v3013, %v3015
        %v3017 = vrot.slane %v3001, %v3016
        %v3019 = vunpack.c.l.s4 1966171168
        %v3020 = vunpack.c.0.s8 %v3019
        %v3021 = vlaneseq
        %v3022 = vshrl.u32 %v3021, 7
        %v3023 = vsub.s32 %v3020, %v3022
        %v3024 = vrot.slane %v3002, %v3023
        %v3026 = vunpack.c.l.s4 1966171168
        %v3027 = vunpack.c.0.s8 %v3026
        %v3028 = vlaneseq
        %v3029 = vshrl.u32 %v3028, 7
        %v3030 = vsub.s32 %v3027, %v3029
        %v3031 = vrot.slane %v3003, %v3030
        %v3032 = vcombine.high %v3010, %v3010
        %v3033 = vcombine.high %v3017, %v3017
        %v3034 = vcombine.high %v3024, %v3024
        %v3035 = vcombine.high %v3031, %v3031
        %v3036 = vlaneseq
        %v3037 = vshrl.u32 %v3036, 7
        %v3038 = vsub.s32 0, %v3037
        %v3039 = vrot.slane %v3010, %v3038
        %v3040 = vlaneseq
        %v3041 = vshrl.u32 %v3040, 7
        %v3042 = vsub.s32 0, %v3041
        %v3043 = vrot.slane %v3024, %v3042
        %v3044 = vlaneseq
        %v3045 = vshrl.u32 %v3044, 7
        %v3046 = vsub.s32 0, %v3045
        %v3047 = vrot.slane %v3032, %v3046
        %v3048 = vlaneseq
        %v3049 = vshrl.u32 %v3048, 7
        %v3050 = vsub.s32 0, %v3049
        %v3051 = vrot.slane %v3034, %v3050
        %v3052 = vlaneseq
        %v3053 = vshrl.u32 %v3052, 7
        %v3054 = vsub.s32 0, %v3053
        %v3055 = vrot.slane %v3017, %v3054
        %v3056 = vlaneseq
        %v3057 = vshrl.u32 %v3056, 7
        %v3058 = vsub.s32 0, %v3057
        %v3059 = vrot.slane %v3031, %v3058
        %v3060 = vlaneseq
        %v3061 = vshrl.u32 %v3060, 7
        %v3062 = vsub.s32 0, %v3061
        %v3063 = vrot.slane %v3033, %v3062
        %v3064 = vlaneseq
        %v3065 = vshrl.u32 %v3064, 7
        %v3066 = vsub.s32 0, %v3065
        %v3067 = vrot.slane %v3035, %v3066
        %3068 = vrot.lane.b32.xlu0 %v3039, 114
        %v3069 = vpop.permute.xlu0 %3068
        %3070 = vrot.lane.b32.xlu0 %v3043, 114
        %v3071 = vpop.permute.xlu0 %3070
        %3072 = vrot.lane.b32.xlu0 %v3047, 114
        %v3073 = vpop.permute.xlu0 %3072
        %3074 = vrot.lane.b32.xlu0 %v3051, 114
        %v3075 = vpop.permute.xlu0 %3074
        %3076 = vrot.lane.b32.xlu0 %v3055, 114
        %v3077 = vpop.permute.xlu0 %3076
        %3078 = vrot.lane.b32.xlu0 %v3059, 114
        %v3079 = vpop.permute.xlu0 %3078
        %3080 = vrot.lane.b32.xlu0 %v3063, 114
        %v3081 = vpop.permute.xlu0 %3080
        %3082 = vrot.lane.b32.xlu0 %v3067, 114
        %v3083 = vpop.permute.xlu0 %3082
        %3092 = vst.msk [vmem:[%s188 + $0xf] sm:$0x1] %vm2137, %v3069
        %3093 = vst.msk [vmem:[%s188 + $0x1f] sm:$0x1] %vm2137, %v3071
        %3094 = vst.msk [vmem:[%s188 + $0x2f] sm:$0x1] %vm2137, %v3073
        %3095 = vst.msk [vmem:[%s188 + $0x3f] sm:$0x1] %vm2137, %v3075
        %3096 = vst.msk [vmem:[%s188 + $0x4f] sm:$0x1] %vm2137, %v3077
        %3097 = vst.msk [vmem:[%s188 + $0x5f] sm:$0x1] %vm2137, %v3079
        %3098 = vst.msk [vmem:[%s188 + $0x6f] sm:$0x1] %vm2137, %v3081
        %3099 = vst.msk [vmem:[%s188 + $0x7f] sm:$0x1] %vm2137, %v3083
        %s3100 = sand.u32 %s96, 1
        %s3101 = scalar_lea.sflag [#allocation6], %s3100
        %s3102 = sand.u32 %s96, 1
        %s3103 = smul.addr %s3102, 128
        %s3104 = scalar_lea.vmem [#allocation7], %s3103
        // Predicated region
        $region37: #{conv2d_same.1} parent=31 // pred_check
          %p3105 = pneg %p106
        $region38: #{conv2d_same.1} parent=31 // pred_check_branch
          %3107 = sbr.rel (%p3105) target = $region40
        $region39: #{conv2d_same.1} parent=31 // pred_region
          %s3109 = ssub.s32 2048, 2048
          %3110 = vsyncadd %s3101, %s3109
          %s3111 = smul.addr %s20, 16
          %s3112 = smul.addr %s3111, 128
          %s3113 = scalar_lea.hbm %s3, %s3112
          %s3114 = sshll.u32 %s3104, 4
          %s3115 = int_to_ptr.vmem [resolvable:$true] %s3114
          %3120 = dma.vmem_to_hbm [thread:$0]  %s3115, 2048, %s3113, %s3101, 128, 128, 8
        $region40: #{conv2d_same.1} parent=31 // pred_fallthru
          _
      $region32: #{conv2d_same.1} parent=5 // pred_fallthru
        _
      %p3121 = scmp.le.s32.totalorder 2, %s15
      // Predicated region
      $region41: #{conv2d_same.1} parent=5 // pred_check
        %p3122 = pneg %p3121
      $region42: #{conv2d_same.1} parent=5 // pred_check_branch
        %3124 = sbr.rel (%p3122) target = $region44
      $region43: #{conv2d_same.1} parent=5 // pred_region
        %s3125 = ssub.s32 %s15, 2
        // Predicated region
        $region45: #{conv2d_same.1} parent=43 // pred_check
          %p3126 = pneg %p112
        $region46: #{conv2d_same.1} parent=43 // pred_check_branch
          %3128 = sbr.rel (%p3126) target = $region48
        $region47: #{conv2d_same.1} parent=43 // pred_region
          %s3129 = sand.u32 %s97, 1
          %s3130 = scalar_lea.sflag [#allocation6], %s3129
          %s3131 = sand.u32 %s97, 1
          %s3132 = smul.addr %s3131, 128
          %s3133 = scalar_lea.vmem [#allocation7], %s3132
          %3134 = dma.done %s3130, 2048
        $region48: #{conv2d_same.1} parent=43 // pred_fallthru
          _
      $region44: #{conv2d_same.1} parent=5 // pred_fallthru
        _
    $region6: #{conv2d_same.1} parent=1 // loop_footer
      %s19 = sadd.s32 1, %s15
    $region7: #{conv2d_same.1} parent=1 // loop_footer_branch
      %14 = sbr.rel target = $region3
    $region8: #{conv2d_same.1} parent=1 // loop_exit
      _
    %3135 = vsyncpa [#allocation5], 1
    %s3136 = scalar_lea.sflag [#allocation5], 1
    %3137 = vsyncpa %s3136, 1
    %3138 = vsyncpa [#allocation6], 1
    %s3139 = scalar_lea.sflag [#allocation6], 1
    %3140 = vsyncpa %s3139, 1

</llo_original>
